<compile_context>
chip_gen: v5e
topology: v5e:2x2
jax: 0.10.0
libtpu: 0.0.40
codegen_flags: <defaults>
</compile_context>

<pallas_src>
import functools

import jax
import jax.numpy as jnp
from jax.experimental import pallas as pl
from jax.experimental.pallas import tpu as pltpu


# ----------------------------- Pallas kernel --------------------------------

def fused_aux_kernel(xm_ref, convw_ref, convb_ref, fc1w_ref, fc1b_ref,
                     fc2w_ref, fc2b_ref, o_ref, feat_ref, *, accumulate):
    # xm:     (16*Npad, Cpad) bf16  pooled input, rows are p*Npad + batch (p = h*4 + w)
    # conv_w: (Cpad, 128)     bf16  1x1 conv weight with BN scale folded in
    # conv_b: (1, 128)        f32   folded BN shift
    # fc1_w:  (2048, 512)     bf16  this step's contiguous column block (rows pre-permuted)
    # fc1_b:  (1, 512)        f32   matching bias block
    # fc2_w:  (512, NCpad)    bf16  matching row block
    # fc2_b:  (1, NCpad)      f32   fc2 bias, zero-padded
    # o:      (Npad, NCpad)   f32   logits (resident accumulator if `accumulate`)
    # feat:   (Npad, 2048)    bf16  VMEM scratch; persists across grid steps
    j = pl.program_id(0)
    n = feat_ref.shape[0]

    def compute_feat():
        # One MXU pass for all 16 spatial positions.
        y = jnp.dot(xm_ref[...], convw_ref[...],
                    preferred_element_type=jnp.float32)          # (16*n, 128)
        y = jnp.maximum(y + convb_ref[...], 0.0).astype(feat_ref.dtype)
        # Scatter the 16 position slabs into (n, 16*128) feature order p*128 + c.
        for p in range(16):
            feat_ref[:, p * 128:(p + 1) * 128] = y[p * n:(p + 1) * n, :]

    if accumulate:
        # Single-TC path: grid steps run sequentially and the scratch persists,
        # so the conv stage only runs on the first step.
        @pl.when(j == 0)
        def _():
            compute_feat()
    else:
        # 2-TC path: each core needs its own feature copy.
        compute_feat()

    # fc1 (this step's 512-column block) + ReLU.
    # F.dropout(p=0.7, training=False) is the identity in eval mode.
    h = jnp.dot(feat_ref[...], fc1w_ref[...],
                preferred_element_type=jnp.float32)              # (n, 512)
    h = jnp.maximum(h + fc1b_ref[...], 0.0)

    # fc2 partial over this step's 512-row block.
    part = jnp.dot(h.astype(jnp.bfloat16), fc2w_ref[...],
                   preferred_element_type=jnp.float32)           # (n, NCpad)

    if accumulate:
        # Resident output block (same block index every step): accumulate here.
        @pl.when(j == 0)
        def _():
            o_ref[...] = part + fc2b_ref[...]

        @pl.when(j != 0)
        def _():
            o_ref[...] = o_ref[...] + part
    else:
        # Per-step output blocks; bias folded into step 0, wrapper sums blocks.
        @pl.when(j == 0)
        def _():
            o_ref[...] = part + fc2b_ref[...]

        @pl.when(j != 0)
        def _():
            o_ref[...] = part


# ------------------------------ wrapper --------------------------------------

def _round_up(x, m):
    return (x + m - 1) // m * m


def _has_two_tensorcores():
    # v7x exposes 2 TensorCores per chip -> keep the 2-way "parallel" split there;
    # v5e / v6e are single-TC, where the resident-output accumulation path wins.
    try:
        kind = jax.devices()[0].device_kind.lower()
    except Exception:
        return False
    return "v7" in kind


def inception_aux_forward(x, params, *, num_classes):
    """x: (N, C_in, H, W) float32 with H, W divisible by 4 (eval-mode forward)."""
    N, C, H, W = x.shape
    assert H % 4 == 0 and W % 4 == 0, "adaptive pool path assumes H, W % 4 == 0"
    # TODO(synk): general adaptive_avg_pool2d (e.g. the real 14x14 GoogLeNet aux
    # input) needs overlapping-window pooling; only the evenly-divisible case here.

    c_pad = params["conv_w"].shape[0]
    nc_pad = params["fc2_w"].shape[2]
    n_pad = max(8, _round_up(N, 8))          # sublane-dense batch
    n_steps = 2
    parallel = _has_two_tensorcores()

    # adaptive_avg_pool2d(x, (4, 4)) -- evenly-divisible case: block mean.
    xp = x.reshape(N, C, 4, H // 4, 4, W // 4).mean(axis=(3, 5))     # (N, C, 4, 4)
    # (p, n, c) with p = h*4 + w; zero-pad batch -> n_pad and channels -> c_pad,
    # then flatten p-major so the conv stage is a single (16*n_pad, c_pad) matmul.
    xm = jnp.transpose(xp, (2, 3, 0, 1)).reshape(16, N, C)
    xm = jnp.pad(xm, ((0, 0), (0, n_pad - N), (0, c_pad - C)))
    xm = xm.reshape(16 * n_pad, c_pad).astype(jnp.bfloat16)

    kernel = functools.partial(fused_aux_kernel, accumulate=not parallel)
    out_blocks = n_steps if parallel else 1
    out_index_map = (lambda j: (j, 0, 0)) if parallel else (lambda j: (0, 0, 0))

    out = pl.pallas_call(
        kernel,
        out_shape=jax.ShapeDtypeStruct((out_blocks, n_pad, nc_pad), jnp.float32),
        grid=(n_steps,),
        in_specs=[
            pl.BlockSpec((16 * n_pad, c_pad), lambda j: (0, 0)),       # xm (whole)
            pl.BlockSpec((c_pad, 128), lambda j: (0, 0)),              # conv_w
            pl.BlockSpec((1, 128), lambda j: (0, 0)),                  # conv_b
            pl.BlockSpec((None, 2048, 512), lambda j: (j, 0, 0)),      # fc1_w block
            pl.BlockSpec((None, 1, 512), lambda j: (j, 0, 0)),         # fc1_b block
            pl.BlockSpec((None, 512, nc_pad), lambda j: (j, 0, 0)),    # fc2_w block
            pl.BlockSpec((1, nc_pad), lambda j: (0, 0)),               # fc2_b
        ],
        out_specs=pl.BlockSpec((None, n_pad, nc_pad), out_index_map),
        scratch_shapes=[pltpu.VMEM((n_pad, 16 * 128), jnp.bfloat16)],
        compiler_params=pltpu.CompilerParams(
            dimension_semantics=(("parallel",) if parallel else ("arbitrary",))),
    )(xm, params["conv_w"], params["conv_b"],
      params["fc1_w"], params["fc1_b"], params["fc2_w"], params["fc2_b"])

    logits = out.sum(axis=0) if parallel else out[0]
    return logits[:N, :num_classes]


# --------------------------- parameter creation ------------------------------

def make_params(key, in_channels, num_classes):
    ks = jax.random.split(key, 8)
    f32 = jnp.float32
    c_pad = max(128, _round_up(in_channels, 128))
    nc_pad = max(128, _round_up(num_classes, 128))

    # conv: Conv2d(in_channels, 128, kernel_size=1, bias=False), weight as (C_in, 128).
    conv_w = 0.05 * jax.random.normal(ks[0], (in_channels, 128), f32)

    # BatchNorm2d(128, eps=0.001), eval mode: fold scale into conv_w columns and
    # turn the shift into a conv bias.
    gamma = 1.0 + 0.1 * jax.random.normal(ks[1], (128,), f32)
    beta = 0.1 * jax.random.normal(ks[2], (128,), f32)
    running_mean = 0.1 * jax.random.normal(ks[3], (128,), f32)
    running_var = 1.0 + 0.1 * jnp.abs(jax.random.normal(ks[4], (128,), f32))
    scale = gamma * jax.lax.rsqrt(running_var + 1e-3)
    conv_w_folded = jnp.pad(conv_w * scale[None, :],
                            ((0, c_pad - in_channels), (0, 0)))
    conv_b = (beta - running_mean * scale).reshape(1, 128)

    # fc1: Linear(2048, 1024). PyTorch input index is c*16 + p (flatten of C,H,W);
    # the kernel feature index is p*128 + c -- permute columns once, transpose to
    # (2048, 1024), then pre-split into two contiguous (2048, 512) column blocks
    # so each grid step streams one contiguous ~2 MiB slab from HBM.
    fc1_w_pt = 0.02 * jax.random.normal(ks[5], (1024, 2048), f32)
    j = jnp.arange(2048)
    src = (j % 128) * 16 + (j // 128)            # kernel feature idx -> PyTorch idx
    fc1_w = fc1_w_pt[:, src].T                                    # (2048, 1024)
    fc1_w = fc1_w.reshape(2048, 2, 512).transpose(1, 0, 2)        # (2, 2048, 512)
    fc1_b = 0.02 * jax.random.normal(ks[6], (1024,), f32).reshape(2, 1, 512)

    # fc2: Linear(1024, num_classes); rows pre-split per step, columns padded to
    # a lane-dense width (sliced back in the wrapper).
    fc2_w_pt = 0.02 * jax.random.normal(ks[7], (num_classes, 1024), f32)
    fc2_w = jnp.pad(fc2_w_pt.T, ((0, 0), (0, nc_pad - num_classes)))
    fc2_w = fc2_w.reshape(2, 512, nc_pad)                         # (2, 512, NCpad)
    fc2_b = jnp.zeros((1, nc_pad), f32)

    # TODO(synk): optional fp8 quantization of fc1_w (dominant HBM stream) on v7x only.
    return {
        "conv_w": conv_w_folded.astype(jnp.bfloat16),
        "conv_b": conv_b,
        "fc1_w": fc1_w.astype(jnp.bfloat16),
        "fc1_b": fc1_b,
        "fc2_w": fc2_w.astype(jnp.bfloat16),
        "fc2_b": fc2_b,
    }


# ---------------------------------- main --------------------------------------

if __name__ == "__main__":
    key = jax.random.PRNGKey(0)
    k_x, k_p = jax.random.split(key)

    batch, in_channels, H, W = 2, 4, 16, 16
    num_classes = 10

    x = jax.random.normal(k_x, (batch, in_channels, H, W), jnp.float32)
    params = make_params(k_p, in_channels, num_classes)

    fwd = jax.jit(inception_aux_forward, static_argnames=("num_classes",))
    out = jax.block_until_ready(fwd(x, params, num_classes=num_classes))
    assert out.shape == (batch, num_classes)
    assert jnp.all(jnp.isfinite(out))
    print("KERNEL_OK")
</pallas_src>

<mosaic_0001>
module attributes {stable_mosaic.version = 11 : i64} {
  func.func @fused_aux_kernel(%arg0: i32, %arg1: memref<128x128xbf16, #tpu.memory_space<vmem>>, %arg2: memref<128x128xbf16, #tpu.memory_space<vmem>>, %arg3: memref<1x128xf32, #tpu.memory_space<vmem>>, %arg4: memref<1x2048x512xbf16, #tpu.memory_space<vmem>>, %arg5: memref<1x1x512xf32, #tpu.memory_space<vmem>>, %arg6: memref<1x512x128xbf16, #tpu.memory_space<vmem>>, %arg7: memref<1x128xf32, #tpu.memory_space<vmem>>, %arg8: memref<1x8x128xf32, #tpu.memory_space<vmem>>, %arg9: memref<8x2048xbf16, #tpu.memory_space<vmem>>) attributes {dimension_semantics = [#tpu.dimension_semantics<arbitrary>], iteration_bounds = array<i64: 2>, scalar_prefetch = 0 : i64, scratch_operands = 1 : i64, tpu.core_type = #tpu.core_type<tc>, window_params = [{pipeline_mode = #tpu.pipeline_mode<synchronous>, transform_indices = @transform_0, window_bounds = array<i64: 128, 128>}, {pipeline_mode = #tpu.pipeline_mode<synchronous>, transform_indices = @transform_1, window_bounds = array<i64: 128, 128>}, {pipeline_mode = #tpu.pipeline_mode<synchronous>, transform_indices = @transform_2, window_bounds = array<i64: 1, 128>}, {transform_indices = @transform_3, window_bounds = array<i64: 1, 2048, 512>}, {transform_indices = @transform_4, window_bounds = array<i64: 1, 1, 512>}, {transform_indices = @transform_5, window_bounds = array<i64: 1, 512, 128>}, {pipeline_mode = #tpu.pipeline_mode<synchronous>, transform_indices = @transform_6, window_bounds = array<i64: 1, 128>}, {pipeline_mode = #tpu.pipeline_mode<synchronous>, transform_indices = @transform_7, window_bounds = array<i64: 1, 8, 128>}]} {
    %c0_i32 = arith.constant 0 : i32
    %0 = arith.cmpi eq, %arg0, %c0_i32 : i32
    %1 = arith.extui %0 : i1 to i32
    %c0_i32_0 = arith.constant 0 : i32
    %2 = arith.cmpi ne, %1, %c0_i32_0 : i32
    scf.if %2 {
      %c0_17 = arith.constant 0 : index
      %c0_18 = arith.constant 0 : index
      %23 = vector.load %arg1[%c0_17, %c0_18] : memref<128x128xbf16, #tpu.memory_space<vmem>>, vector<128x128xbf16>
      %c0_19 = arith.constant 0 : index
      %c0_20 = arith.constant 0 : index
      %24 = vector.load %arg2[%c0_19, %c0_20] : memref<128x128xbf16, #tpu.memory_space<vmem>>, vector<128x128xbf16>
      %cst_21 = arith.constant dense<0.000000e+00> : vector<128x128xf32>
      %25 = tpu.matmul %23, %24, %cst_21 {dimension_numbers = #tpu.dot_dimension_numbers<[1], [0], [0], [1], [0, 0, 1, 1], [], []>} : vector<128x128xbf16>, vector<128x128xbf16>, vector<128x128xf32> -> vector<128x128xf32>
      %c0_22 = arith.constant 0 : index
      %c0_23 = arith.constant 0 : index
      %26 = vector.load %arg3[%c0_22, %c0_23] : memref<1x128xf32, #tpu.memory_space<vmem>>, vector<1x128xf32>
      %27 = vector.broadcast %26 : vector<1x128xf32> to vector<128x128xf32>
      %28 = arith.addf %25, %27 : vector<128x128xf32>
      %cst_24 = arith.constant 0.000000e+00 : f32
      %29 = vector.broadcast %cst_24 : f32 to vector<128x128xf32>
      %30 = arith.maximumf %28, %29 : vector<128x128xf32>
      %31 = arith.truncf %30 : vector<128x128xf32> to vector<128x128xbf16>
      %32 = vector.extract_strided_slice %31 {offsets = [0, 0], sizes = [8, 128], strides = [1, 1]} : vector<128x128xbf16> to vector<8x128xbf16>
      %c0_25 = arith.constant 0 : index
      %c0_26 = arith.constant 0 : index
      %33 = vector.load %arg9[%c0_25, %c0_26] : memref<8x2048xbf16, #tpu.memory_space<vmem>>, vector<8x128xbf16>
      tpu.vector_store %arg9[%c0_25, %c0_26], %32 {strides = array<i32>} : memref<8x2048xbf16, #tpu.memory_space<vmem>>, vector<8x128xbf16>,
      %34 = vector.extract_strided_slice %31 {offsets = [8, 0], sizes = [8, 128], strides = [1, 1]} : vector<128x128xbf16> to vector<8x128xbf16>
      %c0_27 = arith.constant 0 : index
      %c128 = arith.constant 128 : index
      %35 = vector.load %arg9[%c0_27, %c128] : memref<8x2048xbf16, #tpu.memory_space<vmem>>, vector<8x128xbf16>
      tpu.vector_store %arg9[%c0_27, %c128], %34 {strides = array<i32>} : memref<8x2048xbf16, #tpu.memory_space<vmem>>, vector<8x128xbf16>,
      %36 = vector.extract_strided_slice %31 {offsets = [16, 0], sizes = [8, 128], strides = [1, 1]} : vector<128x128xbf16> to vector<8x128xbf16>
      %c0_28 = arith.constant 0 : index
      %c256 = arith.constant 256 : index
      %37 = vector.load %arg9[%c0_28, %c256] : memref<8x2048xbf16, #tpu.memory_space<vmem>>, vector<8x128xbf16>
      tpu.vector_store %arg9[%c0_28, %c256], %36 {strides = array<i32>} : memref<8x2048xbf16, #tpu.memory_space<vmem>>, vector<8x128xbf16>,
      %38 = vector.extract_strided_slice %31 {offsets = [24, 0], sizes = [8, 128], strides = [1, 1]} : vector<128x128xbf16> to vector<8x128xbf16>
      %c0_29 = arith.constant 0 : index
      %c384 = arith.constant 384 : index
      %39 = vector.load %arg9[%c0_29, %c384] : memref<8x2048xbf16, #tpu.memory_space<vmem>>, vector<8x128xbf16>
      tpu.vector_store %arg9[%c0_29, %c384], %38 {strides = array<i32>} : memref<8x2048xbf16, #tpu.memory_space<vmem>>, vector<8x128xbf16>,
      %40 = vector.extract_strided_slice %31 {offsets = [32, 0], sizes = [8, 128], strides = [1, 1]} : vector<128x128xbf16> to vector<8x128xbf16>
      %c0_30 = arith.constant 0 : index
      %c512 = arith.constant 512 : index
      %41 = vector.load %arg9[%c0_30, %c512] : memref<8x2048xbf16, #tpu.memory_space<vmem>>, vector<8x128xbf16>
      tpu.vector_store %arg9[%c0_30, %c512], %40 {strides = array<i32>} : memref<8x2048xbf16, #tpu.memory_space<vmem>>, vector<8x128xbf16>,
      %42 = vector.extract_strided_slice %31 {offsets = [40, 0], sizes = [8, 128], strides = [1, 1]} : vector<128x128xbf16> to vector<8x128xbf16>
      %c0_31 = arith.constant 0 : index
      %c640 = arith.constant 640 : index
      %43 = vector.load %arg9[%c0_31, %c640] : memref<8x2048xbf16, #tpu.memory_space<vmem>>, vector<8x128xbf16>
      tpu.vector_store %arg9[%c0_31, %c640], %42 {strides = array<i32>} : memref<8x2048xbf16, #tpu.memory_space<vmem>>, vector<8x128xbf16>,
      %44 = vector.extract_strided_slice %31 {offsets = [48, 0], sizes = [8, 128], strides = [1, 1]} : vector<128x128xbf16> to vector<8x128xbf16>
      %c0_32 = arith.constant 0 : index
      %c768 = arith.constant 768 : index
      %45 = vector.load %arg9[%c0_32, %c768] : memref<8x2048xbf16, #tpu.memory_space<vmem>>, vector<8x128xbf16>
      tpu.vector_store %arg9[%c0_32, %c768], %44 {strides = array<i32>} : memref<8x2048xbf16, #tpu.memory_space<vmem>>, vector<8x128xbf16>,
      %46 = vector.extract_strided_slice %31 {offsets = [56, 0], sizes = [8, 128], strides = [1, 1]} : vector<128x128xbf16> to vector<8x128xbf16>
      %c0_33 = arith.constant 0 : index
      %c896 = arith.constant 896 : index
      %47 = vector.load %arg9[%c0_33, %c896] : memref<8x2048xbf16, #tpu.memory_space<vmem>>, vector<8x128xbf16>
      tpu.vector_store %arg9[%c0_33, %c896], %46 {strides = array<i32>} : memref<8x2048xbf16, #tpu.memory_space<vmem>>, vector<8x128xbf16>,
      %48 = vector.extract_strided_slice %31 {offsets = [64, 0], sizes = [8, 128], strides = [1, 1]} : vector<128x128xbf16> to vector<8x128xbf16>
      %c0_34 = arith.constant 0 : index
      %c1024 = arith.constant 1024 : index
      %49 = vector.load %arg9[%c0_34, %c1024] : memref<8x2048xbf16, #tpu.memory_space<vmem>>, vector<8x128xbf16>
      tpu.vector_store %arg9[%c0_34, %c1024], %48 {strides = array<i32>} : memref<8x2048xbf16, #tpu.memory_space<vmem>>, vector<8x128xbf16>,
      %50 = vector.extract_strided_slice %31 {offsets = [72, 0], sizes = [8, 128], strides = [1, 1]} : vector<128x128xbf16> to vector<8x128xbf16>
      %c0_35 = arith.constant 0 : index
      %c1152 = arith.constant 1152 : index
      %51 = vector.load %arg9[%c0_35, %c1152] : memref<8x2048xbf16, #tpu.memory_space<vmem>>, vector<8x128xbf16>
      tpu.vector_store %arg9[%c0_35, %c1152], %50 {strides = array<i32>} : memref<8x2048xbf16, #tpu.memory_space<vmem>>, vector<8x128xbf16>,
      %52 = vector.extract_strided_slice %31 {offsets = [80, 0], sizes = [8, 128], strides = [1, 1]} : vector<128x128xbf16> to vector<8x128xbf16>
      %c0_36 = arith.constant 0 : index
      %c1280 = arith.constant 1280 : index
      %53 = vector.load %arg9[%c0_36, %c1280] : memref<8x2048xbf16, #tpu.memory_space<vmem>>, vector<8x128xbf16>
      tpu.vector_store %arg9[%c0_36, %c1280], %52 {strides = array<i32>} : memref<8x2048xbf16, #tpu.memory_space<vmem>>, vector<8x128xbf16>,
      %54 = vector.extract_strided_slice %31 {offsets = [88, 0], sizes = [8, 128], strides = [1, 1]} : vector<128x128xbf16> to vector<8x128xbf16>
      %c0_37 = arith.constant 0 : index
      %c1408 = arith.constant 1408 : index
      %55 = vector.load %arg9[%c0_37, %c1408] : memref<8x2048xbf16, #tpu.memory_space<vmem>>, vector<8x128xbf16>
      tpu.vector_store %arg9[%c0_37, %c1408], %54 {strides = array<i32>} : memref<8x2048xbf16, #tpu.memory_space<vmem>>, vector<8x128xbf16>,
      %56 = vector.extract_strided_slice %31 {offsets = [96, 0], sizes = [8, 128], strides = [1, 1]} : vector<128x128xbf16> to vector<8x128xbf16>
      %c0_38 = arith.constant 0 : index
      %c1536 = arith.constant 1536 : index
      %57 = vector.load %arg9[%c0_38, %c1536] : memref<8x2048xbf16, #tpu.memory_space<vmem>>, vector<8x128xbf16>
      tpu.vector_store %arg9[%c0_38, %c1536], %56 {strides = array<i32>} : memref<8x2048xbf16, #tpu.memory_space<vmem>>, vector<8x128xbf16>,
      %58 = vector.extract_strided_slice %31 {offsets = [104, 0], sizes = [8, 128], strides = [1, 1]} : vector<128x128xbf16> to vector<8x128xbf16>
      %c0_39 = arith.constant 0 : index
      %c1664 = arith.constant 1664 : index
      %59 = vector.load %arg9[%c0_39, %c1664] : memref<8x2048xbf16, #tpu.memory_space<vmem>>, vector<8x128xbf16>
      tpu.vector_store %arg9[%c0_39, %c1664], %58 {strides = array<i32>} : memref<8x2048xbf16, #tpu.memory_space<vmem>>, vector<8x128xbf16>,
      %60 = vector.extract_strided_slice %31 {offsets = [112, 0], sizes = [8, 128], strides = [1, 1]} : vector<128x128xbf16> to vector<8x128xbf16>
      %c0_40 = arith.constant 0 : index
      %c1792 = arith.constant 1792 : index
      %61 = vector.load %arg9[%c0_40, %c1792] : memref<8x2048xbf16, #tpu.memory_space<vmem>>, vector<8x128xbf16>
      tpu.vector_store %arg9[%c0_40, %c1792], %60 {strides = array<i32>} : memref<8x2048xbf16, #tpu.memory_space<vmem>>, vector<8x128xbf16>,
      %62 = vector.extract_strided_slice %31 {offsets = [120, 0], sizes = [8, 128], strides = [1, 1]} : vector<128x128xbf16> to vector<8x128xbf16>
      %c0_41 = arith.constant 0 : index
      %c1920 = arith.constant 1920 : index
      %63 = vector.load %arg9[%c0_41, %c1920] : memref<8x2048xbf16, #tpu.memory_space<vmem>>, vector<8x128xbf16>
      tpu.vector_store %arg9[%c0_41, %c1920], %62 {strides = array<i32>} : memref<8x2048xbf16, #tpu.memory_space<vmem>>, vector<8x128xbf16>,
    } else {
    }
    %c0 = arith.constant 0 : index
    %c0_1 = arith.constant 0 : index
    %3 = vector.load %arg9[%c0, %c0_1] : memref<8x2048xbf16, #tpu.memory_space<vmem>>, vector<8x2048xbf16>
    %c0_2 = arith.constant 0 : index
    %c0_3 = arith.constant 0 : index
    %c0_4 = arith.constant 0 : index
    %4 = vector.load %arg4[%c0_2, %c0_3, %c0_4] : memref<1x2048x512xbf16, #tpu.memory_space<vmem>>, vector<1x2048x512xbf16>
    %5 = vector.shape_cast %4 : vector<1x2048x512xbf16> to vector<2048x512xbf16>
    %cst = arith.constant dense<0.000000e+00> : vector<8x512xf32>
    %6 = tpu.matmul %3, %5, %cst {dimension_numbers = #tpu.dot_dimension_numbers<[1], [0], [0], [1], [0, 0, 1, 1], [], []>} : vector<8x2048xbf16>, vector<2048x512xbf16>, vector<8x512xf32> -> vector<8x512xf32>
    %c0_5 = arith.constant 0 : index
    %c0_6 = arith.constant 0 : index
    %c0_7 = arith.constant 0 : index
    %7 = vector.load %arg5[%c0_5, %c0_6, %c0_7] : memref<1x1x512xf32, #tpu.memory_space<vmem>>, vector<1x1x512xf32>
    %8 = vector.shape_cast %7 : vector<1x1x512xf32> to vector<1x512xf32>
    %9 = vector.broadcast %8 : vector<1x512xf32> to vector<8x512xf32>
    %10 = arith.addf %6, %9 : vector<8x512xf32>
    %cst_8 = arith.constant 0.000000e+00 : f32
    %11 = vector.broadcast %cst_8 : f32 to vector<8x512xf32>
    %12 = arith.maximumf %10, %11 : vector<8x512xf32>
    %13 = arith.truncf %12 : vector<8x512xf32> to vector<8x512xbf16>
    %c0_9 = arith.constant 0 : index
    %c0_10 = arith.constant 0 : index
    %c0_11 = arith.constant 0 : index
    %14 = vector.load %arg6[%c0_9, %c0_10, %c0_11] : memref<1x512x128xbf16, #tpu.memory_space<vmem>>, vector<1x512x128xbf16>
    %15 = vector.shape_cast %14 : vector<1x512x128xbf16> to vector<512x128xbf16>
    %cst_12 = arith.constant dense<0.000000e+00> : vector<8x128xf32>
    %16 = tpu.matmul %13, %15, %cst_12 {dimension_numbers = #tpu.dot_dimension_numbers<[1], [0], [0], [1], [0, 0, 1, 1], [], []>} : vector<8x512xbf16>, vector<512x128xbf16>, vector<8x128xf32> -> vector<8x128xf32>
    %c0_i32_13 = arith.constant 0 : i32
    %17 = arith.cmpi eq, %arg0, %c0_i32_13 : i32
    %18 = arith.extui %17 : i1 to i32
    %c0_i32_14 = arith.constant 0 : i32
    %19 = arith.cmpi ne, %18, %c0_i32_14 : i32
    scf.if %19 {
      %c0_17 = arith.constant 0 : index
      %c0_18 = arith.constant 0 : index
      %23 = vector.load %arg7[%c0_17, %c0_18] : memref<1x128xf32, #tpu.memory_space<vmem>>, vector<1x128xf32>
      %24 = vector.broadcast %23 : vector<1x128xf32> to vector<8x128xf32>
      %25 = arith.addf %16, %24 : vector<8x128xf32>
      %c0_19 = arith.constant 0 : index
      %c0_20 = arith.constant 0 : index
      %c0_21 = arith.constant 0 : index
      %26 = vector.load %arg8[%c0_19, %c0_20, %c0_21] : memref<1x8x128xf32, #tpu.memory_space<vmem>>, vector<1x8x128xf32>
      %27 = vector.shape_cast %26 : vector<1x8x128xf32> to vector<8x128xf32>
      %28 = vector.shape_cast %25 : vector<8x128xf32> to vector<1x8x128xf32>
      tpu.vector_store %arg8[%c0_19, %c0_20, %c0_21], %28 {strides = array<i32>} : memref<1x8x128xf32, #tpu.memory_space<vmem>>, vector<1x8x128xf32>,
    } else {
    }
    %c0_i32_15 = arith.constant 0 : i32
    %20 = arith.cmpi ne, %arg0, %c0_i32_15 : i32
    %21 = arith.extui %20 : i1 to i32
    %c0_i32_16 = arith.constant 0 : i32
    %22 = arith.cmpi ne, %21, %c0_i32_16 : i32
    scf.if %22 {
      %c0_17 = arith.constant 0 : index
      %c0_18 = arith.constant 0 : index
      %c0_19 = arith.constant 0 : index
      %23 = vector.load %arg8[%c0_17, %c0_18, %c0_19] : memref<1x8x128xf32, #tpu.memory_space<vmem>>, vector<1x8x128xf32>
      %24 = vector.shape_cast %23 : vector<1x8x128xf32> to vector<8x128xf32>
      %25 = arith.addf %24, %16 : vector<8x128xf32>
      %c0_20 = arith.constant 0 : index
      %c0_21 = arith.constant 0 : index
      %c0_22 = arith.constant 0 : index
      %26 = vector.load %arg8[%c0_20, %c0_21, %c0_22] : memref<1x8x128xf32, #tpu.memory_space<vmem>>, vector<1x8x128xf32>
      %27 = vector.shape_cast %26 : vector<1x8x128xf32> to vector<8x128xf32>
      %28 = vector.shape_cast %25 : vector<8x128xf32> to vector<1x8x128xf32>
      tpu.vector_store %arg8[%c0_20, %c0_21, %c0_22], %28 {strides = array<i32>} : memref<1x8x128xf32, #tpu.memory_space<vmem>>, vector<1x8x128xf32>,
    } else {
    }
    return
  }
  func.func @transform_0(%arg0: i32) -> (i32, i32) {
    %c0_i32 = arith.constant 0 : i32
    %c0_i32_0 = arith.constant 0 : i32
    %c0_i32_1 = arith.constant 0 : i32
    return %c0_i32, %c0_i32_0 : i32, i32
  }
  func.func @transform_1(%arg0: i32) -> (i32, i32) {
    %c0_i32 = arith.constant 0 : i32
    %c0_i32_0 = arith.constant 0 : i32
    %c0_i32_1 = arith.constant 0 : i32
    return %c0_i32, %c0_i32_0 : i32, i32
  }
  func.func @transform_2(%arg0: i32) -> (i32, i32) {
    %c0_i32 = arith.constant 0 : i32
    %c0_i32_0 = arith.constant 0 : i32
    %c0_i32_1 = arith.constant 0 : i32
    return %c0_i32, %c0_i32_0 : i32, i32
  }
  func.func @transform_3(%arg0: i32) -> (i32, i32, i32) {
    %c0_i32 = arith.constant 0 : i32
    %c0_i32_0 = arith.constant 0 : i32
    %c0_i32_1 = arith.constant 0 : i32
    return %arg0, %c0_i32, %c0_i32_0 : i32, i32, i32
  }
  func.func @transform_4(%arg0: i32) -> (i32, i32, i32) {
    %c0_i32 = arith.constant 0 : i32
    %c0_i32_0 = arith.constant 0 : i32
    %c0_i32_1 = arith.constant 0 : i32
    return %arg0, %c0_i32, %c0_i32_0 : i32, i32, i32
  }
  func.func @transform_5(%arg0: i32) -> (i32, i32, i32) {
    %c0_i32 = arith.constant 0 : i32
    %c0_i32_0 = arith.constant 0 : i32
    %c0_i32_1 = arith.constant 0 : i32
    return %arg0, %c0_i32, %c0_i32_0 : i32, i32, i32
  }
  func.func @transform_6(%arg0: i32) -> (i32, i32) {
    %c0_i32 = arith.constant 0 : i32
    %c0_i32_0 = arith.constant 0 : i32
    %c0_i32_1 = arith.constant 0 : i32
    return %c0_i32, %c0_i32_0 : i32, i32
  }
  func.func @transform_7(%arg0: i32) -> (i32, i32, i32) {
    %c0_i32 = arith.constant 0 : i32
    %c0_i32_0 = arith.constant 0 : i32
    %c0_i32_1 = arith.constant 0 : i32
    %c0_i32_2 = arith.constant 0 : i32
    return %c0_i32, %c0_i32_0, %c0_i32_1 : i32, i32, i32
  }
}

</mosaic_0001>

<llo_original>
// kernel: inception_aux_forward.1
$region0: #{inception_aux_forward.1}
  #allocation0 [shape = 'u32[]', space=smem, size = 0x4, offset = 0x4, fixed_abs, tag = 'smem constant byte address 0x4 - core index']
  #allocation1 [shape = 'u32[72,128]{1,0:T(1,128)}', space=vmem, size = 0x9000, scoped, tag = 'internal scratch']
  #allocation2 [shape = 'bf16[8,2048]{1,0:T(8,128)(2,1)}', space=vmem, size = 0x8000, scoped, tag = 'scratch operand']
  %s0 = inlined_call_operand.vmem [shape: bf16[128,128], index: 0, kind: input, shape index: {}]
  %s1 = inlined_call_operand.hbm [shape: bf16[128,128], index: 1, kind: input, shape index: {}]
  %s2 = inlined_call_operand.hbm [shape: f32[1,128], index: 2, kind: input, shape index: {}]
  %s3 = inlined_call_operand.hbm [shape: bf16[2,2048,512], index: 3, kind: input, shape index: {}]
  %s4 = inlined_call_operand.hbm [shape: f32[2,1,512], index: 4, kind: input, shape index: {}]
  %s5 = inlined_call_operand.hbm [shape: bf16[2,512,128], index: 5, kind: input, shape index: {}]
  %s6 = inlined_call_operand.hbm [shape: f32[1,128], index: 6, kind: input, shape index: {}]
  %s7 = inlined_call_operand.vmem [shape: f32[1,8,128], index: 7, kind: output, shape index: {}]
  %s8 = sld [smem:[#allocation0]]
  $region97: #{inception_aux_forward.1} parent=0
    _
  %s10 = ssub.s32 1, %s8
  %s11 = scalar_select 0, %s10, %s8
  $region1: #{inception_aux_forward.1} parent=0
    #allocation3 [shape = 'u8[32768]{0}', space=vmem, size = 0x8000, scoped, tag = 'input window, operand 1, single buffered']
    #allocation4 [shape = 's32[2]{0}', space=sflag, size = 0x8, scoped, tag = 'scoped memory for inception_aux_forward.1']
    #allocation5 [shape = 'u8[512]{0}', space=vmem, size = 0x400, scoped, tag = 'input window, operand 2, single buffered']
    #allocation6 [shape = 's32[1]{0}', space=sflag, size = 0x4, scoped, tag = 'scoped memory for inception_aux_forward.1']
    #allocation7 [shape = 'u8[4194304]{0}', space=vmem, size = 0x400000, scoped, tag = 'input window, operand 3']
    #allocation8 [shape = 'u8[4096]{0}', space=vmem, size = 0x1000, scoped, tag = 'input window, operand 4']
    #allocation9 [shape = 'u8[262144]{0}', space=vmem, size = 0x40000, scoped, tag = 'input window, operand 5']
    #allocation10 [shape = 'u8[512]{0}', space=vmem, size = 0x400, scoped, tag = 'input window, operand 6, single buffered']
    %12 = vsyncpa [#allocation4], 0
    %13 = vsyncpa [#allocation6], 0
    loop: start=0, step=1, limit=4
    $region2: #{inception_aux_forward.1} parent=1 // loop_pre_header
      _
    $region3: #{inception_aux_forward.1} parent=1 // loop_header
      %s15 = sphi 0, %s19
      %p16 = scmp.ge.s32.totalorder %s15, 4
      %s23 = sphi 0, %s23
      %s25 = sphi 0, %s23
      %s26 = sphi 0, %s25
      %s40 = sphi 0, %s26
      %s44 = sphi 0, %s44
      %s46 = sphi 0, %s44
      %s47 = sphi 0, %s46
      %s61 = sphi 0, %s47
      %s65 = sphi 0, %s65
      %s67 = sphi 0, %s65
      %s68 = sphi 0, %s67
      %s82 = sphi 0, %s68
      %s88 = sphi 0, %s90
      %s91 = sphi 0, %s88
      %s92 = sphi 0, %s91
      %s108 = sphi 0, %s92
      %s114 = sphi 0, %s116
      %s117 = sphi 0, %s114
      %s118 = sphi 0, %s117
      %s134 = sphi 0, %s118
      %s140 = sphi 0, %s142
      %s143 = sphi 0, %s140
      %s144 = sphi 0, %s143
      %s160 = sphi 0, %s144
      %s164 = sphi 0, %s164
      %s166 = sphi 0, %s164
      %s167 = sphi 0, %s166
      %s181 = sphi 0, %s167
      %s185 = sphi 0, %s185
      %s187 = sphi 0, %s185
      %s188 = sphi 0, %s187
      %s202 = sphi 0, %s188
    $region4: #{inception_aux_forward.1} parent=1 // loop_header_branch
      %18 = sbr.rel (%p16) target = $region8
    $region5: #{inception_aux_forward.1} parent=1 // loop_body
      %s20 = ssub.s32 %s15, 1
      %s21 = ssub.s32 %s15, 2
      %s22 = sadd.s32 %s15, 1
      %s24 = sadd.s32 %s23, 1
      %p27 = scmp.eq.s32.totalorder %s15, 1
      %p28 = scmp.ne.s32.totalorder %s23, %s25
      %p29 = scmp.eq.s32.totalorder %s15, 0
      %p30 = por %p28, %p29
      %p31 = scmp.ne.s32.totalorder %s23, %s25
      %p32 = scmp.eq.s32.totalorder %s20, 1
      %p33 = por %p31, %p32
      %p34 = scmp.ne.s32.totalorder %s25, %s26
      %p35 = scmp.eq.s32.totalorder %s20, 0
      %p36 = por %p34, %p35
      %p37 = scmp.ne.s32.totalorder %s25, %s26
      %p38 = scmp.eq.s32.totalorder %s21, 1
      %p39 = por %p37, %p38
      %p41 = scmp.ne.s32.totalorder %s26, %s40
      %p42 = scmp.eq.s32.totalorder %s21, 0
      %p43 = por %p41, %p42
      %s45 = sadd.s32 %s44, 1
      %p48 = scmp.eq.s32.totalorder %s15, 1
      %p49 = scmp.ne.s32.totalorder %s44, %s46
      %p50 = scmp.eq.s32.totalorder %s15, 0
      %p51 = por %p49, %p50
      %p52 = scmp.ne.s32.totalorder %s44, %s46
      %p53 = scmp.eq.s32.totalorder %s20, 1
      %p54 = por %p52, %p53
      %p55 = scmp.ne.s32.totalorder %s46, %s47
      %p56 = scmp.eq.s32.totalorder %s20, 0
      %p57 = por %p55, %p56
      %p58 = scmp.ne.s32.totalorder %s46, %s47
      %p59 = scmp.eq.s32.totalorder %s21, 1
      %p60 = por %p58, %p59
      %p62 = scmp.ne.s32.totalorder %s47, %s61
      %p63 = scmp.eq.s32.totalorder %s21, 0
      %p64 = por %p62, %p63
      %s66 = sadd.s32 %s65, 1
      %p69 = scmp.eq.s32.totalorder %s15, 1
      %p70 = scmp.ne.s32.totalorder %s65, %s67
      %p71 = scmp.eq.s32.totalorder %s15, 0
      %p72 = por %p70, %p71
      %p73 = scmp.ne.s32.totalorder %s65, %s67
      %p74 = scmp.eq.s32.totalorder %s20, 1
      %p75 = por %p73, %p74
      %p76 = scmp.ne.s32.totalorder %s67, %s68
      %p77 = scmp.eq.s32.totalorder %s20, 0
      %p78 = por %p76, %p77
      %p79 = scmp.ne.s32.totalorder %s67, %s68
      %p80 = scmp.eq.s32.totalorder %s21, 1
      %p81 = por %p79, %p80
      %p83 = scmp.ne.s32.totalorder %s68, %s82
      %p84 = scmp.eq.s32.totalorder %s21, 0
      %p85 = por %p83, %p84
      %s86 = ssub.s32 %s15, %s22
      %p87 = scmp.eq.s32.totalorder %s86, 0
      %s89 = sadd.s32 %s88, 1
      %s90 = scalar_select %p87, %s88, %s89
      %p93 = pneg %p87
      %p94 = scmp.eq.s32.totalorder %s15, 1
      %p95 = por %p93, %p94
      %p96 = scmp.ne.s32.totalorder %s88, %s91
      %p97 = scmp.eq.s32.totalorder %s15, 0
      %p98 = por %p96, %p97
      %p99 = scmp.ne.s32.totalorder %s88, %s91
      %p100 = scmp.eq.s32.totalorder %s20, 1
      %p101 = por %p99, %p100
      %p102 = scmp.ne.s32.totalorder %s91, %s92
      %p103 = scmp.eq.s32.totalorder %s20, 0
      %p104 = por %p102, %p103
      %p105 = scmp.ne.s32.totalorder %s91, %s92
      %p106 = scmp.eq.s32.totalorder %s21, 1
      %p107 = por %p105, %p106
      %p109 = scmp.ne.s32.totalorder %s92, %s108
      %p110 = scmp.eq.s32.totalorder %s21, 0
      %p111 = por %p109, %p110
      %s112 = ssub.s32 %s15, %s22
      %p113 = scmp.eq.s32.totalorder %s112, 0
      %s115 = sadd.s32 %s114, 1
      %s116 = scalar_select %p113, %s114, %s115
      %p119 = pneg %p113
      %p120 = scmp.eq.s32.totalorder %s15, 1
      %p121 = por %p119, %p120
      %p122 = scmp.ne.s32.totalorder %s114, %s117
      %p123 = scmp.eq.s32.totalorder %s15, 0
      %p124 = por %p122, %p123
      %p125 = scmp.ne.s32.totalorder %s114, %s117
      %p126 = scmp.eq.s32.totalorder %s20, 1
      %p127 = por %p125, %p126
      %p128 = scmp.ne.s32.totalorder %s117, %s118
      %p129 = scmp.eq.s32.totalorder %s20, 0
      %p130 = por %p128, %p129
      %p131 = scmp.ne.s32.totalorder %s117, %s118
      %p132 = scmp.eq.s32.totalorder %s21, 1
      %p133 = por %p131, %p132
      %p135 = scmp.ne.s32.totalorder %s118, %s134
      %p136 = scmp.eq.s32.totalorder %s21, 0
      %p137 = por %p135, %p136
      %s138 = ssub.s32 %s15, %s22
      %p139 = scmp.eq.s32.totalorder %s138, 0
      %s141 = sadd.s32 %s140, 1
      %s142 = scalar_select %p139, %s140, %s141
      %p145 = pneg %p139
      %p146 = scmp.eq.s32.totalorder %s15, 1
      %p147 = por %p145, %p146
      %p148 = scmp.ne.s32.totalorder %s140, %s143
      %p149 = scmp.eq.s32.totalorder %s15, 0
      %p150 = por %p148, %p149
      %p151 = scmp.ne.s32.totalorder %s140, %s143
      %p152 = scmp.eq.s32.totalorder %s20, 1
      %p153 = por %p151, %p152
      %p154 = scmp.ne.s32.totalorder %s143, %s144
      %p155 = scmp.eq.s32.totalorder %s20, 0
      %p156 = por %p154, %p155
      %p157 = scmp.ne.s32.totalorder %s143, %s144
      %p158 = scmp.eq.s32.totalorder %s21, 1
      %p159 = por %p157, %p158
      %p161 = scmp.ne.s32.totalorder %s144, %s160
      %p162 = scmp.eq.s32.totalorder %s21, 0
      %p163 = por %p161, %p162
      %s165 = sadd.s32 %s164, 1
      %p168 = scmp.eq.s32.totalorder %s15, 1
      %p169 = scmp.ne.s32.totalorder %s164, %s166
      %p170 = scmp.eq.s32.totalorder %s15, 0
      %p171 = por %p169, %p170
      %p172 = scmp.ne.s32.totalorder %s164, %s166
      %p173 = scmp.eq.s32.totalorder %s20, 1
      %p174 = por %p172, %p173
      %p175 = scmp.ne.s32.totalorder %s166, %s167
      %p176 = scmp.eq.s32.totalorder %s20, 0
      %p177 = por %p175, %p176
      %p178 = scmp.ne.s32.totalorder %s166, %s167
      %p179 = scmp.eq.s32.totalorder %s21, 1
      %p180 = por %p178, %p179
      %p182 = scmp.ne.s32.totalorder %s167, %s181
      %p183 = scmp.eq.s32.totalorder %s21, 0
      %p184 = por %p182, %p183
      %s186 = sadd.s32 %s185, 1
      %p189 = scmp.eq.s32.totalorder %s15, 1
      %p190 = scmp.ne.s32.totalorder %s185, %s187
      %p191 = scmp.eq.s32.totalorder %s15, 0
      %p192 = por %p190, %p191
      %p193 = scmp.ne.s32.totalorder %s185, %s187
      %p194 = scmp.eq.s32.totalorder %s20, 1
      %p195 = por %p193, %p194
      %p196 = scmp.ne.s32.totalorder %s187, %s188
      %p197 = scmp.eq.s32.totalorder %s20, 0
      %p198 = por %p196, %p197
      %p199 = scmp.ne.s32.totalorder %s187, %s188
      %p200 = scmp.eq.s32.totalorder %s21, 1
      %p201 = por %p199, %p200
      %p203 = scmp.ne.s32.totalorder %s188, %s202
      %p204 = scmp.eq.s32.totalorder %s21, 0
      %p205 = por %p203, %p204
      %p206 = scmp.le.s32.totalorder 1, %s15
      %p207 = scmp.lt.s32.totalorder %s15, 3
      %p208 = pnand %p206, %p207
      %p209 = pneg %p208
      // Predicated region
      $region9: #{inception_aux_forward.1} parent=5 // pred_check
        _
      $region10: #{inception_aux_forward.1} parent=5 // pred_check_branch
        %211 = sbr.rel (%p208) target = $region12
      $region11: #{inception_aux_forward.1} parent=5 // pred_region
        %s212 = ssub.s32 %s15, 1
        // Predicated region
        $region13: #{inception_aux_forward.1} parent=11 // pred_check
          %p213 = pneg %p36
        $region14: #{inception_aux_forward.1} parent=11 // pred_check_branch
          %215 = sbr.rel (%p213) target = $region16
        $region15: #{inception_aux_forward.1} parent=11 // pred_region
          _
        $region16: #{inception_aux_forward.1} parent=11 // pred_fallthru
          _
        // Predicated region
        $region17: #{inception_aux_forward.1} parent=11 // pred_check
          %p216 = pneg %p57
        $region18: #{inception_aux_forward.1} parent=11 // pred_check_branch
          %218 = sbr.rel (%p216) target = $region20
        $region19: #{inception_aux_forward.1} parent=11 // pred_region
          %220 = vsyncadd [#allocation4], 0
          %s221 = sshll.u32 %s1, 4
          %s222 = int_to_ptr.hbm [resolvable:$true] %s221
          %s223 = sshll.u32 [#allocation3], 4
          %s224 = int_to_ptr.vmem [resolvable:$true] %s223
          %229 = dma.hbm_to_vmem [thread:$0]  %s222, 1024, %s224, [#allocation4], 64, 64, 4
        $region20: #{inception_aux_forward.1} parent=11 // pred_fallthru
          _
        // Predicated region
        $region21: #{inception_aux_forward.1} parent=11 // pred_check
          %p230 = pneg %p78
        $region22: #{inception_aux_forward.1} parent=11 // pred_check_branch
          %232 = sbr.rel (%p230) target = $region24
        $region23: #{inception_aux_forward.1} parent=11 // pred_region
          %234 = vsyncadd [#allocation6], 0
          %s236 = sshll.u32 %s2, 4
          %s237 = int_to_ptr.hbm [resolvable:$true] %s236
          %s238 = sshll.u32 [#allocation5], 4
          %s239 = int_to_ptr.vmem [resolvable:$true] %s238
          %241 = dma.hbm_to_vmem [thread:$0]  %s237, 16, %s239, [#allocation6]
        $region24: #{inception_aux_forward.1} parent=11 // pred_fallthru
          _
        // Predicated region
        $region25: #{inception_aux_forward.1} parent=11 // pred_check
          %p242 = pneg %p177
        $region26: #{inception_aux_forward.1} parent=11 // pred_check_branch
          %244 = sbr.rel (%p242) target = $region28
        $region27: #{inception_aux_forward.1} parent=11 // pred_region
          %246 = vsyncadd [#allocation6], 0
          %s248 = sshll.u32 %s6, 4
          %s249 = int_to_ptr.hbm [resolvable:$true] %s248
          %s250 = sshll.u32 [#allocation10], 4
          %s251 = int_to_ptr.vmem [resolvable:$true] %s250
          %253 = dma.hbm_to_vmem [thread:$0]  %s249, 16, %s251, [#allocation6]
        $region28: #{inception_aux_forward.1} parent=11 // pred_fallthru
          _
      $region12: #{inception_aux_forward.1} parent=5 // pred_fallthru
        _
      %p254 = scmp.lt.s32.totalorder %s15, 2
      // Predicated region
      $region29: #{inception_aux_forward.1} parent=5 // pred_check
        %p255 = pneg %p254
      $region30: #{inception_aux_forward.1} parent=5 // pred_check_branch
        %257 = sbr.rel (%p255) target = $region32
      $region31: #{inception_aux_forward.1} parent=5 // pred_region
        // Predicated region
        $region33: #{inception_aux_forward.1} parent=31 // pred_check
          %p258 = pneg %p98
        $region34: #{inception_aux_forward.1} parent=31 // pred_check_branch
          %260 = sbr.rel (%p258) target = $region36
        $region35: #{inception_aux_forward.1} parent=31 // pred_region
          %s261 = sand.u32 %s15, 1
          %s262 = scalar_lea.sflag [#allocation4], %s261
          %s263 = sand.u32 %s88, 1
          %s264 = smul.addr %s263, 4096
          %s265 = scalar_lea.vmem [#allocation7], %s264
          %267 = vsyncadd %s262, 0
          %s268 = smul.addr %s15, 1024
          %s269 = smul.addr %s268, 4
          %s270 = scalar_lea.hbm %s3, %s269
          %s271 = sshll.u32 %s270, 4
          %s272 = int_to_ptr.hbm [resolvable:$true] %s271
          %s273 = sshll.u32 %s265, 4
          %s274 = int_to_ptr.vmem [resolvable:$true] %s273
          %279 = dma.hbm_to_vmem [thread:$0]  %s272, 65536, %s274, %s262, 256, 256, 16
        $region36: #{inception_aux_forward.1} parent=31 // pred_fallthru
          _
        // Predicated region
        $region37: #{inception_aux_forward.1} parent=31 // pred_check
          %p280 = pneg %p124
        $region38: #{inception_aux_forward.1} parent=31 // pred_check_branch
          %282 = sbr.rel (%p280) target = $region40
        $region39: #{inception_aux_forward.1} parent=31 // pred_region
          %s283 = sand.u32 %s15, 1
          %s284 = scalar_lea.sflag [#allocation4], %s283
          %s285 = sand.u32 %s114, 1
          %s286 = smul.addr %s285, 4
          %s287 = scalar_lea.vmem [#allocation8], %s286
          %289 = vsyncadd %s284, 0
          %s290 = smul.addr %s15, 4
          %s291 = scalar_lea.hbm %s4, %s290
          %s293 = sshll.u32 %s291, 4
          %s294 = int_to_ptr.hbm [resolvable:$true] %s293
          %s295 = sshll.u32 %s287, 4
          %s296 = int_to_ptr.vmem [resolvable:$true] %s295
          %298 = dma.hbm_to_vmem [thread:$0]  %s294, 64, %s296, %s284
        $region40: #{inception_aux_forward.1} parent=31 // pred_fallthru
          _
        // Predicated region
        $region41: #{inception_aux_forward.1} parent=31 // pred_check
          %p299 = pneg %p150
        $region42: #{inception_aux_forward.1} parent=31 // pred_check_branch
          %301 = sbr.rel (%p299) target = $region44
        $region43: #{inception_aux_forward.1} parent=31 // pred_region
          %s302 = sand.u32 %s15, 1
          %s303 = scalar_lea.sflag [#allocation4], %s302
          %s304 = sand.u32 %s140, 1
          %s305 = smul.addr %s304, 256
          %s306 = scalar_lea.vmem [#allocation9], %s305
          %308 = vsyncadd %s303, 0
          %s309 = smul.addr %s15, 64
          %s310 = smul.addr %s309, 4
          %s311 = scalar_lea.hbm %s5, %s310
          %s312 = sshll.u32 %s311, 4
          %s313 = int_to_ptr.hbm [resolvable:$true] %s312
          %s314 = sshll.u32 %s306, 4
          %s315 = int_to_ptr.vmem [resolvable:$true] %s314
          %320 = dma.hbm_to_vmem [thread:$0]  %s313, 4096, %s315, %s303, 64, 64, 4
        $region44: #{inception_aux_forward.1} parent=31 // pred_fallthru
          _
      $region32: #{inception_aux_forward.1} parent=5 // pred_fallthru
        _
      %p321 = scmp.le.s32.totalorder 1, %s15
      %p322 = scmp.lt.s32.totalorder %s15, 3
      %p323 = pnand %p321, %p322
      %p324 = pneg %p323
      // Predicated region
      $region45: #{inception_aux_forward.1} parent=5 // pred_check
        _
      $region46: #{inception_aux_forward.1} parent=5 // pred_check_branch
        %326 = sbr.rel (%p323) target = $region48
      $region47: #{inception_aux_forward.1} parent=5 // pred_region
        %s327 = ssub.s32 %s15, 1
        // Predicated region
        $region49: #{inception_aux_forward.1} parent=47 // pred_check
          %p328 = pneg %p57
        $region50: #{inception_aux_forward.1} parent=47 // pred_check_branch
          %330 = sbr.rel (%p328) target = $region52
        $region51: #{inception_aux_forward.1} parent=47 // pred_region
          %332 = dma.done [#allocation4], 1024
        $region52: #{inception_aux_forward.1} parent=47 // pred_fallthru
          _
        // Predicated region
        $region53: #{inception_aux_forward.1} parent=47 // pred_check
          %p333 = pneg %p78
        $region54: #{inception_aux_forward.1} parent=47 // pred_check_branch
          %335 = sbr.rel (%p333) target = $region56
        $region55: #{inception_aux_forward.1} parent=47 // pred_region
          %337 = dma.done [#allocation6], 16
        $region56: #{inception_aux_forward.1} parent=47 // pred_fallthru
          _
        %s338 = sand.u32 %s20, 1
        %s339 = scalar_lea.sflag [#allocation4], %s338
        %s340 = sand.u32 %s91, 1
        %s341 = smul.addr %s340, 4096
        %s342 = scalar_lea.vmem [#allocation7], %s341
        // Predicated region
        $region57: #{inception_aux_forward.1} parent=47 // pred_check
          %p343 = pneg %p104
        $region58: #{inception_aux_forward.1} parent=47 // pred_check_branch
          %345 = sbr.rel (%p343) target = $region60
        $region59: #{inception_aux_forward.1} parent=47 // pred_region
          %347 = dma.done %s339, 65536
        $region60: #{inception_aux_forward.1} parent=47 // pred_fallthru
          _
        %s348 = sand.u32 %s20, 1
        %s349 = scalar_lea.sflag [#allocation4], %s348
        %s350 = sand.u32 %s117, 1
        %s351 = smul.addr %s350, 4
        %s352 = scalar_lea.vmem [#allocation8], %s351
        // Predicated region
        $region61: #{inception_aux_forward.1} parent=47 // pred_check
          %p353 = pneg %p130
        $region62: #{inception_aux_forward.1} parent=47 // pred_check_branch
          %355 = sbr.rel (%p353) target = $region64
        $region63: #{inception_aux_forward.1} parent=47 // pred_region
          %357 = dma.done %s349, 64
        $region64: #{inception_aux_forward.1} parent=47 // pred_fallthru
          _
        %s358 = sand.u32 %s20, 1
        %s359 = scalar_lea.sflag [#allocation4], %s358
        %s360 = sand.u32 %s143, 1
        %s361 = smul.addr %s360, 256
        %s362 = scalar_lea.vmem [#allocation9], %s361
        // Predicated region
        $region65: #{inception_aux_forward.1} parent=47 // pred_check
          %p363 = pneg %p156
        $region66: #{inception_aux_forward.1} parent=47 // pred_check_branch
          %365 = sbr.rel (%p363) target = $region68
        $region67: #{inception_aux_forward.1} parent=47 // pred_region
          %367 = dma.done %s359, 4096
        $region68: #{inception_aux_forward.1} parent=47 // pred_fallthru
          _
        // Predicated region
        $region69: #{inception_aux_forward.1} parent=47 // pred_check
          %p368 = pneg %p177
        $region70: #{inception_aux_forward.1} parent=47 // pred_check_branch
          %370 = sbr.rel (%p368) target = $region72
        $region71: #{inception_aux_forward.1} parent=47 // pred_region
          %372 = dma.done [#allocation6], 16
        $region72: #{inception_aux_forward.1} parent=47 // pred_fallthru
          _
        %p373 = pneg %p36
        %p374 = pneg %p33
        %p375 = pneg %p57
        %p376 = pneg %p54
        %p377 = pneg %p78
        %p378 = pneg %p75
        %s379 = sand.u32 %s20, 1
        %s380 = scalar_lea.sflag [#allocation4], %s379
        %s381 = sand.u32 %s91, 1
        %s382 = smul.addr %s381, 4096
        %s383 = scalar_lea.vmem [#allocation7], %s382
        %p384 = pneg %p104
        %p385 = pneg %p101
        %s386 = sand.u32 %s20, 1
        %s387 = scalar_lea.sflag [#allocation4], %s386
        %s388 = sand.u32 %s117, 1
        %s389 = smul.addr %s388, 4
        %s390 = scalar_lea.vmem [#allocation8], %s389
        %p391 = pneg %p130
        %p392 = pneg %p127
        %s393 = sand.u32 %s20, 1
        %s394 = scalar_lea.sflag [#allocation4], %s393
        %s395 = sand.u32 %s143, 1
        %s396 = smul.addr %s395, 256
        %s397 = scalar_lea.vmem [#allocation9], %s396
        %p398 = pneg %p156
        %p399 = pneg %p153
        %p400 = pneg %p177
        %p401 = pneg %p174
        %p402 = pneg %p198
        %p403 = pneg %p195
        %p404 = scmp.eq.s32.totalorder %s20, 0
        // Predicated region
        $region73: #{inception_aux_forward.1} parent=47 // pred_check
          %p405 = pneg %p404
        $region74: #{inception_aux_forward.1} parent=47 // pred_check_branch
          %407 = sbr.rel (%p405) target = $region76
        $region75: #{inception_aux_forward.1} parent=47 // pred_region
          %v408 = vld [vmem:[%s0] sm:$0xf]
          %v409 = vld [vmem:[%s0 + $0x4] sm:$0xf]
          %v410 = vld [vmem:[%s0 + $0x8] sm:$0xf]
          %v411 = vld [vmem:[%s0 + $0xc] sm:$0xf]
          %v412 = vld [vmem:[%s0 + $0x10] sm:$0xf]
          %v413 = vld [vmem:[%s0 + $0x14] sm:$0xf]
          %v414 = vld [vmem:[%s0 + $0x18] sm:$0xf]
          %v415 = vld [vmem:[%s0 + $0x1c] sm:$0xf]
          %v416 = vld [vmem:[%s0 + $0x20] sm:$0xf]
          %v417 = vld [vmem:[%s0 + $0x24] sm:$0xf]
          %v418 = vld [vmem:[%s0 + $0x28] sm:$0xf]
          %v419 = vld [vmem:[%s0 + $0x2c] sm:$0xf]
          %v420 = vld [vmem:[%s0 + $0x30] sm:$0xf]
          %v421 = vld [vmem:[%s0 + $0x34] sm:$0xf]
          %v422 = vld [vmem:[%s0 + $0x38] sm:$0xf]
          %v423 = vld [vmem:[%s0 + $0x3c] sm:$0xf]
          %v424 = vld [vmem:[#allocation3] sm:$0xf]
          %v425 = vld [vmem:[#allocation3 + $0x4] sm:$0xf]
          %v426 = vld [vmem:[#allocation3 + $0x8] sm:$0xf]
          %v427 = vld [vmem:[#allocation3 + $0xc] sm:$0xf]
          %v428 = vld [vmem:[#allocation3 + $0x10] sm:$0xf]
          %v429 = vld [vmem:[#allocation3 + $0x14] sm:$0xf]
          %v430 = vld [vmem:[#allocation3 + $0x18] sm:$0xf]
          %v431 = vld [vmem:[#allocation3 + $0x1c] sm:$0xf]
          %v432 = vld [vmem:[#allocation3 + $0x20] sm:$0xf]
          %v433 = vld [vmem:[#allocation3 + $0x24] sm:$0xf]
          %v434 = vld [vmem:[#allocation3 + $0x28] sm:$0xf]
          %v435 = vld [vmem:[#allocation3 + $0x2c] sm:$0xf]
          %v436 = vld [vmem:[#allocation3 + $0x30] sm:$0xf]
          %v437 = vld [vmem:[#allocation3 + $0x34] sm:$0xf]
          %v438 = vld [vmem:[#allocation3 + $0x38] sm:$0xf]
          %v439 = vld [vmem:[#allocation3 + $0x3c] sm:$0xf]
          %v440 = vld [vmem:[#allocation5] sm:$0x1]
          %v442 = vperm.slane %v440, 0
          %v460 = vunpack.c.l.b16 %v408
          %v461 = vunpack.c.l.b16 %v409
          %v462 = vunpack.c.l.b16 %v410
          %v463 = vunpack.c.l.b16 %v411
          %v464 = vunpack.c.l.b16 %v412
          %v465 = vunpack.c.l.b16 %v413
          %v466 = vunpack.c.l.b16 %v414
          %v467 = vunpack.c.l.b16 %v415
          %v468 = vunpack.c.l.b16 %v416
          %v469 = vunpack.c.l.b16 %v417
          %v470 = vunpack.c.l.b16 %v418
          %v471 = vunpack.c.l.b16 %v419
          %v472 = vunpack.c.l.b16 %v420
          %v473 = vunpack.c.l.b16 %v421
          %v474 = vunpack.c.l.b16 %v422
          %v475 = vunpack.c.l.b16 %v423
          %v476 = vpack.c.b16 %v461, %v460
          %v477 = vpack.c.b16 %v463, %v462
          %v478 = vpack.c.b16 %v465, %v464
          %v479 = vpack.c.b16 %v467, %v466
          %v480 = vpack.c.b16 %v469, %v468
          %v481 = vpack.c.b16 %v471, %v470
          %v482 = vpack.c.b16 %v473, %v472
          %v483 = vpack.c.b16 %v475, %v474
          %v508 = vunpack.c.l.b16 %v424
          %v509 = vunpack.c.l.b16 %v425
          %v510 = vunpack.c.l.b16 %v426
          %v511 = vunpack.c.l.b16 %v427
          %v512 = vunpack.c.l.b16 %v428
          %v513 = vunpack.c.l.b16 %v429
          %v514 = vunpack.c.l.b16 %v430
          %v515 = vunpack.c.l.b16 %v431
          %v516 = vunpack.c.l.b16 %v432
          %v517 = vunpack.c.l.b16 %v433
          %v518 = vunpack.c.l.b16 %v434
          %v519 = vunpack.c.l.b16 %v435
          %v520 = vunpack.c.l.b16 %v436
          %v521 = vunpack.c.l.b16 %v437
          %v522 = vunpack.c.l.b16 %v438
          %v523 = vunpack.c.l.b16 %v439
          %v524 = vpack.c.b16 %v509, %v508
          %v525 = vpack.c.b16 %v511, %v510
          %v526 = vpack.c.b16 %v513, %v512
          %v527 = vpack.c.b16 %v515, %v514
          %v528 = vpack.c.b16 %v517, %v516
          %v529 = vpack.c.b16 %v519, %v518
          %v530 = vpack.c.b16 %v521, %v520
          %v531 = vpack.c.b16 %v523, %v522
          %540 = vmatpush.bf16.msra.mxu0 %v531
          %541 = vmatpush.bf16.msra.mxu0 %v530
          %542 = vmatpush.bf16.msra.mxu0 %v529
          %543 = vmatpush.bf16.msra.mxu0 %v528
          %544 = vmatpush.bf16.msra.mxu0 %v527
          %545 = vmatpush.bf16.msra.mxu0 %v526
          %546 = vmatpush.bf16.msra.mxu0 %v525
          %547 = vmatpush.bf16.msra.mxu0 %v524
          %548 = vmatmul.bf16.gmra.mxu0 %v476
          %v549 = vpop.f32.mrf.mxu0
          %v550 = vadd.f32 %v442, %v549
          %v551 = vpop.f32.mrf.mxu0
          %v552 = vadd.f32 %v442, %v551
          %553 = vmatmul.bf16.gmra.mxu0 %v477
          %v554 = vpop.f32.mrf.mxu0
          %v555 = vadd.f32 %v442, %v554
          %v556 = vpop.f32.mrf.mxu0
          %v557 = vadd.f32 %v442, %v556
          %558 = vmatmul.bf16.gmra.mxu0 %v478
          %v559 = vpop.f32.mrf.mxu0
          %v560 = vadd.f32 %v442, %v559
          %v561 = vpop.f32.mrf.mxu0
          %v562 = vadd.f32 %v442, %v561
          %563 = vmatmul.bf16.gmra.mxu0 %v479
          %v564 = vpop.f32.mrf.mxu0
          %v565 = vadd.f32 %v442, %v564
          %v566 = vpop.f32.mrf.mxu0
          %v567 = vadd.f32 %v442, %v566
          %568 = vmatmul.bf16.gmra.mxu0 %v480
          %v569 = vpop.f32.mrf.mxu0
          %v570 = vadd.f32 %v442, %v569
          %v571 = vpop.f32.mrf.mxu0
          %v572 = vadd.f32 %v442, %v571
          %573 = vmatmul.bf16.gmra.mxu0 %v481
          %v574 = vpop.f32.mrf.mxu0
          %v575 = vadd.f32 %v442, %v574
          %v576 = vpop.f32.mrf.mxu0
          %v577 = vadd.f32 %v442, %v576
          %578 = vmatmul.bf16.gmra.mxu0 %v482
          %v579 = vpop.f32.mrf.mxu0
          %v580 = vadd.f32 %v442, %v579
          %v581 = vpop.f32.mrf.mxu0
          %v582 = vadd.f32 %v442, %v581
          %583 = vmatmul.bf16.gmra.mxu0 %v483
          %v584 = vpop.f32.mrf.mxu0
          %v585 = vadd.f32 %v442, %v584
          %v586 = vpop.f32.mrf.mxu0
          %v587 = vadd.f32 %v442, %v586
          %588 = vdwg.mxu0
          %v589 = vmax.f32 %v550, 0.0
          %v590 = vmax.f32 %v552, 0.0
          %v591 = vmax.f32 %v555, 0.0
          %v592 = vmax.f32 %v557, 0.0
          %v593 = vmax.f32 %v560, 0.0
          %v594 = vmax.f32 %v562, 0.0
          %v595 = vmax.f32 %v565, 0.0
          %v596 = vmax.f32 %v567, 0.0
          %v597 = vmax.f32 %v570, 0.0
          %v598 = vmax.f32 %v572, 0.0
          %v599 = vmax.f32 %v575, 0.0
          %v600 = vmax.f32 %v577, 0.0
          %v601 = vmax.f32 %v580, 0.0
          %v602 = vmax.f32 %v582, 0.0
          %v603 = vmax.f32 %v585, 0.0
          %v604 = vmax.f32 %v587, 0.0
          %v605 = vpack.c.bf16 %v589, %v589
          %v606 = vpack.c.bf16 %v590, %v590
          %v607 = vpack.c.bf16 %v591, %v591
          %v608 = vpack.c.bf16 %v592, %v592
          %v609 = vpack.c.bf16 %v593, %v593
          %v610 = vpack.c.bf16 %v594, %v594
          %v611 = vpack.c.bf16 %v595, %v595
          %v612 = vpack.c.bf16 %v596, %v596
          %v613 = vpack.c.bf16 %v597, %v597
          %v614 = vpack.c.bf16 %v598, %v598
          %v615 = vpack.c.bf16 %v599, %v599
          %v616 = vpack.c.bf16 %v600, %v600
          %v617 = vpack.c.bf16 %v601, %v601
          %v618 = vpack.c.bf16 %v602, %v602
          %v619 = vpack.c.bf16 %v603, %v603
          %v620 = vpack.c.bf16 %v604, %v604
          %621 = vst [vmem:[#allocation2] sm:$0xf] %v605
          %622 = vst [vmem:[#allocation2 + $0x4] sm:$0xf] %v606
          %623 = vst [vmem:[#allocation2 + $0x8] sm:$0xf] %v607
          %624 = vst [vmem:[#allocation2 + $0xc] sm:$0xf] %v608
          %625 = vst [vmem:[#allocation2 + $0x10] sm:$0xf] %v609
          %626 = vst [vmem:[#allocation2 + $0x14] sm:$0xf] %v610
          %627 = vst [vmem:[#allocation2 + $0x18] sm:$0xf] %v611
          %628 = vst [vmem:[#allocation2 + $0x1c] sm:$0xf] %v612
          %629 = vst [vmem:[#allocation2 + $0x20] sm:$0xf] %v613
          %630 = vst [vmem:[#allocation2 + $0x24] sm:$0xf] %v614
          %631 = vst [vmem:[#allocation2 + $0x28] sm:$0xf] %v615
          %632 = vst [vmem:[#allocation2 + $0x2c] sm:$0xf] %v616
          %633 = vst [vmem:[#allocation2 + $0x30] sm:$0xf] %v617
          %634 = vst [vmem:[#allocation2 + $0x34] sm:$0xf] %v618
          %635 = vst [vmem:[#allocation2 + $0x38] sm:$0xf] %v619
          %636 = vst [vmem:[#allocation2 + $0x3c] sm:$0xf] %v620
        $region76: #{inception_aux_forward.1} parent=47 // pred_fallthru
          _
        %v637 = vld [vmem:[#allocation2] sm:$0xff]
        %v638 = vld [vmem:[#allocation2 + $0x8] sm:$0xff]
        %v639 = vld [vmem:[#allocation2 + $0x10] sm:$0xff]
        %v640 = vld [vmem:[#allocation2 + $0x18] sm:$0xff]
        %v641 = vld [vmem:[#allocation2 + $0x20] sm:$0xff]
        %v642 = vld [vmem:[#allocation2 + $0x28] sm:$0xff]
        %v643 = vld [vmem:[#allocation2 + $0x30] sm:$0xff]
        %v644 = vld [vmem:[#allocation2 + $0x38] sm:$0xff]
        %v645 = vld [vmem:[%s342] sm:$0xff]
        %v646 = vld [vmem:[%s342 + $0x8] sm:$0xff]
        %v647 = vld [vmem:[%s342 + $0x10] sm:$0xff]
        %v648 = vld [vmem:[%s342 + $0x18] sm:$0xff]
        %v649 = vld [vmem:[%s342 + $0x20] sm:$0xff]
        %v650 = vld [vmem:[%s342 + $0x28] sm:$0xff]
        %v651 = vld [vmem:[%s342 + $0x30] sm:$0xff]
        %v652 = vld [vmem:[%s342 + $0x38] sm:$0xff]
        %v653 = vld [vmem:[%s342 + $0x40] sm:$0xff]
        %v654 = vld [vmem:[%s342 + $0x48] sm:$0xff]
        %v655 = vld [vmem:[%s342 + $0x50] sm:$0xff]
        %v656 = vld [vmem:[%s342 + $0x58] sm:$0xff]
        %v657 = vld [vmem:[%s342 + $0x60] sm:$0xff]
        %v658 = vld [vmem:[%s342 + $0x68] sm:$0xff]
        %v659 = vld [vmem:[%s342 + $0x70] sm:$0xff]
        %v660 = vld [vmem:[%s342 + $0x78] sm:$0xff]
        %v661 = vld [vmem:[%s342 + $0x80] sm:$0xff]
        %v662 = vld [vmem:[%s342 + $0x88] sm:$0xff]
        %v663 = vld [vmem:[%s342 + $0x90] sm:$0xff]
        %v664 = vld [vmem:[%s342 + $0x98] sm:$0xff]
        %v665 = vld [vmem:[%s342 + $0xa0] sm:$0xff]
        %v666 = vld [vmem:[%s342 + $0xa8] sm:$0xff]
        %v667 = vld [vmem:[%s342 + $0xb0] sm:$0xff]
        %v668 = vld [vmem:[%s342 + $0xb8] sm:$0xff]
        %v669 = vld [vmem:[%s342 + $0xc0] sm:$0xff]
        %v670 = vld [vmem:[%s342 + $0xc8] sm:$0xff]
        %v671 = vld [vmem:[%s342 + $0xd0] sm:$0xff]
        %v672 = vld [vmem:[%s342 + $0xd8] sm:$0xff]
        %v673 = vld [vmem:[%s342 + $0xe0] sm:$0xff]
        %v674 = vld [vmem:[%s342 + $0xe8] sm:$0xff]
        %v675 = vld [vmem:[%s342 + $0xf0] sm:$0xff]
        %v676 = vld [vmem:[%s342 + $0xf8] sm:$0xff]
        %v677 = vld [vmem:[%s342 + $0x100] sm:$0xff]
        %v678 = vld [vmem:[%s342 + $0x108] sm:$0xff]
        %v679 = vld [vmem:[%s342 + $0x110] sm:$0xff]
        %v680 = vld [vmem:[%s342 + $0x118] sm:$0xff]
        %v681 = vld [vmem:[%s342 + $0x120] sm:$0xff]
        %v682 = vld [vmem:[%s342 + $0x128] sm:$0xff]
        %v683 = vld [vmem:[%s342 + $0x130] sm:$0xff]
        %v684 = vld [vmem:[%s342 + $0x138] sm:$0xff]
        %v685 = vld [vmem:[%s342 + $0x140] sm:$0xff]
        %v686 = vld [vmem:[%s342 + $0x148] sm:$0xff]
        %v687 = vld [vmem:[%s342 + $0x150] sm:$0xff]
        %v688 = vld [vmem:[%s342 + $0x158] sm:$0xff]
        %v689 = vld [vmem:[%s342 + $0x160] sm:$0xff]
        %v690 = vld [vmem:[%s342 + $0x168] sm:$0xff]
        %v691 = vld [vmem:[%s342 + $0x170] sm:$0xff]
        %v692 = vld [vmem:[%s342 + $0x178] sm:$0xff]
        %v693 = vld [vmem:[%s342 + $0x180] sm:$0xff]
        %v694 = vld [vmem:[%s342 + $0x188] sm:$0xff]
        %v695 = vld [vmem:[%s342 + $0x190] sm:$0xff]
        %v696 = vld [vmem:[%s342 + $0x198] sm:$0xff]
        %v697 = vld [vmem:[%s342 + $0x1a0] sm:$0xff]
        %v698 = vld [vmem:[%s342 + $0x1a8] sm:$0xff]
        %v699 = vld [vmem:[%s342 + $0x1b0] sm:$0xff]
        %v700 = vld [vmem:[%s342 + $0x1b8] sm:$0xff]
        %v701 = vld [vmem:[%s342 + $0x1c0] sm:$0xff]
        %v702 = vld [vmem:[%s342 + $0x1c8] sm:$0xff]
        %v703 = vld [vmem:[%s342 + $0x1d0] sm:$0xff]
        %v704 = vld [vmem:[%s342 + $0x1d8] sm:$0xff]
        %v705 = vld [vmem:[%s342 + $0x1e0] sm:$0xff]
        %v706 = vld [vmem:[%s342 + $0x1e8] sm:$0xff]
        %v707 = vld [vmem:[%s342 + $0x1f0] sm:$0xff]
        %v708 = vld [vmem:[%s342 + $0x1f8] sm:$0xff]
        %v709 = vld [vmem:[%s342 + $0x200] sm:$0xff]
        %v710 = vld [vmem:[%s342 + $0x208] sm:$0xff]
        %v711 = vld [vmem:[%s342 + $0x210] sm:$0xff]
        %v712 = vld [vmem:[%s342 + $0x218] sm:$0xff]
        %v713 = vld [vmem:[%s342 + $0x220] sm:$0xff]
        %v714 = vld [vmem:[%s342 + $0x228] sm:$0xff]
        %v715 = vld [vmem:[%s342 + $0x230] sm:$0xff]
        %v716 = vld [vmem:[%s342 + $0x238] sm:$0xff]
        %v717 = vld [vmem:[%s342 + $0x240] sm:$0xff]
        %v718 = vld [vmem:[%s342 + $0x248] sm:$0xff]
        %v719 = vld [vmem:[%s342 + $0x250] sm:$0xff]
        %v720 = vld [vmem:[%s342 + $0x258] sm:$0xff]
        %v721 = vld [vmem:[%s342 + $0x260] sm:$0xff]
        %v722 = vld [vmem:[%s342 + $0x268] sm:$0xff]
        %v723 = vld [vmem:[%s342 + $0x270] sm:$0xff]
        %v724 = vld [vmem:[%s342 + $0x278] sm:$0xff]
        %v725 = vld [vmem:[%s342 + $0x280] sm:$0xff]
        %v726 = vld [vmem:[%s342 + $0x288] sm:$0xff]
        %v727 = vld [vmem:[%s342 + $0x290] sm:$0xff]
        %v728 = vld [vmem:[%s342 + $0x298] sm:$0xff]
        %v729 = vld [vmem:[%s342 + $0x2a0] sm:$0xff]
        %v730 = vld [vmem:[%s342 + $0x2a8] sm:$0xff]
        %v731 = vld [vmem:[%s342 + $0x2b0] sm:$0xff]
        %v732 = vld [vmem:[%s342 + $0x2b8] sm:$0xff]
        %v733 = vld [vmem:[%s342 + $0x2c0] sm:$0xff]
        %v734 = vld [vmem:[%s342 + $0x2c8] sm:$0xff]
        %v735 = vld [vmem:[%s342 + $0x2d0] sm:$0xff]
        %v736 = vld [vmem:[%s342 + $0x2d8] sm:$0xff]
        %v737 = vld [vmem:[%s342 + $0x2e0] sm:$0xff]
        %v738 = vld [vmem:[%s342 + $0x2e8] sm:$0xff]
        %v739 = vld [vmem:[%s342 + $0x2f0] sm:$0xff]
        %v740 = vld [vmem:[%s342 + $0x2f8] sm:$0xff]
        %v741 = vld [vmem:[%s342 + $0x300] sm:$0xff]
        %v742 = vld [vmem:[%s342 + $0x308] sm:$0xff]
        %v743 = vld [vmem:[%s342 + $0x310] sm:$0xff]
        %v744 = vld [vmem:[%s342 + $0x318] sm:$0xff]
        %v745 = vld [vmem:[%s342 + $0x320] sm:$0xff]
        %v746 = vld [vmem:[%s342 + $0x328] sm:$0xff]
        %v747 = vld [vmem:[%s342 + $0x330] sm:$0xff]
        %v748 = vld [vmem:[%s342 + $0x338] sm:$0xff]
        %v749 = vld [vmem:[%s342 + $0x340] sm:$0xff]
        %v750 = vld [vmem:[%s342 + $0x348] sm:$0xff]
        %v751 = vld [vmem:[%s342 + $0x350] sm:$0xff]
        %v752 = vld [vmem:[%s342 + $0x358] sm:$0xff]
        %v753 = vld [vmem:[%s342 + $0x360] sm:$0xff]
        %v754 = vld [vmem:[%s342 + $0x368] sm:$0xff]
        %v755 = vld [vmem:[%s342 + $0x370] sm:$0xff]
        %v756 = vld [vmem:[%s342 + $0x378] sm:$0xff]
        %v757 = vld [vmem:[%s342 + $0x380] sm:$0xff]
        %v758 = vld [vmem:[%s342 + $0x388] sm:$0xff]
        %v759 = vld [vmem:[%s342 + $0x390] sm:$0xff]
        %v760 = vld [vmem:[%s342 + $0x398] sm:$0xff]
        %v761 = vld [vmem:[%s342 + $0x3a0] sm:$0xff]
        %v762 = vld [vmem:[%s342 + $0x3a8] sm:$0xff]
        %v763 = vld [vmem:[%s342 + $0x3b0] sm:$0xff]
        %v764 = vld [vmem:[%s342 + $0x3b8] sm:$0xff]
        %v765 = vld [vmem:[%s342 + $0x3c0] sm:$0xff]
        %v766 = vld [vmem:[%s342 + $0x3c8] sm:$0xff]
        %v767 = vld [vmem:[%s342 + $0x3d0] sm:$0xff]
        %v768 = vld [vmem:[%s342 + $0x3d8] sm:$0xff]
        %v769 = vld [vmem:[%s342 + $0x3e0] sm:$0xff]
        %v770 = vld [vmem:[%s342 + $0x3e8] sm:$0xff]
        %v771 = vld [vmem:[%s342 + $0x3f0] sm:$0xff]
        %v772 = vld [vmem:[%s342 + $0x3f8] sm:$0xff]
        %v773 = vld [vmem:[%s342 + $0x400] sm:$0xff]
        %v774 = vld [vmem:[%s342 + $0x408] sm:$0xff]
        %v775 = vld [vmem:[%s342 + $0x410] sm:$0xff]
        %v776 = vld [vmem:[%s342 + $0x418] sm:$0xff]
        %v777 = vld [vmem:[%s342 + $0x420] sm:$0xff]
        %v778 = vld [vmem:[%s342 + $0x428] sm:$0xff]
        %v779 = vld [vmem:[%s342 + $0x430] sm:$0xff]
        %v780 = vld [vmem:[%s342 + $0x438] sm:$0xff]
        %v781 = vld [vmem:[%s342 + $0x440] sm:$0xff]
        %v782 = vld [vmem:[%s342 + $0x448] sm:$0xff]
        %v783 = vld [vmem:[%s342 + $0x450] sm:$0xff]
        %v784 = vld [vmem:[%s342 + $0x458] sm:$0xff]
        %v785 = vld [vmem:[%s342 + $0x460] sm:$0xff]
        %v786 = vld [vmem:[%s342 + $0x468] sm:$0xff]
        %v787 = vld [vmem:[%s342 + $0x470] sm:$0xff]
        %v788 = vld [vmem:[%s342 + $0x478] sm:$0xff]
        %v789 = vld [vmem:[%s342 + $0x480] sm:$0xff]
        %v790 = vld [vmem:[%s342 + $0x488] sm:$0xff]
        %v791 = vld [vmem:[%s342 + $0x490] sm:$0xff]
        %v792 = vld [vmem:[%s342 + $0x498] sm:$0xff]
        %v793 = vld [vmem:[%s342 + $0x4a0] sm:$0xff]
        %v794 = vld [vmem:[%s342 + $0x4a8] sm:$0xff]
        %v795 = vld [vmem:[%s342 + $0x4b0] sm:$0xff]
        %v796 = vld [vmem:[%s342 + $0x4b8] sm:$0xff]
        %v797 = vld [vmem:[%s342 + $0x4c0] sm:$0xff]
        %v798 = vld [vmem:[%s342 + $0x4c8] sm:$0xff]
        %v799 = vld [vmem:[%s342 + $0x4d0] sm:$0xff]
        %v800 = vld [vmem:[%s342 + $0x4d8] sm:$0xff]
        %v801 = vld [vmem:[%s342 + $0x4e0] sm:$0xff]
        %v802 = vld [vmem:[%s342 + $0x4e8] sm:$0xff]
        %v803 = vld [vmem:[%s342 + $0x4f0] sm:$0xff]
        %v804 = vld [vmem:[%s342 + $0x4f8] sm:$0xff]
        %v805 = vld [vmem:[%s342 + $0x500] sm:$0xff]
        %v806 = vld [vmem:[%s342 + $0x508] sm:$0xff]
        %v807 = vld [vmem:[%s342 + $0x510] sm:$0xff]
        %v808 = vld [vmem:[%s342 + $0x518] sm:$0xff]
        %v809 = vld [vmem:[%s342 + $0x520] sm:$0xff]
        %v810 = vld [vmem:[%s342 + $0x528] sm:$0xff]
        %v811 = vld [vmem:[%s342 + $0x530] sm:$0xff]
        %v812 = vld [vmem:[%s342 + $0x538] sm:$0xff]
        %v813 = vld [vmem:[%s342 + $0x540] sm:$0xff]
        %v814 = vld [vmem:[%s342 + $0x548] sm:$0xff]
        %v815 = vld [vmem:[%s342 + $0x550] sm:$0xff]
        %v816 = vld [vmem:[%s342 + $0x558] sm:$0xff]
        %v817 = vld [vmem:[%s342 + $0x560] sm:$0xff]
        %v818 = vld [vmem:[%s342 + $0x568] sm:$0xff]
        %v819 = vld [vmem:[%s342 + $0x570] sm:$0xff]
        %v820 = vld [vmem:[%s342 + $0x578] sm:$0xff]
        %v821 = vld [vmem:[%s342 + $0x580] sm:$0xff]
        %v822 = vld [vmem:[%s342 + $0x588] sm:$0xff]
        %v823 = vld [vmem:[%s342 + $0x590] sm:$0xff]
        %v824 = vld [vmem:[%s342 + $0x598] sm:$0xff]
        %v825 = vld [vmem:[%s342 + $0x5a0] sm:$0xff]
        %v826 = vld [vmem:[%s342 + $0x5a8] sm:$0xff]
        %v827 = vld [vmem:[%s342 + $0x5b0] sm:$0xff]
        %v828 = vld [vmem:[%s342 + $0x5b8] sm:$0xff]
        %v829 = vld [vmem:[%s342 + $0x5c0] sm:$0xff]
        %v830 = vld [vmem:[%s342 + $0x5c8] sm:$0xff]
        %v831 = vld [vmem:[%s342 + $0x5d0] sm:$0xff]
        %v832 = vld [vmem:[%s342 + $0x5d8] sm:$0xff]
        %v833 = vld [vmem:[%s342 + $0x5e0] sm:$0xff]
        %v834 = vld [vmem:[%s342 + $0x5e8] sm:$0xff]
        %v835 = vld [vmem:[%s342 + $0x5f0] sm:$0xff]
        %v836 = vld [vmem:[%s342 + $0x5f8] sm:$0xff]
        %v837 = vld [vmem:[%s342 + $0x600] sm:$0xff]
        %v838 = vld [vmem:[%s342 + $0x608] sm:$0xff]
        %v839 = vld [vmem:[%s342 + $0x610] sm:$0xff]
        %v840 = vld [vmem:[%s342 + $0x618] sm:$0xff]
        %v841 = vld [vmem:[%s342 + $0x620] sm:$0xff]
        %v842 = vld [vmem:[%s342 + $0x628] sm:$0xff]
        %v843 = vld [vmem:[%s342 + $0x630] sm:$0xff]
        %v844 = vld [vmem:[%s342 + $0x638] sm:$0xff]
        %v845 = vld [vmem:[%s342 + $0x640] sm:$0xff]
        %v846 = vld [vmem:[%s342 + $0x648] sm:$0xff]
        %v847 = vld [vmem:[%s342 + $0x650] sm:$0xff]
        %v848 = vld [vmem:[%s342 + $0x658] sm:$0xff]
        %v849 = vld [vmem:[%s342 + $0x660] sm:$0xff]
        %v850 = vld [vmem:[%s342 + $0x668] sm:$0xff]
        %v851 = vld [vmem:[%s342 + $0x670] sm:$0xff]
        %v852 = vld [vmem:[%s342 + $0x678] sm:$0xff]
        %v853 = vld [vmem:[%s342 + $0x680] sm:$0xff]
        %v854 = vld [vmem:[%s342 + $0x688] sm:$0xff]
        %v855 = vld [vmem:[%s342 + $0x690] sm:$0xff]
        %v856 = vld [vmem:[%s342 + $0x698] sm:$0xff]
        %v857 = vld [vmem:[%s342 + $0x6a0] sm:$0xff]
        %v858 = vld [vmem:[%s342 + $0x6a8] sm:$0xff]
        %v859 = vld [vmem:[%s342 + $0x6b0] sm:$0xff]
        %v860 = vld [vmem:[%s342 + $0x6b8] sm:$0xff]
        %v861 = vld [vmem:[%s342 + $0x6c0] sm:$0xff]
        %v862 = vld [vmem:[%s342 + $0x6c8] sm:$0xff]
        %v863 = vld [vmem:[%s342 + $0x6d0] sm:$0xff]
        %v864 = vld [vmem:[%s342 + $0x6d8] sm:$0xff]
        %v865 = vld [vmem:[%s342 + $0x6e0] sm:$0xff]
        %v866 = vld [vmem:[%s342 + $0x6e8] sm:$0xff]
        %v867 = vld [vmem:[%s342 + $0x6f0] sm:$0xff]
        %v868 = vld [vmem:[%s342 + $0x6f8] sm:$0xff]
        %v869 = vld [vmem:[%s342 + $0x700] sm:$0xff]
        %v870 = vld [vmem:[%s342 + $0x708] sm:$0xff]
        %v871 = vld [vmem:[%s342 + $0x710] sm:$0xff]
        %v872 = vld [vmem:[%s342 + $0x718] sm:$0xff]
        %v873 = vld [vmem:[%s342 + $0x720] sm:$0xff]
        %v874 = vld [vmem:[%s342 + $0x728] sm:$0xff]
        %v875 = vld [vmem:[%s342 + $0x730] sm:$0xff]
        %v876 = vld [vmem:[%s342 + $0x738] sm:$0xff]
        %v877 = vld [vmem:[%s342 + $0x740] sm:$0xff]
        %v878 = vld [vmem:[%s342 + $0x748] sm:$0xff]
        %v879 = vld [vmem:[%s342 + $0x750] sm:$0xff]
        %v880 = vld [vmem:[%s342 + $0x758] sm:$0xff]
        %v881 = vld [vmem:[%s342 + $0x760] sm:$0xff]
        %v882 = vld [vmem:[%s342 + $0x768] sm:$0xff]
        %v883 = vld [vmem:[%s342 + $0x770] sm:$0xff]
        %v884 = vld [vmem:[%s342 + $0x778] sm:$0xff]
        %v885 = vld [vmem:[%s342 + $0x780] sm:$0xff]
        %v886 = vld [vmem:[%s342 + $0x788] sm:$0xff]
        %v887 = vld [vmem:[%s342 + $0x790] sm:$0xff]
        %v888 = vld [vmem:[%s342 + $0x798] sm:$0xff]
        %v889 = vld [vmem:[%s342 + $0x7a0] sm:$0xff]
        %v890 = vld [vmem:[%s342 + $0x7a8] sm:$0xff]
        %v891 = vld [vmem:[%s342 + $0x7b0] sm:$0xff]
        %v892 = vld [vmem:[%s342 + $0x7b8] sm:$0xff]
        %v893 = vld [vmem:[%s342 + $0x7c0] sm:$0xff]
        %v894 = vld [vmem:[%s342 + $0x7c8] sm:$0xff]
        %v895 = vld [vmem:[%s342 + $0x7d0] sm:$0xff]
        %v896 = vld [vmem:[%s342 + $0x7d8] sm:$0xff]
        %v897 = vld [vmem:[%s342 + $0x7e0] sm:$0xff]
        %v898 = vld [vmem:[%s342 + $0x7e8] sm:$0xff]
        %v899 = vld [vmem:[%s342 + $0x7f0] sm:$0xff]
        %v900 = vld [vmem:[%s342 + $0x7f8] sm:$0xff]
        %v901 = vld [vmem:[%s342 + $0x800] sm:$0xff]
        %v902 = vld [vmem:[%s342 + $0x808] sm:$0xff]
        %v903 = vld [vmem:[%s342 + $0x810] sm:$0xff]
        %v904 = vld [vmem:[%s342 + $0x818] sm:$0xff]
        %v905 = vld [vmem:[%s342 + $0x820] sm:$0xff]
        %v906 = vld [vmem:[%s342 + $0x828] sm:$0xff]
        %v907 = vld [vmem:[%s342 + $0x830] sm:$0xff]
        %v908 = vld [vmem:[%s342 + $0x838] sm:$0xff]
        %v909 = vld [vmem:[%s342 + $0x840] sm:$0xff]
        %v910 = vld [vmem:[%s342 + $0x848] sm:$0xff]
        %v911 = vld [vmem:[%s342 + $0x850] sm:$0xff]
        %v912 = vld [vmem:[%s342 + $0x858] sm:$0xff]
        %v913 = vld [vmem:[%s342 + $0x860] sm:$0xff]
        %v914 = vld [vmem:[%s342 + $0x868] sm:$0xff]
        %v915 = vld [vmem:[%s342 + $0x870] sm:$0xff]
        %v916 = vld [vmem:[%s342 + $0x878] sm:$0xff]
        %v917 = vld [vmem:[%s342 + $0x880] sm:$0xff]
        %v918 = vld [vmem:[%s342 + $0x888] sm:$0xff]
        %v919 = vld [vmem:[%s342 + $0x890] sm:$0xff]
        %v920 = vld [vmem:[%s342 + $0x898] sm:$0xff]
        %v921 = vld [vmem:[%s342 + $0x8a0] sm:$0xff]
        %v922 = vld [vmem:[%s342 + $0x8a8] sm:$0xff]
        %v923 = vld [vmem:[%s342 + $0x8b0] sm:$0xff]
        %v924 = vld [vmem:[%s342 + $0x8b8] sm:$0xff]
        %v925 = vld [vmem:[%s342 + $0x8c0] sm:$0xff]
        %v926 = vld [vmem:[%s342 + $0x8c8] sm:$0xff]
        %v927 = vld [vmem:[%s342 + $0x8d0] sm:$0xff]
        %v928 = vld [vmem:[%s342 + $0x8d8] sm:$0xff]
        %v929 = vld [vmem:[%s342 + $0x8e0] sm:$0xff]
        %v930 = vld [vmem:[%s342 + $0x8e8] sm:$0xff]
        %v931 = vld [vmem:[%s342 + $0x8f0] sm:$0xff]
        %v932 = vld [vmem:[%s342 + $0x8f8] sm:$0xff]
        %v933 = vld [vmem:[%s342 + $0x900] sm:$0xff]
        %v934 = vld [vmem:[%s342 + $0x908] sm:$0xff]
        %v935 = vld [vmem:[%s342 + $0x910] sm:$0xff]
        %v936 = vld [vmem:[%s342 + $0x918] sm:$0xff]
        %v937 = vld [vmem:[%s342 + $0x920] sm:$0xff]
        %v938 = vld [vmem:[%s342 + $0x928] sm:$0xff]
        %v939 = vld [vmem:[%s342 + $0x930] sm:$0xff]
        %v940 = vld [vmem:[%s342 + $0x938] sm:$0xff]
        %v941 = vld [vmem:[%s342 + $0x940] sm:$0xff]
        %v942 = vld [vmem:[%s342 + $0x948] sm:$0xff]
        %v943 = vld [vmem:[%s342 + $0x950] sm:$0xff]
        %v944 = vld [vmem:[%s342 + $0x958] sm:$0xff]
        %v945 = vld [vmem:[%s342 + $0x960] sm:$0xff]
        %v946 = vld [vmem:[%s342 + $0x968] sm:$0xff]
        %v947 = vld [vmem:[%s342 + $0x970] sm:$0xff]
        %v948 = vld [vmem:[%s342 + $0x978] sm:$0xff]
        %v949 = vld [vmem:[%s342 + $0x980] sm:$0xff]
        %v950 = vld [vmem:[%s342 + $0x988] sm:$0xff]
        %v951 = vld [vmem:[%s342 + $0x990] sm:$0xff]
        %v952 = vld [vmem:[%s342 + $0x998] sm:$0xff]
        %v953 = vld [vmem:[%s342 + $0x9a0] sm:$0xff]
        %v954 = vld [vmem:[%s342 + $0x9a8] sm:$0xff]
        %v955 = vld [vmem:[%s342 + $0x9b0] sm:$0xff]
        %v956 = vld [vmem:[%s342 + $0x9b8] sm:$0xff]
        %v957 = vld [vmem:[%s342 + $0x9c0] sm:$0xff]
        %v958 = vld [vmem:[%s342 + $0x9c8] sm:$0xff]
        %v959 = vld [vmem:[%s342 + $0x9d0] sm:$0xff]
        %v960 = vld [vmem:[%s342 + $0x9d8] sm:$0xff]
        %v961 = vld [vmem:[%s342 + $0x9e0] sm:$0xff]
        %v962 = vld [vmem:[%s342 + $0x9e8] sm:$0xff]
        %v963 = vld [vmem:[%s342 + $0x9f0] sm:$0xff]
        %v964 = vld [vmem:[%s342 + $0x9f8] sm:$0xff]
        %v965 = vld [vmem:[%s342 + $0xa00] sm:$0xff]
        %v966 = vld [vmem:[%s342 + $0xa08] sm:$0xff]
        %v967 = vld [vmem:[%s342 + $0xa10] sm:$0xff]
        %v968 = vld [vmem:[%s342 + $0xa18] sm:$0xff]
        %v969 = vld [vmem:[%s342 + $0xa20] sm:$0xff]
        %v970 = vld [vmem:[%s342 + $0xa28] sm:$0xff]
        %v971 = vld [vmem:[%s342 + $0xa30] sm:$0xff]
        %v972 = vld [vmem:[%s342 + $0xa38] sm:$0xff]
        %v973 = vld [vmem:[%s342 + $0xa40] sm:$0xff]
        %v974 = vld [vmem:[%s342 + $0xa48] sm:$0xff]
        %v975 = vld [vmem:[%s342 + $0xa50] sm:$0xff]
        %v976 = vld [vmem:[%s342 + $0xa58] sm:$0xff]
        %v977 = vld [vmem:[%s342 + $0xa60] sm:$0xff]
        %v978 = vld [vmem:[%s342 + $0xa68] sm:$0xff]
        %v979 = vld [vmem:[%s342 + $0xa70] sm:$0xff]
        %v980 = vld [vmem:[%s342 + $0xa78] sm:$0xff]
        %v981 = vld [vmem:[%s342 + $0xa80] sm:$0xff]
        %v982 = vld [vmem:[%s342 + $0xa88] sm:$0xff]
        %v983 = vld [vmem:[%s342 + $0xa90] sm:$0xff]
        %v984 = vld [vmem:[%s342 + $0xa98] sm:$0xff]
        %v985 = vld [vmem:[%s342 + $0xaa0] sm:$0xff]
        %v986 = vld [vmem:[%s342 + $0xaa8] sm:$0xff]
        %v987 = vld [vmem:[%s342 + $0xab0] sm:$0xff]
        %v988 = vld [vmem:[%s342 + $0xab8] sm:$0xff]
        %v989 = vld [vmem:[%s342 + $0xac0] sm:$0xff]
        %v990 = vld [vmem:[%s342 + $0xac8] sm:$0xff]
        %v991 = vld [vmem:[%s342 + $0xad0] sm:$0xff]
        %v992 = vld [vmem:[%s342 + $0xad8] sm:$0xff]
        %v993 = vld [vmem:[%s342 + $0xae0] sm:$0xff]
        %v994 = vld [vmem:[%s342 + $0xae8] sm:$0xff]
        %v995 = vld [vmem:[%s342 + $0xaf0] sm:$0xff]
        %v996 = vld [vmem:[%s342 + $0xaf8] sm:$0xff]
        %v997 = vld [vmem:[%s342 + $0xb00] sm:$0xff]
        %v998 = vld [vmem:[%s342 + $0xb08] sm:$0xff]
        %v999 = vld [vmem:[%s342 + $0xb10] sm:$0xff]
        %v1000 = vld [vmem:[%s342 + $0xb18] sm:$0xff]
        %v1001 = vld [vmem:[%s342 + $0xb20] sm:$0xff]
        %v1002 = vld [vmem:[%s342 + $0xb28] sm:$0xff]
        %v1003 = vld [vmem:[%s342 + $0xb30] sm:$0xff]
        %v1004 = vld [vmem:[%s342 + $0xb38] sm:$0xff]
        %v1005 = vld [vmem:[%s342 + $0xb40] sm:$0xff]
        %v1006 = vld [vmem:[%s342 + $0xb48] sm:$0xff]
        %v1007 = vld [vmem:[%s342 + $0xb50] sm:$0xff]
        %v1008 = vld [vmem:[%s342 + $0xb58] sm:$0xff]
        %v1009 = vld [vmem:[%s342 + $0xb60] sm:$0xff]
        %v1010 = vld [vmem:[%s342 + $0xb68] sm:$0xff]
        %v1011 = vld [vmem:[%s342 + $0xb70] sm:$0xff]
        %v1012 = vld [vmem:[%s342 + $0xb78] sm:$0xff]
        %v1013 = vld [vmem:[%s342 + $0xb80] sm:$0xff]
        %v1014 = vld [vmem:[%s342 + $0xb88] sm:$0xff]
        %v1015 = vld [vmem:[%s342 + $0xb90] sm:$0xff]
        %v1016 = vld [vmem:[%s342 + $0xb98] sm:$0xff]
        %v1017 = vld [vmem:[%s342 + $0xba0] sm:$0xff]
        %v1018 = vld [vmem:[%s342 + $0xba8] sm:$0xff]
        %v1019 = vld [vmem:[%s342 + $0xbb0] sm:$0xff]
        %v1020 = vld [vmem:[%s342 + $0xbb8] sm:$0xff]
        %v1021 = vld [vmem:[%s342 + $0xbc0] sm:$0xff]
        %v1022 = vld [vmem:[%s342 + $0xbc8] sm:$0xff]
        %v1023 = vld [vmem:[%s342 + $0xbd0] sm:$0xff]
        %v1024 = vld [vmem:[%s342 + $0xbd8] sm:$0xff]
        %v1025 = vld [vmem:[%s342 + $0xbe0] sm:$0xff]
        %v1026 = vld [vmem:[%s342 + $0xbe8] sm:$0xff]
        %v1027 = vld [vmem:[%s342 + $0xbf0] sm:$0xff]
        %v1028 = vld [vmem:[%s342 + $0xbf8] sm:$0xff]
        %v1029 = vld [vmem:[%s342 + $0xc00] sm:$0xff]
        %v1030 = vld [vmem:[%s342 + $0xc08] sm:$0xff]
        %v1031 = vld [vmem:[%s342 + $0xc10] sm:$0xff]
        %v1032 = vld [vmem:[%s342 + $0xc18] sm:$0xff]
        %v1033 = vld [vmem:[%s342 + $0xc20] sm:$0xff]
        %v1034 = vld [vmem:[%s342 + $0xc28] sm:$0xff]
        %v1035 = vld [vmem:[%s342 + $0xc30] sm:$0xff]
        %v1036 = vld [vmem:[%s342 + $0xc38] sm:$0xff]
        %v1037 = vld [vmem:[%s342 + $0xc40] sm:$0xff]
        %v1038 = vld [vmem:[%s342 + $0xc48] sm:$0xff]
        %v1039 = vld [vmem:[%s342 + $0xc50] sm:$0xff]
        %v1040 = vld [vmem:[%s342 + $0xc58] sm:$0xff]
        %v1041 = vld [vmem:[%s342 + $0xc60] sm:$0xff]
        %v1042 = vld [vmem:[%s342 + $0xc68] sm:$0xff]
        %v1043 = vld [vmem:[%s342 + $0xc70] sm:$0xff]
        %v1044 = vld [vmem:[%s342 + $0xc78] sm:$0xff]
        %v1045 = vld [vmem:[%s342 + $0xc80] sm:$0xff]
        %v1046 = vld [vmem:[%s342 + $0xc88] sm:$0xff]
        %v1047 = vld [vmem:[%s342 + $0xc90] sm:$0xff]
        %v1048 = vld [vmem:[%s342 + $0xc98] sm:$0xff]
        %v1049 = vld [vmem:[%s342 + $0xca0] sm:$0xff]
        %v1050 = vld [vmem:[%s342 + $0xca8] sm:$0xff]
        %v1051 = vld [vmem:[%s342 + $0xcb0] sm:$0xff]
        %v1052 = vld [vmem:[%s342 + $0xcb8] sm:$0xff]
        %v1053 = vld [vmem:[%s342 + $0xcc0] sm:$0xff]
        %v1054 = vld [vmem:[%s342 + $0xcc8] sm:$0xff]
        %v1055 = vld [vmem:[%s342 + $0xcd0] sm:$0xff]
        %v1056 = vld [vmem:[%s342 + $0xcd8] sm:$0xff]
        %v1057 = vld [vmem:[%s342 + $0xce0] sm:$0xff]
        %v1058 = vld [vmem:[%s342 + $0xce8] sm:$0xff]
        %v1059 = vld [vmem:[%s342 + $0xcf0] sm:$0xff]
        %v1060 = vld [vmem:[%s342 + $0xcf8] sm:$0xff]
        %v1061 = vld [vmem:[%s342 + $0xd00] sm:$0xff]
        %v1062 = vld [vmem:[%s342 + $0xd08] sm:$0xff]
        %v1063 = vld [vmem:[%s342 + $0xd10] sm:$0xff]
        %v1064 = vld [vmem:[%s342 + $0xd18] sm:$0xff]
        %v1065 = vld [vmem:[%s342 + $0xd20] sm:$0xff]
        %v1066 = vld [vmem:[%s342 + $0xd28] sm:$0xff]
        %v1067 = vld [vmem:[%s342 + $0xd30] sm:$0xff]
        %v1068 = vld [vmem:[%s342 + $0xd38] sm:$0xff]
        %v1069 = vld [vmem:[%s342 + $0xd40] sm:$0xff]
        %v1070 = vld [vmem:[%s342 + $0xd48] sm:$0xff]
        %v1071 = vld [vmem:[%s342 + $0xd50] sm:$0xff]
        %v1072 = vld [vmem:[%s342 + $0xd58] sm:$0xff]
        %v1073 = vld [vmem:[%s342 + $0xd60] sm:$0xff]
        %v1074 = vld [vmem:[%s342 + $0xd68] sm:$0xff]
        %v1075 = vld [vmem:[%s342 + $0xd70] sm:$0xff]
        %v1076 = vld [vmem:[%s342 + $0xd78] sm:$0xff]
        %v1077 = vld [vmem:[%s342 + $0xd80] sm:$0xff]
        %v1078 = vld [vmem:[%s342 + $0xd88] sm:$0xff]
        %v1079 = vld [vmem:[%s342 + $0xd90] sm:$0xff]
        %v1080 = vld [vmem:[%s342 + $0xd98] sm:$0xff]
        %v1081 = vld [vmem:[%s342 + $0xda0] sm:$0xff]
        %v1082 = vld [vmem:[%s342 + $0xda8] sm:$0xff]
        %v1083 = vld [vmem:[%s342 + $0xdb0] sm:$0xff]
        %v1084 = vld [vmem:[%s342 + $0xdb8] sm:$0xff]
        %v1085 = vld [vmem:[%s342 + $0xdc0] sm:$0xff]
        %v1086 = vld [vmem:[%s342 + $0xdc8] sm:$0xff]
        %v1087 = vld [vmem:[%s342 + $0xdd0] sm:$0xff]
        %v1088 = vld [vmem:[%s342 + $0xdd8] sm:$0xff]
        %v1089 = vld [vmem:[%s342 + $0xde0] sm:$0xff]
        %v1090 = vld [vmem:[%s342 + $0xde8] sm:$0xff]
        %v1091 = vld [vmem:[%s342 + $0xdf0] sm:$0xff]
        %v1092 = vld [vmem:[%s342 + $0xdf8] sm:$0xff]
        %v1093 = vld [vmem:[%s342 + $0xe00] sm:$0xff]
        %v1094 = vld [vmem:[%s342 + $0xe08] sm:$0xff]
        %v1095 = vld [vmem:[%s342 + $0xe10] sm:$0xff]
        %v1096 = vld [vmem:[%s342 + $0xe18] sm:$0xff]
        %v1097 = vld [vmem:[%s342 + $0xe20] sm:$0xff]
        %v1098 = vld [vmem:[%s342 + $0xe28] sm:$0xff]
        %v1099 = vld [vmem:[%s342 + $0xe30] sm:$0xff]
        %v1100 = vld [vmem:[%s342 + $0xe38] sm:$0xff]
        %v1101 = vld [vmem:[%s342 + $0xe40] sm:$0xff]
        %v1102 = vld [vmem:[%s342 + $0xe48] sm:$0xff]
        %v1103 = vld [vmem:[%s342 + $0xe50] sm:$0xff]
        %v1104 = vld [vmem:[%s342 + $0xe58] sm:$0xff]
        %v1105 = vld [vmem:[%s342 + $0xe60] sm:$0xff]
        %v1106 = vld [vmem:[%s342 + $0xe68] sm:$0xff]
        %v1107 = vld [vmem:[%s342 + $0xe70] sm:$0xff]
        %v1108 = vld [vmem:[%s342 + $0xe78] sm:$0xff]
        %v1109 = vld [vmem:[%s342 + $0xe80] sm:$0xff]
        %v1110 = vld [vmem:[%s342 + $0xe88] sm:$0xff]
        %v1111 = vld [vmem:[%s342 + $0xe90] sm:$0xff]
        %v1112 = vld [vmem:[%s342 + $0xe98] sm:$0xff]
        %v1113 = vld [vmem:[%s342 + $0xea0] sm:$0xff]
        %v1114 = vld [vmem:[%s342 + $0xea8] sm:$0xff]
        %v1115 = vld [vmem:[%s342 + $0xeb0] sm:$0xff]
        %v1116 = vld [vmem:[%s342 + $0xeb8] sm:$0xff]
        %v1117 = vld [vmem:[%s342 + $0xec0] sm:$0xff]
        %v1118 = vld [vmem:[%s342 + $0xec8] sm:$0xff]
        %v1119 = vld [vmem:[%s342 + $0xed0] sm:$0xff]
        %v1120 = vld [vmem:[%s342 + $0xed8] sm:$0xff]
        %v1121 = vld [vmem:[%s342 + $0xee0] sm:$0xff]
        %v1122 = vld [vmem:[%s342 + $0xee8] sm:$0xff]
        %v1123 = vld [vmem:[%s342 + $0xef0] sm:$0xff]
        %v1124 = vld [vmem:[%s342 + $0xef8] sm:$0xff]
        %v1125 = vld [vmem:[%s342 + $0xf00] sm:$0xff]
        %v1126 = vld [vmem:[%s342 + $0xf08] sm:$0xff]
        %v1127 = vld [vmem:[%s342 + $0xf10] sm:$0xff]
        %v1128 = vld [vmem:[%s342 + $0xf18] sm:$0xff]
        %v1129 = vld [vmem:[%s342 + $0xf20] sm:$0xff]
        %v1130 = vld [vmem:[%s342 + $0xf28] sm:$0xff]
        %v1131 = vld [vmem:[%s342 + $0xf30] sm:$0xff]
        %v1132 = vld [vmem:[%s342 + $0xf38] sm:$0xff]
        %v1133 = vld [vmem:[%s342 + $0xf40] sm:$0xff]
        %v1134 = vld [vmem:[%s342 + $0xf48] sm:$0xff]
        %v1135 = vld [vmem:[%s342 + $0xf50] sm:$0xff]
        %v1136 = vld [vmem:[%s342 + $0xf58] sm:$0xff]
        %v1137 = vld [vmem:[%s342 + $0xf60] sm:$0xff]
        %v1138 = vld [vmem:[%s342 + $0xf68] sm:$0xff]
        %v1139 = vld [vmem:[%s342 + $0xf70] sm:$0xff]
        %v1140 = vld [vmem:[%s342 + $0xf78] sm:$0xff]
        %v1141 = vld [vmem:[%s342 + $0xf80] sm:$0xff]
        %v1142 = vld [vmem:[%s342 + $0xf88] sm:$0xff]
        %v1143 = vld [vmem:[%s342 + $0xf90] sm:$0xff]
        %v1144 = vld [vmem:[%s342 + $0xf98] sm:$0xff]
        %v1145 = vld [vmem:[%s342 + $0xfa0] sm:$0xff]
        %v1146 = vld [vmem:[%s342 + $0xfa8] sm:$0xff]
        %v1147 = vld [vmem:[%s342 + $0xfb0] sm:$0xff]
        %v1148 = vld [vmem:[%s342 + $0xfb8] sm:$0xff]
        %v1149 = vld [vmem:[%s342 + $0xfc0] sm:$0xff]
        %v1150 = vld [vmem:[%s342 + $0xfc8] sm:$0xff]
        %v1151 = vld [vmem:[%s342 + $0xfd0] sm:$0xff]
        %v1152 = vld [vmem:[%s342 + $0xfd8] sm:$0xff]
        %v1153 = vld [vmem:[%s342 + $0xfe0] sm:$0xff]
        %v1154 = vld [vmem:[%s342 + $0xfe8] sm:$0xff]
        %v1155 = vld [vmem:[%s342 + $0xff0] sm:$0xff]
        %v1156 = vld [vmem:[%s342 + $0xff8] sm:$0xff]
        %v1157 = vld [vmem:[%s352] sm:$0xf]
        %v1159 = vperm.slane %v1157, 0
        %v1160 = vperm.slane %v1157, 1
        %v1161 = vperm.slane %v1157, 2
        %v1162 = vperm.slane %v1157, 3
        %v1175 = vunpack.c.l.b16 %v637
        %v1176 = vunpack.c.h.b16 %v637
        %v1177 = vunpack.c.l.b16 %v638
        %v1178 = vunpack.c.h.b16 %v638
        %v1179 = vunpack.c.l.b16 %v639
        %v1180 = vunpack.c.h.b16 %v639
        %v1181 = vunpack.c.l.b16 %v640
        %v1182 = vunpack.c.h.b16 %v640
        %v1183 = vunpack.c.l.b16 %v641
        %v1184 = vunpack.c.h.b16 %v641
        %v1185 = vunpack.c.l.b16 %v642
        %v1186 = vunpack.c.h.b16 %v642
        %v1187 = vunpack.c.l.b16 %v643
        %v1188 = vunpack.c.h.b16 %v643
        %v1189 = vunpack.c.l.b16 %v644
        %v1190 = vunpack.c.h.b16 %v644
        %v1191 = vpack.c.b16 %v1175, %v1175
        %v1192 = vpack.c.b16 %v1176, %v1176
        %v1193 = vpack.c.b16 %v1177, %v1177
        %v1194 = vpack.c.b16 %v1178, %v1178
        %v1195 = vpack.c.b16 %v1179, %v1179
        %v1196 = vpack.c.b16 %v1180, %v1180
        %v1197 = vpack.c.b16 %v1181, %v1181
        %v1198 = vpack.c.b16 %v1182, %v1182
        %v1199 = vpack.c.b16 %v1183, %v1183
        %v1200 = vpack.c.b16 %v1184, %v1184
        %v1201 = vpack.c.b16 %v1185, %v1185
        %v1202 = vpack.c.b16 %v1186, %v1186
        %v1203 = vpack.c.b16 %v1187, %v1187
        %v1204 = vpack.c.b16 %v1188, %v1188
        %v1205 = vpack.c.b16 %v1189, %v1189
        %v1206 = vpack.c.b16 %v1190, %v1190
        %v1735 = vunpack.c.l.b16 %v645
        %v1736 = vunpack.c.h.b16 %v645
        %v1737 = vunpack.c.l.b16 %v646
        %v1738 = vunpack.c.h.b16 %v646
        %v1739 = vunpack.c.l.b16 %v647
        %v1740 = vunpack.c.h.b16 %v647
        %v1741 = vunpack.c.l.b16 %v648
        %v1742 = vunpack.c.h.b16 %v648
        %v1743 = vunpack.c.l.b16 %v649
        %v1744 = vunpack.c.h.b16 %v649
        %v1745 = vunpack.c.l.b16 %v650
        %v1746 = vunpack.c.h.b16 %v650
        %v1747 = vunpack.c.l.b16 %v651
        %v1748 = vunpack.c.h.b16 %v651
        %v1749 = vunpack.c.l.b16 %v652
        %v1750 = vunpack.c.h.b16 %v652
        %v1751 = vunpack.c.l.b16 %v653
        %v1752 = vunpack.c.h.b16 %v653
        %v1753 = vunpack.c.l.b16 %v654
        %v1754 = vunpack.c.h.b16 %v654
        %v1755 = vunpack.c.l.b16 %v655
        %v1756 = vunpack.c.h.b16 %v655
        %v1757 = vunpack.c.l.b16 %v656
        %v1758 = vunpack.c.h.b16 %v656
        %v1759 = vunpack.c.l.b16 %v657
        %v1760 = vunpack.c.h.b16 %v657
        %v1761 = vunpack.c.l.b16 %v658
        %v1762 = vunpack.c.h.b16 %v658
        %v1763 = vunpack.c.l.b16 %v659
        %v1764 = vunpack.c.h.b16 %v659
        %v1765 = vunpack.c.l.b16 %v660
        %v1766 = vunpack.c.h.b16 %v660
        %v1767 = vunpack.c.l.b16 %v661
        %v1768 = vunpack.c.h.b16 %v661
        %v1769 = vunpack.c.l.b16 %v662
        %v1770 = vunpack.c.h.b16 %v662
        %v1771 = vunpack.c.l.b16 %v663
        %v1772 = vunpack.c.h.b16 %v663
        %v1773 = vunpack.c.l.b16 %v664
        %v1774 = vunpack.c.h.b16 %v664
        %v1775 = vunpack.c.l.b16 %v665
        %v1776 = vunpack.c.h.b16 %v665
        %v1777 = vunpack.c.l.b16 %v666
        %v1778 = vunpack.c.h.b16 %v666
        %v1779 = vunpack.c.l.b16 %v667
        %v1780 = vunpack.c.h.b16 %v667
        %v1781 = vunpack.c.l.b16 %v668
        %v1782 = vunpack.c.h.b16 %v668
        %v1783 = vunpack.c.l.b16 %v669
        %v1784 = vunpack.c.h.b16 %v669
        %v1785 = vunpack.c.l.b16 %v670
        %v1786 = vunpack.c.h.b16 %v670
        %v1787 = vunpack.c.l.b16 %v671
        %v1788 = vunpack.c.h.b16 %v671
        %v1789 = vunpack.c.l.b16 %v672
        %v1790 = vunpack.c.h.b16 %v672
        %v1791 = vunpack.c.l.b16 %v673
        %v1792 = vunpack.c.h.b16 %v673
        %v1793 = vunpack.c.l.b16 %v674
        %v1794 = vunpack.c.h.b16 %v674
        %v1795 = vunpack.c.l.b16 %v675
        %v1796 = vunpack.c.h.b16 %v675
        %v1797 = vunpack.c.l.b16 %v676
        %v1798 = vunpack.c.h.b16 %v676
        %v1799 = vunpack.c.l.b16 %v677
        %v1800 = vunpack.c.h.b16 %v677
        %v1801 = vunpack.c.l.b16 %v678
        %v1802 = vunpack.c.h.b16 %v678
        %v1803 = vunpack.c.l.b16 %v679
        %v1804 = vunpack.c.h.b16 %v679
        %v1805 = vunpack.c.l.b16 %v680
        %v1806 = vunpack.c.h.b16 %v680
        %v1807 = vunpack.c.l.b16 %v681
        %v1808 = vunpack.c.h.b16 %v681
        %v1809 = vunpack.c.l.b16 %v682
        %v1810 = vunpack.c.h.b16 %v682
        %v1811 = vunpack.c.l.b16 %v683
        %v1812 = vunpack.c.h.b16 %v683
        %v1813 = vunpack.c.l.b16 %v684
        %v1814 = vunpack.c.h.b16 %v684
        %v1815 = vunpack.c.l.b16 %v685
        %v1816 = vunpack.c.h.b16 %v685
        %v1817 = vunpack.c.l.b16 %v686
        %v1818 = vunpack.c.h.b16 %v686
        %v1819 = vunpack.c.l.b16 %v687
        %v1820 = vunpack.c.h.b16 %v687
        %v1821 = vunpack.c.l.b16 %v688
        %v1822 = vunpack.c.h.b16 %v688
        %v1823 = vunpack.c.l.b16 %v689
        %v1824 = vunpack.c.h.b16 %v689
        %v1825 = vunpack.c.l.b16 %v690
        %v1826 = vunpack.c.h.b16 %v690
        %v1827 = vunpack.c.l.b16 %v691
        %v1828 = vunpack.c.h.b16 %v691
        %v1829 = vunpack.c.l.b16 %v692
        %v1830 = vunpack.c.h.b16 %v692
        %v1831 = vunpack.c.l.b16 %v693
        %v1832 = vunpack.c.h.b16 %v693
        %v1833 = vunpack.c.l.b16 %v694
        %v1834 = vunpack.c.h.b16 %v694
        %v1835 = vunpack.c.l.b16 %v695
        %v1836 = vunpack.c.h.b16 %v695
        %v1837 = vunpack.c.l.b16 %v696
        %v1838 = vunpack.c.h.b16 %v696
        %v1839 = vunpack.c.l.b16 %v697
        %v1840 = vunpack.c.h.b16 %v697
        %v1841 = vunpack.c.l.b16 %v698
        %v1842 = vunpack.c.h.b16 %v698
        %v1843 = vunpack.c.l.b16 %v699
        %v1844 = vunpack.c.h.b16 %v699
        %v1845 = vunpack.c.l.b16 %v700
        %v1846 = vunpack.c.h.b16 %v700
        %v1847 = vunpack.c.l.b16 %v701
        %v1848 = vunpack.c.h.b16 %v701
        %v1849 = vunpack.c.l.b16 %v702
        %v1850 = vunpack.c.h.b16 %v702
        %v1851 = vunpack.c.l.b16 %v703
        %v1852 = vunpack.c.h.b16 %v703
        %v1853 = vunpack.c.l.b16 %v704
        %v1854 = vunpack.c.h.b16 %v704
        %v1855 = vunpack.c.l.b16 %v705
        %v1856 = vunpack.c.h.b16 %v705
        %v1857 = vunpack.c.l.b16 %v706
        %v1858 = vunpack.c.h.b16 %v706
        %v1859 = vunpack.c.l.b16 %v707
        %v1860 = vunpack.c.h.b16 %v707
        %v1861 = vunpack.c.l.b16 %v708
        %v1862 = vunpack.c.h.b16 %v708
        %v1863 = vunpack.c.l.b16 %v709
        %v1864 = vunpack.c.h.b16 %v709
        %v1865 = vunpack.c.l.b16 %v710
        %v1866 = vunpack.c.h.b16 %v710
        %v1867 = vunpack.c.l.b16 %v711
        %v1868 = vunpack.c.h.b16 %v711
        %v1869 = vunpack.c.l.b16 %v712
        %v1870 = vunpack.c.h.b16 %v712
        %v1871 = vunpack.c.l.b16 %v713
        %v1872 = vunpack.c.h.b16 %v713
        %v1873 = vunpack.c.l.b16 %v714
        %v1874 = vunpack.c.h.b16 %v714
        %v1875 = vunpack.c.l.b16 %v715
        %v1876 = vunpack.c.h.b16 %v715
        %v1877 = vunpack.c.l.b16 %v716
        %v1878 = vunpack.c.h.b16 %v716
        %v1879 = vunpack.c.l.b16 %v717
        %v1880 = vunpack.c.h.b16 %v717
        %v1881 = vunpack.c.l.b16 %v718
        %v1882 = vunpack.c.h.b16 %v718
        %v1883 = vunpack.c.l.b16 %v719
        %v1884 = vunpack.c.h.b16 %v719
        %v1885 = vunpack.c.l.b16 %v720
        %v1886 = vunpack.c.h.b16 %v720
        %v1887 = vunpack.c.l.b16 %v721
        %v1888 = vunpack.c.h.b16 %v721
        %v1889 = vunpack.c.l.b16 %v722
        %v1890 = vunpack.c.h.b16 %v722
        %v1891 = vunpack.c.l.b16 %v723
        %v1892 = vunpack.c.h.b16 %v723
        %v1893 = vunpack.c.l.b16 %v724
        %v1894 = vunpack.c.h.b16 %v724
        %v1895 = vunpack.c.l.b16 %v725
        %v1896 = vunpack.c.h.b16 %v725
        %v1897 = vunpack.c.l.b16 %v726
        %v1898 = vunpack.c.h.b16 %v726
        %v1899 = vunpack.c.l.b16 %v727
        %v1900 = vunpack.c.h.b16 %v727
        %v1901 = vunpack.c.l.b16 %v728
        %v1902 = vunpack.c.h.b16 %v728
        %v1903 = vunpack.c.l.b16 %v729
        %v1904 = vunpack.c.h.b16 %v729
        %v1905 = vunpack.c.l.b16 %v730
        %v1906 = vunpack.c.h.b16 %v730
        %v1907 = vunpack.c.l.b16 %v731
        %v1908 = vunpack.c.h.b16 %v731
        %v1909 = vunpack.c.l.b16 %v732
        %v1910 = vunpack.c.h.b16 %v732
        %v1911 = vunpack.c.l.b16 %v733
        %v1912 = vunpack.c.h.b16 %v733
        %v1913 = vunpack.c.l.b16 %v734
        %v1914 = vunpack.c.h.b16 %v734
        %v1915 = vunpack.c.l.b16 %v735
        %v1916 = vunpack.c.h.b16 %v735
        %v1917 = vunpack.c.l.b16 %v736
        %v1918 = vunpack.c.h.b16 %v736
        %v1919 = vunpack.c.l.b16 %v737
        %v1920 = vunpack.c.h.b16 %v737
        %v1921 = vunpack.c.l.b16 %v738
        %v1922 = vunpack.c.h.b16 %v738
        %v1923 = vunpack.c.l.b16 %v739
        %v1924 = vunpack.c.h.b16 %v739
        %v1925 = vunpack.c.l.b16 %v740
        %v1926 = vunpack.c.h.b16 %v740
        %v1927 = vunpack.c.l.b16 %v741
        %v1928 = vunpack.c.h.b16 %v741
        %v1929 = vunpack.c.l.b16 %v742
        %v1930 = vunpack.c.h.b16 %v742
        %v1931 = vunpack.c.l.b16 %v743
        %v1932 = vunpack.c.h.b16 %v743
        %v1933 = vunpack.c.l.b16 %v744
        %v1934 = vunpack.c.h.b16 %v744
        %v1935 = vunpack.c.l.b16 %v745
        %v1936 = vunpack.c.h.b16 %v745
        %v1937 = vunpack.c.l.b16 %v746
        %v1938 = vunpack.c.h.b16 %v746
        %v1939 = vunpack.c.l.b16 %v747
        %v1940 = vunpack.c.h.b16 %v747
        %v1941 = vunpack.c.l.b16 %v748
        %v1942 = vunpack.c.h.b16 %v748
        %v1943 = vunpack.c.l.b16 %v749
        %v1944 = vunpack.c.h.b16 %v749
        %v1945 = vunpack.c.l.b16 %v750
        %v1946 = vunpack.c.h.b16 %v750
        %v1947 = vunpack.c.l.b16 %v751
        %v1948 = vunpack.c.h.b16 %v751
        %v1949 = vunpack.c.l.b16 %v752
        %v1950 = vunpack.c.h.b16 %v752
        %v1951 = vunpack.c.l.b16 %v753
        %v1952 = vunpack.c.h.b16 %v753
        %v1953 = vunpack.c.l.b16 %v754
        %v1954 = vunpack.c.h.b16 %v754
        %v1955 = vunpack.c.l.b16 %v755
        %v1956 = vunpack.c.h.b16 %v755
        %v1957 = vunpack.c.l.b16 %v756
        %v1958 = vunpack.c.h.b16 %v756
        %v1959 = vunpack.c.l.b16 %v757
        %v1960 = vunpack.c.h.b16 %v757
        %v1961 = vunpack.c.l.b16 %v758
        %v1962 = vunpack.c.h.b16 %v758
        %v1963 = vunpack.c.l.b16 %v759
        %v1964 = vunpack.c.h.b16 %v759
        %v1965 = vunpack.c.l.b16 %v760
        %v1966 = vunpack.c.h.b16 %v760
        %v1967 = vunpack.c.l.b16 %v761
        %v1968 = vunpack.c.h.b16 %v761
        %v1969 = vunpack.c.l.b16 %v762
        %v1970 = vunpack.c.h.b16 %v762
        %v1971 = vunpack.c.l.b16 %v763
        %v1972 = vunpack.c.h.b16 %v763
        %v1973 = vunpack.c.l.b16 %v764
        %v1974 = vunpack.c.h.b16 %v764
        %v1975 = vunpack.c.l.b16 %v765
        %v1976 = vunpack.c.h.b16 %v765
        %v1977 = vunpack.c.l.b16 %v766
        %v1978 = vunpack.c.h.b16 %v766
        %v1979 = vunpack.c.l.b16 %v767
        %v1980 = vunpack.c.h.b16 %v767
        %v1981 = vunpack.c.l.b16 %v768
        %v1982 = vunpack.c.h.b16 %v768
        %v1983 = vunpack.c.l.b16 %v769
        %v1984 = vunpack.c.h.b16 %v769
        %v1985 = vunpack.c.l.b16 %v770
        %v1986 = vunpack.c.h.b16 %v770
        %v1987 = vunpack.c.l.b16 %v771
        %v1988 = vunpack.c.h.b16 %v771
        %v1989 = vunpack.c.l.b16 %v772
        %v1990 = vunpack.c.h.b16 %v772
        %v1991 = vunpack.c.l.b16 %v773
        %v1992 = vunpack.c.h.b16 %v773
        %v1993 = vunpack.c.l.b16 %v774
        %v1994 = vunpack.c.h.b16 %v774
        %v1995 = vunpack.c.l.b16 %v775
        %v1996 = vunpack.c.h.b16 %v775
        %v1997 = vunpack.c.l.b16 %v776
        %v1998 = vunpack.c.h.b16 %v776
        %v1999 = vunpack.c.l.b16 %v777
        %v2000 = vunpack.c.h.b16 %v777
        %v2001 = vunpack.c.l.b16 %v778
        %v2002 = vunpack.c.h.b16 %v778
        %v2003 = vunpack.c.l.b16 %v779
        %v2004 = vunpack.c.h.b16 %v779
        %v2005 = vunpack.c.l.b16 %v780
        %v2006 = vunpack.c.h.b16 %v780
        %v2007 = vunpack.c.l.b16 %v781
        %v2008 = vunpack.c.h.b16 %v781
        %v2009 = vunpack.c.l.b16 %v782
        %v2010 = vunpack.c.h.b16 %v782
        %v2011 = vunpack.c.l.b16 %v783
        %v2012 = vunpack.c.h.b16 %v783
        %v2013 = vunpack.c.l.b16 %v784
        %v2014 = vunpack.c.h.b16 %v784
        %v2015 = vunpack.c.l.b16 %v785
        %v2016 = vunpack.c.h.b16 %v785
        %v2017 = vunpack.c.l.b16 %v786
        %v2018 = vunpack.c.h.b16 %v786
        %v2019 = vunpack.c.l.b16 %v787
        %v2020 = vunpack.c.h.b16 %v787
        %v2021 = vunpack.c.l.b16 %v788
        %v2022 = vunpack.c.h.b16 %v788
        %v2023 = vunpack.c.l.b16 %v789
        %v2024 = vunpack.c.h.b16 %v789
        %v2025 = vunpack.c.l.b16 %v790
        %v2026 = vunpack.c.h.b16 %v790
        %v2027 = vunpack.c.l.b16 %v791
        %v2028 = vunpack.c.h.b16 %v791
        %v2029 = vunpack.c.l.b16 %v792
        %v2030 = vunpack.c.h.b16 %v792
        %v2031 = vunpack.c.l.b16 %v793
        %v2032 = vunpack.c.h.b16 %v793
        %v2033 = vunpack.c.l.b16 %v794
        %v2034 = vunpack.c.h.b16 %v794
        %v2035 = vunpack.c.l.b16 %v795
        %v2036 = vunpack.c.h.b16 %v795
        %v2037 = vunpack.c.l.b16 %v796
        %v2038 = vunpack.c.h.b16 %v796
        %v2039 = vunpack.c.l.b16 %v797
        %v2040 = vunpack.c.h.b16 %v797
        %v2041 = vunpack.c.l.b16 %v798
        %v2042 = vunpack.c.h.b16 %v798
        %v2043 = vunpack.c.l.b16 %v799
        %v2044 = vunpack.c.h.b16 %v799
        %v2045 = vunpack.c.l.b16 %v800
        %v2046 = vunpack.c.h.b16 %v800
        %v2047 = vunpack.c.l.b16 %v801
        %v2048 = vunpack.c.h.b16 %v801
        %v2049 = vunpack.c.l.b16 %v802
        %v2050 = vunpack.c.h.b16 %v802
        %v2051 = vunpack.c.l.b16 %v803
        %v2052 = vunpack.c.h.b16 %v803
        %v2053 = vunpack.c.l.b16 %v804
        %v2054 = vunpack.c.h.b16 %v804
        %v2055 = vunpack.c.l.b16 %v805
        %v2056 = vunpack.c.h.b16 %v805
        %v2057 = vunpack.c.l.b16 %v806
        %v2058 = vunpack.c.h.b16 %v806
        %v2059 = vunpack.c.l.b16 %v807
        %v2060 = vunpack.c.h.b16 %v807
        %v2061 = vunpack.c.l.b16 %v808
        %v2062 = vunpack.c.h.b16 %v808
        %v2063 = vunpack.c.l.b16 %v809
        %v2064 = vunpack.c.h.b16 %v809
        %v2065 = vunpack.c.l.b16 %v810
        %v2066 = vunpack.c.h.b16 %v810
        %v2067 = vunpack.c.l.b16 %v811
        %v2068 = vunpack.c.h.b16 %v811
        %v2069 = vunpack.c.l.b16 %v812
        %v2070 = vunpack.c.h.b16 %v812
        %v2071 = vunpack.c.l.b16 %v813
        %v2072 = vunpack.c.h.b16 %v813
        %v2073 = vunpack.c.l.b16 %v814
        %v2074 = vunpack.c.h.b16 %v814
        %v2075 = vunpack.c.l.b16 %v815
        %v2076 = vunpack.c.h.b16 %v815
        %v2077 = vunpack.c.l.b16 %v816
        %v2078 = vunpack.c.h.b16 %v816
        %v2079 = vunpack.c.l.b16 %v817
        %v2080 = vunpack.c.h.b16 %v817
        %v2081 = vunpack.c.l.b16 %v818
        %v2082 = vunpack.c.h.b16 %v818
        %v2083 = vunpack.c.l.b16 %v819
        %v2084 = vunpack.c.h.b16 %v819
        %v2085 = vunpack.c.l.b16 %v820
        %v2086 = vunpack.c.h.b16 %v820
        %v2087 = vunpack.c.l.b16 %v821
        %v2088 = vunpack.c.h.b16 %v821
        %v2089 = vunpack.c.l.b16 %v822
        %v2090 = vunpack.c.h.b16 %v822
        %v2091 = vunpack.c.l.b16 %v823
        %v2092 = vunpack.c.h.b16 %v823
        %v2093 = vunpack.c.l.b16 %v824
        %v2094 = vunpack.c.h.b16 %v824
        %v2095 = vunpack.c.l.b16 %v825
        %v2096 = vunpack.c.h.b16 %v825
        %v2097 = vunpack.c.l.b16 %v826
        %v2098 = vunpack.c.h.b16 %v826
        %v2099 = vunpack.c.l.b16 %v827
        %v2100 = vunpack.c.h.b16 %v827
        %v2101 = vunpack.c.l.b16 %v828
        %v2102 = vunpack.c.h.b16 %v828
        %v2103 = vunpack.c.l.b16 %v829
        %v2104 = vunpack.c.h.b16 %v829
        %v2105 = vunpack.c.l.b16 %v830
        %v2106 = vunpack.c.h.b16 %v830
        %v2107 = vunpack.c.l.b16 %v831
        %v2108 = vunpack.c.h.b16 %v831
        %v2109 = vunpack.c.l.b16 %v832
        %v2110 = vunpack.c.h.b16 %v832
        %v2111 = vunpack.c.l.b16 %v833
        %v2112 = vunpack.c.h.b16 %v833
        %v2113 = vunpack.c.l.b16 %v834
        %v2114 = vunpack.c.h.b16 %v834
        %v2115 = vunpack.c.l.b16 %v835
        %v2116 = vunpack.c.h.b16 %v835
        %v2117 = vunpack.c.l.b16 %v836
        %v2118 = vunpack.c.h.b16 %v836
        %v2119 = vunpack.c.l.b16 %v837
        %v2120 = vunpack.c.h.b16 %v837
        %v2121 = vunpack.c.l.b16 %v838
        %v2122 = vunpack.c.h.b16 %v838
        %v2123 = vunpack.c.l.b16 %v839
        %v2124 = vunpack.c.h.b16 %v839
        %v2125 = vunpack.c.l.b16 %v840
        %v2126 = vunpack.c.h.b16 %v840
        %v2127 = vunpack.c.l.b16 %v841
        %v2128 = vunpack.c.h.b16 %v841
        %v2129 = vunpack.c.l.b16 %v842
        %v2130 = vunpack.c.h.b16 %v842
        %v2131 = vunpack.c.l.b16 %v843
        %v2132 = vunpack.c.h.b16 %v843
        %v2133 = vunpack.c.l.b16 %v844
        %v2134 = vunpack.c.h.b16 %v844
        %v2135 = vunpack.c.l.b16 %v845
        %v2136 = vunpack.c.h.b16 %v845
        %v2137 = vunpack.c.l.b16 %v846
        %v2138 = vunpack.c.h.b16 %v846
        %v2139 = vunpack.c.l.b16 %v847
        %v2140 = vunpack.c.h.b16 %v847
        %v2141 = vunpack.c.l.b16 %v848
        %v2142 = vunpack.c.h.b16 %v848
        %v2143 = vunpack.c.l.b16 %v849
        %v2144 = vunpack.c.h.b16 %v849
        %v2145 = vunpack.c.l.b16 %v850
        %v2146 = vunpack.c.h.b16 %v850
        %v2147 = vunpack.c.l.b16 %v851
        %v2148 = vunpack.c.h.b16 %v851
        %v2149 = vunpack.c.l.b16 %v852
        %v2150 = vunpack.c.h.b16 %v852
        %v2151 = vunpack.c.l.b16 %v853
        %v2152 = vunpack.c.h.b16 %v853
        %v2153 = vunpack.c.l.b16 %v854
        %v2154 = vunpack.c.h.b16 %v854
        %v2155 = vunpack.c.l.b16 %v855
        %v2156 = vunpack.c.h.b16 %v855
        %v2157 = vunpack.c.l.b16 %v856
        %v2158 = vunpack.c.h.b16 %v856
        %v2159 = vunpack.c.l.b16 %v857
        %v2160 = vunpack.c.h.b16 %v857
        %v2161 = vunpack.c.l.b16 %v858
        %v2162 = vunpack.c.h.b16 %v858
        %v2163 = vunpack.c.l.b16 %v859
        %v2164 = vunpack.c.h.b16 %v859
        %v2165 = vunpack.c.l.b16 %v860
        %v2166 = vunpack.c.h.b16 %v860
        %v2167 = vunpack.c.l.b16 %v861
        %v2168 = vunpack.c.h.b16 %v861
        %v2169 = vunpack.c.l.b16 %v862
        %v2170 = vunpack.c.h.b16 %v862
        %v2171 = vunpack.c.l.b16 %v863
        %v2172 = vunpack.c.h.b16 %v863
        %v2173 = vunpack.c.l.b16 %v864
        %v2174 = vunpack.c.h.b16 %v864
        %v2175 = vunpack.c.l.b16 %v865
        %v2176 = vunpack.c.h.b16 %v865
        %v2177 = vunpack.c.l.b16 %v866
        %v2178 = vunpack.c.h.b16 %v866
        %v2179 = vunpack.c.l.b16 %v867
        %v2180 = vunpack.c.h.b16 %v867
        %v2181 = vunpack.c.l.b16 %v868
        %v2182 = vunpack.c.h.b16 %v868
        %v2183 = vunpack.c.l.b16 %v869
        %v2184 = vunpack.c.h.b16 %v869
        %v2185 = vunpack.c.l.b16 %v870
        %v2186 = vunpack.c.h.b16 %v870
        %v2187 = vunpack.c.l.b16 %v871
        %v2188 = vunpack.c.h.b16 %v871
        %v2189 = vunpack.c.l.b16 %v872
        %v2190 = vunpack.c.h.b16 %v872
        %v2191 = vunpack.c.l.b16 %v873
        %v2192 = vunpack.c.h.b16 %v873
        %v2193 = vunpack.c.l.b16 %v874
        %v2194 = vunpack.c.h.b16 %v874
        %v2195 = vunpack.c.l.b16 %v875
        %v2196 = vunpack.c.h.b16 %v875
        %v2197 = vunpack.c.l.b16 %v876
        %v2198 = vunpack.c.h.b16 %v876
        %v2199 = vunpack.c.l.b16 %v877
        %v2200 = vunpack.c.h.b16 %v877
        %v2201 = vunpack.c.l.b16 %v878
        %v2202 = vunpack.c.h.b16 %v878
        %v2203 = vunpack.c.l.b16 %v879
        %v2204 = vunpack.c.h.b16 %v879
        %v2205 = vunpack.c.l.b16 %v880
        %v2206 = vunpack.c.h.b16 %v880
        %v2207 = vunpack.c.l.b16 %v881
        %v2208 = vunpack.c.h.b16 %v881
        %v2209 = vunpack.c.l.b16 %v882
        %v2210 = vunpack.c.h.b16 %v882
        %v2211 = vunpack.c.l.b16 %v883
        %v2212 = vunpack.c.h.b16 %v883
        %v2213 = vunpack.c.l.b16 %v884
        %v2214 = vunpack.c.h.b16 %v884
        %v2215 = vunpack.c.l.b16 %v885
        %v2216 = vunpack.c.h.b16 %v885
        %v2217 = vunpack.c.l.b16 %v886
        %v2218 = vunpack.c.h.b16 %v886
        %v2219 = vunpack.c.l.b16 %v887
        %v2220 = vunpack.c.h.b16 %v887
        %v2221 = vunpack.c.l.b16 %v888
        %v2222 = vunpack.c.h.b16 %v888
        %v2223 = vunpack.c.l.b16 %v889
        %v2224 = vunpack.c.h.b16 %v889
        %v2225 = vunpack.c.l.b16 %v890
        %v2226 = vunpack.c.h.b16 %v890
        %v2227 = vunpack.c.l.b16 %v891
        %v2228 = vunpack.c.h.b16 %v891
        %v2229 = vunpack.c.l.b16 %v892
        %v2230 = vunpack.c.h.b16 %v892
        %v2231 = vunpack.c.l.b16 %v893
        %v2232 = vunpack.c.h.b16 %v893
        %v2233 = vunpack.c.l.b16 %v894
        %v2234 = vunpack.c.h.b16 %v894
        %v2235 = vunpack.c.l.b16 %v895
        %v2236 = vunpack.c.h.b16 %v895
        %v2237 = vunpack.c.l.b16 %v896
        %v2238 = vunpack.c.h.b16 %v896
        %v2239 = vunpack.c.l.b16 %v897
        %v2240 = vunpack.c.h.b16 %v897
        %v2241 = vunpack.c.l.b16 %v898
        %v2242 = vunpack.c.h.b16 %v898
        %v2243 = vunpack.c.l.b16 %v899
        %v2244 = vunpack.c.h.b16 %v899
        %v2245 = vunpack.c.l.b16 %v900
        %v2246 = vunpack.c.h.b16 %v900
        %v2247 = vunpack.c.l.b16 %v901
        %v2248 = vunpack.c.h.b16 %v901
        %v2249 = vunpack.c.l.b16 %v902
        %v2250 = vunpack.c.h.b16 %v902
        %v2251 = vunpack.c.l.b16 %v903
        %v2252 = vunpack.c.h.b16 %v903
        %v2253 = vunpack.c.l.b16 %v904
        %v2254 = vunpack.c.h.b16 %v904
        %v2255 = vunpack.c.l.b16 %v905
        %v2256 = vunpack.c.h.b16 %v905
        %v2257 = vunpack.c.l.b16 %v906
        %v2258 = vunpack.c.h.b16 %v906
        %v2259 = vunpack.c.l.b16 %v907
        %v2260 = vunpack.c.h.b16 %v907
        %v2261 = vunpack.c.l.b16 %v908
        %v2262 = vunpack.c.h.b16 %v908
        %v2263 = vunpack.c.l.b16 %v909
        %v2264 = vunpack.c.h.b16 %v909
        %v2265 = vunpack.c.l.b16 %v910
        %v2266 = vunpack.c.h.b16 %v910
        %v2267 = vunpack.c.l.b16 %v911
        %v2268 = vunpack.c.h.b16 %v911
        %v2269 = vunpack.c.l.b16 %v912
        %v2270 = vunpack.c.h.b16 %v912
        %v2271 = vunpack.c.l.b16 %v913
        %v2272 = vunpack.c.h.b16 %v913
        %v2273 = vunpack.c.l.b16 %v914
        %v2274 = vunpack.c.h.b16 %v914
        %v2275 = vunpack.c.l.b16 %v915
        %v2276 = vunpack.c.h.b16 %v915
        %v2277 = vunpack.c.l.b16 %v916
        %v2278 = vunpack.c.h.b16 %v916
        %v2279 = vunpack.c.l.b16 %v917
        %v2280 = vunpack.c.h.b16 %v917
        %v2281 = vunpack.c.l.b16 %v918
        %v2282 = vunpack.c.h.b16 %v918
        %v2283 = vunpack.c.l.b16 %v919
        %v2284 = vunpack.c.h.b16 %v919
        %v2285 = vunpack.c.l.b16 %v920
        %v2286 = vunpack.c.h.b16 %v920
        %v2287 = vunpack.c.l.b16 %v921
        %v2288 = vunpack.c.h.b16 %v921
        %v2289 = vunpack.c.l.b16 %v922
        %v2290 = vunpack.c.h.b16 %v922
        %v2291 = vunpack.c.l.b16 %v923
        %v2292 = vunpack.c.h.b16 %v923
        %v2293 = vunpack.c.l.b16 %v924
        %v2294 = vunpack.c.h.b16 %v924
        %v2295 = vunpack.c.l.b16 %v925
        %v2296 = vunpack.c.h.b16 %v925
        %v2297 = vunpack.c.l.b16 %v926
        %v2298 = vunpack.c.h.b16 %v926
        %v2299 = vunpack.c.l.b16 %v927
        %v2300 = vunpack.c.h.b16 %v927
        %v2301 = vunpack.c.l.b16 %v928
        %v2302 = vunpack.c.h.b16 %v928
        %v2303 = vunpack.c.l.b16 %v929
        %v2304 = vunpack.c.h.b16 %v929
        %v2305 = vunpack.c.l.b16 %v930
        %v2306 = vunpack.c.h.b16 %v930
        %v2307 = vunpack.c.l.b16 %v931
        %v2308 = vunpack.c.h.b16 %v931
        %v2309 = vunpack.c.l.b16 %v932
        %v2310 = vunpack.c.h.b16 %v932
        %v2311 = vunpack.c.l.b16 %v933
        %v2312 = vunpack.c.h.b16 %v933
        %v2313 = vunpack.c.l.b16 %v934
        %v2314 = vunpack.c.h.b16 %v934
        %v2315 = vunpack.c.l.b16 %v935
        %v2316 = vunpack.c.h.b16 %v935
        %v2317 = vunpack.c.l.b16 %v936
        %v2318 = vunpack.c.h.b16 %v936
        %v2319 = vunpack.c.l.b16 %v937
        %v2320 = vunpack.c.h.b16 %v937
        %v2321 = vunpack.c.l.b16 %v938
        %v2322 = vunpack.c.h.b16 %v938
        %v2323 = vunpack.c.l.b16 %v939
        %v2324 = vunpack.c.h.b16 %v939
        %v2325 = vunpack.c.l.b16 %v940
        %v2326 = vunpack.c.h.b16 %v940
        %v2327 = vunpack.c.l.b16 %v941
        %v2328 = vunpack.c.h.b16 %v941
        %v2329 = vunpack.c.l.b16 %v942
        %v2330 = vunpack.c.h.b16 %v942
        %v2331 = vunpack.c.l.b16 %v943
        %v2332 = vunpack.c.h.b16 %v943
        %v2333 = vunpack.c.l.b16 %v944
        %v2334 = vunpack.c.h.b16 %v944
        %v2335 = vunpack.c.l.b16 %v945
        %v2336 = vunpack.c.h.b16 %v945
        %v2337 = vunpack.c.l.b16 %v946
        %v2338 = vunpack.c.h.b16 %v946
        %v2339 = vunpack.c.l.b16 %v947
        %v2340 = vunpack.c.h.b16 %v947
        %v2341 = vunpack.c.l.b16 %v948
        %v2342 = vunpack.c.h.b16 %v948
        %v2343 = vunpack.c.l.b16 %v949
        %v2344 = vunpack.c.h.b16 %v949
        %v2345 = vunpack.c.l.b16 %v950
        %v2346 = vunpack.c.h.b16 %v950
        %v2347 = vunpack.c.l.b16 %v951
        %v2348 = vunpack.c.h.b16 %v951
        %v2349 = vunpack.c.l.b16 %v952
        %v2350 = vunpack.c.h.b16 %v952
        %v2351 = vunpack.c.l.b16 %v953
        %v2352 = vunpack.c.h.b16 %v953
        %v2353 = vunpack.c.l.b16 %v954
        %v2354 = vunpack.c.h.b16 %v954
        %v2355 = vunpack.c.l.b16 %v955
        %v2356 = vunpack.c.h.b16 %v955
        %v2357 = vunpack.c.l.b16 %v956
        %v2358 = vunpack.c.h.b16 %v956
        %v2359 = vunpack.c.l.b16 %v957
        %v2360 = vunpack.c.h.b16 %v957
        %v2361 = vunpack.c.l.b16 %v958
        %v2362 = vunpack.c.h.b16 %v958
        %v2363 = vunpack.c.l.b16 %v959
        %v2364 = vunpack.c.h.b16 %v959
        %v2365 = vunpack.c.l.b16 %v960
        %v2366 = vunpack.c.h.b16 %v960
        %v2367 = vunpack.c.l.b16 %v961
        %v2368 = vunpack.c.h.b16 %v961
        %v2369 = vunpack.c.l.b16 %v962
        %v2370 = vunpack.c.h.b16 %v962
        %v2371 = vunpack.c.l.b16 %v963
        %v2372 = vunpack.c.h.b16 %v963
        %v2373 = vunpack.c.l.b16 %v964
        %v2374 = vunpack.c.h.b16 %v964
        %v2375 = vunpack.c.l.b16 %v965
        %v2376 = vunpack.c.h.b16 %v965
        %v2377 = vunpack.c.l.b16 %v966
        %v2378 = vunpack.c.h.b16 %v966
        %v2379 = vunpack.c.l.b16 %v967
        %v2380 = vunpack.c.h.b16 %v967
        %v2381 = vunpack.c.l.b16 %v968
        %v2382 = vunpack.c.h.b16 %v968
        %v2383 = vunpack.c.l.b16 %v969
        %v2384 = vunpack.c.h.b16 %v969
        %v2385 = vunpack.c.l.b16 %v970
        %v2386 = vunpack.c.h.b16 %v970
        %v2387 = vunpack.c.l.b16 %v971
        %v2388 = vunpack.c.h.b16 %v971
        %v2389 = vunpack.c.l.b16 %v972
        %v2390 = vunpack.c.h.b16 %v972
        %v2391 = vunpack.c.l.b16 %v973
        %v2392 = vunpack.c.h.b16 %v973
        %v2393 = vunpack.c.l.b16 %v974
        %v2394 = vunpack.c.h.b16 %v974
        %v2395 = vunpack.c.l.b16 %v975
        %v2396 = vunpack.c.h.b16 %v975
        %v2397 = vunpack.c.l.b16 %v976
        %v2398 = vunpack.c.h.b16 %v976
        %v2399 = vunpack.c.l.b16 %v977
        %v2400 = vunpack.c.h.b16 %v977
        %v2401 = vunpack.c.l.b16 %v978
        %v2402 = vunpack.c.h.b16 %v978
        %v2403 = vunpack.c.l.b16 %v979
        %v2404 = vunpack.c.h.b16 %v979
        %v2405 = vunpack.c.l.b16 %v980
        %v2406 = vunpack.c.h.b16 %v980
        %v2407 = vunpack.c.l.b16 %v981
        %v2408 = vunpack.c.h.b16 %v981
        %v2409 = vunpack.c.l.b16 %v982
        %v2410 = vunpack.c.h.b16 %v982
        %v2411 = vunpack.c.l.b16 %v983
        %v2412 = vunpack.c.h.b16 %v983
        %v2413 = vunpack.c.l.b16 %v984
        %v2414 = vunpack.c.h.b16 %v984
        %v2415 = vunpack.c.l.b16 %v985
        %v2416 = vunpack.c.h.b16 %v985
        %v2417 = vunpack.c.l.b16 %v986
        %v2418 = vunpack.c.h.b16 %v986
        %v2419 = vunpack.c.l.b16 %v987
        %v2420 = vunpack.c.h.b16 %v987
        %v2421 = vunpack.c.l.b16 %v988
        %v2422 = vunpack.c.h.b16 %v988
        %v2423 = vunpack.c.l.b16 %v989
        %v2424 = vunpack.c.h.b16 %v989
        %v2425 = vunpack.c.l.b16 %v990
        %v2426 = vunpack.c.h.b16 %v990
        %v2427 = vunpack.c.l.b16 %v991
        %v2428 = vunpack.c.h.b16 %v991
        %v2429 = vunpack.c.l.b16 %v992
        %v2430 = vunpack.c.h.b16 %v992
        %v2431 = vunpack.c.l.b16 %v993
        %v2432 = vunpack.c.h.b16 %v993
        %v2433 = vunpack.c.l.b16 %v994
        %v2434 = vunpack.c.h.b16 %v994
        %v2435 = vunpack.c.l.b16 %v995
        %v2436 = vunpack.c.h.b16 %v995
        %v2437 = vunpack.c.l.b16 %v996
        %v2438 = vunpack.c.h.b16 %v996
        %v2439 = vunpack.c.l.b16 %v997
        %v2440 = vunpack.c.h.b16 %v997
        %v2441 = vunpack.c.l.b16 %v998
        %v2442 = vunpack.c.h.b16 %v998
        %v2443 = vunpack.c.l.b16 %v999
        %v2444 = vunpack.c.h.b16 %v999
        %v2445 = vunpack.c.l.b16 %v1000
        %v2446 = vunpack.c.h.b16 %v1000
        %v2447 = vunpack.c.l.b16 %v1001
        %v2448 = vunpack.c.h.b16 %v1001
        %v2449 = vunpack.c.l.b16 %v1002
        %v2450 = vunpack.c.h.b16 %v1002
        %v2451 = vunpack.c.l.b16 %v1003
        %v2452 = vunpack.c.h.b16 %v1003
        %v2453 = vunpack.c.l.b16 %v1004
        %v2454 = vunpack.c.h.b16 %v1004
        %v2455 = vunpack.c.l.b16 %v1005
        %v2456 = vunpack.c.h.b16 %v1005
        %v2457 = vunpack.c.l.b16 %v1006
        %v2458 = vunpack.c.h.b16 %v1006
        %v2459 = vunpack.c.l.b16 %v1007
        %v2460 = vunpack.c.h.b16 %v1007
        %v2461 = vunpack.c.l.b16 %v1008
        %v2462 = vunpack.c.h.b16 %v1008
        %v2463 = vunpack.c.l.b16 %v1009
        %v2464 = vunpack.c.h.b16 %v1009
        %v2465 = vunpack.c.l.b16 %v1010
        %v2466 = vunpack.c.h.b16 %v1010
        %v2467 = vunpack.c.l.b16 %v1011
        %v2468 = vunpack.c.h.b16 %v1011
        %v2469 = vunpack.c.l.b16 %v1012
        %v2470 = vunpack.c.h.b16 %v1012
        %v2471 = vunpack.c.l.b16 %v1013
        %v2472 = vunpack.c.h.b16 %v1013
        %v2473 = vunpack.c.l.b16 %v1014
        %v2474 = vunpack.c.h.b16 %v1014
        %v2475 = vunpack.c.l.b16 %v1015
        %v2476 = vunpack.c.h.b16 %v1015
        %v2477 = vunpack.c.l.b16 %v1016
        %v2478 = vunpack.c.h.b16 %v1016
        %v2479 = vunpack.c.l.b16 %v1017
        %v2480 = vunpack.c.h.b16 %v1017
        %v2481 = vunpack.c.l.b16 %v1018
        %v2482 = vunpack.c.h.b16 %v1018
        %v2483 = vunpack.c.l.b16 %v1019
        %v2484 = vunpack.c.h.b16 %v1019
        %v2485 = vunpack.c.l.b16 %v1020
        %v2486 = vunpack.c.h.b16 %v1020
        %v2487 = vunpack.c.l.b16 %v1021
        %v2488 = vunpack.c.h.b16 %v1021
        %v2489 = vunpack.c.l.b16 %v1022
        %v2490 = vunpack.c.h.b16 %v1022
        %v2491 = vunpack.c.l.b16 %v1023
        %v2492 = vunpack.c.h.b16 %v1023
        %v2493 = vunpack.c.l.b16 %v1024
        %v2494 = vunpack.c.h.b16 %v1024
        %v2495 = vunpack.c.l.b16 %v1025
        %v2496 = vunpack.c.h.b16 %v1025
        %v2497 = vunpack.c.l.b16 %v1026
        %v2498 = vunpack.c.h.b16 %v1026
        %v2499 = vunpack.c.l.b16 %v1027
        %v2500 = vunpack.c.h.b16 %v1027
        %v2501 = vunpack.c.l.b16 %v1028
        %v2502 = vunpack.c.h.b16 %v1028
        %v2503 = vunpack.c.l.b16 %v1029
        %v2504 = vunpack.c.h.b16 %v1029
        %v2505 = vunpack.c.l.b16 %v1030
        %v2506 = vunpack.c.h.b16 %v1030
        %v2507 = vunpack.c.l.b16 %v1031
        %v2508 = vunpack.c.h.b16 %v1031
        %v2509 = vunpack.c.l.b16 %v1032
        %v2510 = vunpack.c.h.b16 %v1032
        %v2511 = vunpack.c.l.b16 %v1033
        %v2512 = vunpack.c.h.b16 %v1033
        %v2513 = vunpack.c.l.b16 %v1034
        %v2514 = vunpack.c.h.b16 %v1034
        %v2515 = vunpack.c.l.b16 %v1035
        %v2516 = vunpack.c.h.b16 %v1035
        %v2517 = vunpack.c.l.b16 %v1036
        %v2518 = vunpack.c.h.b16 %v1036
        %v2519 = vunpack.c.l.b16 %v1037
        %v2520 = vunpack.c.h.b16 %v1037
        %v2521 = vunpack.c.l.b16 %v1038
        %v2522 = vunpack.c.h.b16 %v1038
        %v2523 = vunpack.c.l.b16 %v1039
        %v2524 = vunpack.c.h.b16 %v1039
        %v2525 = vunpack.c.l.b16 %v1040
        %v2526 = vunpack.c.h.b16 %v1040
        %v2527 = vunpack.c.l.b16 %v1041
        %v2528 = vunpack.c.h.b16 %v1041
        %v2529 = vunpack.c.l.b16 %v1042
        %v2530 = vunpack.c.h.b16 %v1042
        %v2531 = vunpack.c.l.b16 %v1043
        %v2532 = vunpack.c.h.b16 %v1043
        %v2533 = vunpack.c.l.b16 %v1044
        %v2534 = vunpack.c.h.b16 %v1044
        %v2535 = vunpack.c.l.b16 %v1045
        %v2536 = vunpack.c.h.b16 %v1045
        %v2537 = vunpack.c.l.b16 %v1046
        %v2538 = vunpack.c.h.b16 %v1046
        %v2539 = vunpack.c.l.b16 %v1047
        %v2540 = vunpack.c.h.b16 %v1047
        %v2541 = vunpack.c.l.b16 %v1048
        %v2542 = vunpack.c.h.b16 %v1048
        %v2543 = vunpack.c.l.b16 %v1049
        %v2544 = vunpack.c.h.b16 %v1049
        %v2545 = vunpack.c.l.b16 %v1050
        %v2546 = vunpack.c.h.b16 %v1050
        %v2547 = vunpack.c.l.b16 %v1051
        %v2548 = vunpack.c.h.b16 %v1051
        %v2549 = vunpack.c.l.b16 %v1052
        %v2550 = vunpack.c.h.b16 %v1052
        %v2551 = vunpack.c.l.b16 %v1053
        %v2552 = vunpack.c.h.b16 %v1053
        %v2553 = vunpack.c.l.b16 %v1054
        %v2554 = vunpack.c.h.b16 %v1054
        %v2555 = vunpack.c.l.b16 %v1055
        %v2556 = vunpack.c.h.b16 %v1055
        %v2557 = vunpack.c.l.b16 %v1056
        %v2558 = vunpack.c.h.b16 %v1056
        %v2559 = vunpack.c.l.b16 %v1057
        %v2560 = vunpack.c.h.b16 %v1057
        %v2561 = vunpack.c.l.b16 %v1058
        %v2562 = vunpack.c.h.b16 %v1058
        %v2563 = vunpack.c.l.b16 %v1059
        %v2564 = vunpack.c.h.b16 %v1059
        %v2565 = vunpack.c.l.b16 %v1060
        %v2566 = vunpack.c.h.b16 %v1060
        %v2567 = vunpack.c.l.b16 %v1061
        %v2568 = vunpack.c.h.b16 %v1061
        %v2569 = vunpack.c.l.b16 %v1062
        %v2570 = vunpack.c.h.b16 %v1062
        %v2571 = vunpack.c.l.b16 %v1063
        %v2572 = vunpack.c.h.b16 %v1063
        %v2573 = vunpack.c.l.b16 %v1064
        %v2574 = vunpack.c.h.b16 %v1064
        %v2575 = vunpack.c.l.b16 %v1065
        %v2576 = vunpack.c.h.b16 %v1065
        %v2577 = vunpack.c.l.b16 %v1066
        %v2578 = vunpack.c.h.b16 %v1066
        %v2579 = vunpack.c.l.b16 %v1067
        %v2580 = vunpack.c.h.b16 %v1067
        %v2581 = vunpack.c.l.b16 %v1068
        %v2582 = vunpack.c.h.b16 %v1068
        %v2583 = vunpack.c.l.b16 %v1069
        %v2584 = vunpack.c.h.b16 %v1069
        %v2585 = vunpack.c.l.b16 %v1070
        %v2586 = vunpack.c.h.b16 %v1070
        %v2587 = vunpack.c.l.b16 %v1071
        %v2588 = vunpack.c.h.b16 %v1071
        %v2589 = vunpack.c.l.b16 %v1072
        %v2590 = vunpack.c.h.b16 %v1072
        %v2591 = vunpack.c.l.b16 %v1073
        %v2592 = vunpack.c.h.b16 %v1073
        %v2593 = vunpack.c.l.b16 %v1074
        %v2594 = vunpack.c.h.b16 %v1074
        %v2595 = vunpack.c.l.b16 %v1075
        %v2596 = vunpack.c.h.b16 %v1075
        %v2597 = vunpack.c.l.b16 %v1076
        %v2598 = vunpack.c.h.b16 %v1076
        %v2599 = vunpack.c.l.b16 %v1077
        %v2600 = vunpack.c.h.b16 %v1077
        %v2601 = vunpack.c.l.b16 %v1078
        %v2602 = vunpack.c.h.b16 %v1078
        %v2603 = vunpack.c.l.b16 %v1079
        %v2604 = vunpack.c.h.b16 %v1079
        %v2605 = vunpack.c.l.b16 %v1080
        %v2606 = vunpack.c.h.b16 %v1080
        %v2607 = vunpack.c.l.b16 %v1081
        %v2608 = vunpack.c.h.b16 %v1081
        %v2609 = vunpack.c.l.b16 %v1082
        %v2610 = vunpack.c.h.b16 %v1082
        %v2611 = vunpack.c.l.b16 %v1083
        %v2612 = vunpack.c.h.b16 %v1083
        %v2613 = vunpack.c.l.b16 %v1084
        %v2614 = vunpack.c.h.b16 %v1084
        %v2615 = vunpack.c.l.b16 %v1085
        %v2616 = vunpack.c.h.b16 %v1085
        %v2617 = vunpack.c.l.b16 %v1086
        %v2618 = vunpack.c.h.b16 %v1086
        %v2619 = vunpack.c.l.b16 %v1087
        %v2620 = vunpack.c.h.b16 %v1087
        %v2621 = vunpack.c.l.b16 %v1088
        %v2622 = vunpack.c.h.b16 %v1088
        %v2623 = vunpack.c.l.b16 %v1089
        %v2624 = vunpack.c.h.b16 %v1089
        %v2625 = vunpack.c.l.b16 %v1090
        %v2626 = vunpack.c.h.b16 %v1090
        %v2627 = vunpack.c.l.b16 %v1091
        %v2628 = vunpack.c.h.b16 %v1091
        %v2629 = vunpack.c.l.b16 %v1092
        %v2630 = vunpack.c.h.b16 %v1092
        %v2631 = vunpack.c.l.b16 %v1093
        %v2632 = vunpack.c.h.b16 %v1093
        %v2633 = vunpack.c.l.b16 %v1094
        %v2634 = vunpack.c.h.b16 %v1094
        %v2635 = vunpack.c.l.b16 %v1095
        %v2636 = vunpack.c.h.b16 %v1095
        %v2637 = vunpack.c.l.b16 %v1096
        %v2638 = vunpack.c.h.b16 %v1096
        %v2639 = vunpack.c.l.b16 %v1097
        %v2640 = vunpack.c.h.b16 %v1097
        %v2641 = vunpack.c.l.b16 %v1098
        %v2642 = vunpack.c.h.b16 %v1098
        %v2643 = vunpack.c.l.b16 %v1099
        %v2644 = vunpack.c.h.b16 %v1099
        %v2645 = vunpack.c.l.b16 %v1100
        %v2646 = vunpack.c.h.b16 %v1100
        %v2647 = vunpack.c.l.b16 %v1101
        %v2648 = vunpack.c.h.b16 %v1101
        %v2649 = vunpack.c.l.b16 %v1102
        %v2650 = vunpack.c.h.b16 %v1102
        %v2651 = vunpack.c.l.b16 %v1103
        %v2652 = vunpack.c.h.b16 %v1103
        %v2653 = vunpack.c.l.b16 %v1104
        %v2654 = vunpack.c.h.b16 %v1104
        %v2655 = vunpack.c.l.b16 %v1105
        %v2656 = vunpack.c.h.b16 %v1105
        %v2657 = vunpack.c.l.b16 %v1106
        %v2658 = vunpack.c.h.b16 %v1106
        %v2659 = vunpack.c.l.b16 %v1107
        %v2660 = vunpack.c.h.b16 %v1107
        %v2661 = vunpack.c.l.b16 %v1108
        %v2662 = vunpack.c.h.b16 %v1108
        %v2663 = vunpack.c.l.b16 %v1109
        %v2664 = vunpack.c.h.b16 %v1109
        %v2665 = vunpack.c.l.b16 %v1110
        %v2666 = vunpack.c.h.b16 %v1110
        %v2667 = vunpack.c.l.b16 %v1111
        %v2668 = vunpack.c.h.b16 %v1111
        %v2669 = vunpack.c.l.b16 %v1112
        %v2670 = vunpack.c.h.b16 %v1112
        %v2671 = vunpack.c.l.b16 %v1113
        %v2672 = vunpack.c.h.b16 %v1113
        %v2673 = vunpack.c.l.b16 %v1114
        %v2674 = vunpack.c.h.b16 %v1114
        %v2675 = vunpack.c.l.b16 %v1115
        %v2676 = vunpack.c.h.b16 %v1115
        %v2677 = vunpack.c.l.b16 %v1116
        %v2678 = vunpack.c.h.b16 %v1116
        %v2679 = vunpack.c.l.b16 %v1117
        %v2680 = vunpack.c.h.b16 %v1117
        %v2681 = vunpack.c.l.b16 %v1118
        %v2682 = vunpack.c.h.b16 %v1118
        %v2683 = vunpack.c.l.b16 %v1119
        %v2684 = vunpack.c.h.b16 %v1119
        %v2685 = vunpack.c.l.b16 %v1120
        %v2686 = vunpack.c.h.b16 %v1120
        %v2687 = vunpack.c.l.b16 %v1121
        %v2688 = vunpack.c.h.b16 %v1121
        %v2689 = vunpack.c.l.b16 %v1122
        %v2690 = vunpack.c.h.b16 %v1122
        %v2691 = vunpack.c.l.b16 %v1123
        %v2692 = vunpack.c.h.b16 %v1123
        %v2693 = vunpack.c.l.b16 %v1124
        %v2694 = vunpack.c.h.b16 %v1124
        %v2695 = vunpack.c.l.b16 %v1125
        %v2696 = vunpack.c.h.b16 %v1125
        %v2697 = vunpack.c.l.b16 %v1126
        %v2698 = vunpack.c.h.b16 %v1126
        %v2699 = vunpack.c.l.b16 %v1127
        %v2700 = vunpack.c.h.b16 %v1127
        %v2701 = vunpack.c.l.b16 %v1128
        %v2702 = vunpack.c.h.b16 %v1128
        %v2703 = vunpack.c.l.b16 %v1129
        %v2704 = vunpack.c.h.b16 %v1129
        %v2705 = vunpack.c.l.b16 %v1130
        %v2706 = vunpack.c.h.b16 %v1130
        %v2707 = vunpack.c.l.b16 %v1131
        %v2708 = vunpack.c.h.b16 %v1131
        %v2709 = vunpack.c.l.b16 %v1132
        %v2710 = vunpack.c.h.b16 %v1132
        %v2711 = vunpack.c.l.b16 %v1133
        %v2712 = vunpack.c.h.b16 %v1133
        %v2713 = vunpack.c.l.b16 %v1134
        %v2714 = vunpack.c.h.b16 %v1134
        %v2715 = vunpack.c.l.b16 %v1135
        %v2716 = vunpack.c.h.b16 %v1135
        %v2717 = vunpack.c.l.b16 %v1136
        %v2718 = vunpack.c.h.b16 %v1136
        %v2719 = vunpack.c.l.b16 %v1137
        %v2720 = vunpack.c.h.b16 %v1137
        %v2721 = vunpack.c.l.b16 %v1138
        %v2722 = vunpack.c.h.b16 %v1138
        %v2723 = vunpack.c.l.b16 %v1139
        %v2724 = vunpack.c.h.b16 %v1139
        %v2725 = vunpack.c.l.b16 %v1140
        %v2726 = vunpack.c.h.b16 %v1140
        %v2727 = vunpack.c.l.b16 %v1141
        %v2728 = vunpack.c.h.b16 %v1141
        %v2729 = vunpack.c.l.b16 %v1142
        %v2730 = vunpack.c.h.b16 %v1142
        %v2731 = vunpack.c.l.b16 %v1143
        %v2732 = vunpack.c.h.b16 %v1143
        %v2733 = vunpack.c.l.b16 %v1144
        %v2734 = vunpack.c.h.b16 %v1144
        %v2735 = vunpack.c.l.b16 %v1145
        %v2736 = vunpack.c.h.b16 %v1145
        %v2737 = vunpack.c.l.b16 %v1146
        %v2738 = vunpack.c.h.b16 %v1146
        %v2739 = vunpack.c.l.b16 %v1147
        %v2740 = vunpack.c.h.b16 %v1147
        %v2741 = vunpack.c.l.b16 %v1148
        %v2742 = vunpack.c.h.b16 %v1148
        %v2743 = vunpack.c.l.b16 %v1149
        %v2744 = vunpack.c.h.b16 %v1149
        %v2745 = vunpack.c.l.b16 %v1150
        %v2746 = vunpack.c.h.b16 %v1150
        %v2747 = vunpack.c.l.b16 %v1151
        %v2748 = vunpack.c.h.b16 %v1151
        %v2749 = vunpack.c.l.b16 %v1152
        %v2750 = vunpack.c.h.b16 %v1152
        %v2751 = vunpack.c.l.b16 %v1153
        %v2752 = vunpack.c.h.b16 %v1153
        %v2753 = vunpack.c.l.b16 %v1154
        %v2754 = vunpack.c.h.b16 %v1154
        %v2755 = vunpack.c.l.b16 %v1155
        %v2756 = vunpack.c.h.b16 %v1155
        %v2757 = vunpack.c.l.b16 %v1156
        %v2758 = vunpack.c.h.b16 %v1156
        %v2759 = vpack.c.b16 %v1739, %v1735
        %v2760 = vpack.c.b16 %v1740, %v1736
        %v2761 = vpack.c.b16 %v1741, %v1737
        %v2762 = vpack.c.b16 %v1742, %v1738
        %v2763 = vpack.c.b16 %v1747, %v1743
        %v2764 = vpack.c.b16 %v1748, %v1744
        %v2765 = vpack.c.b16 %v1749, %v1745
        %v2766 = vpack.c.b16 %v1750, %v1746
        %v2767 = vpack.c.b16 %v1755, %v1751
        %v2768 = vpack.c.b16 %v1756, %v1752
        %v2769 = vpack.c.b16 %v1757, %v1753
        %v2770 = vpack.c.b16 %v1758, %v1754
        %v2771 = vpack.c.b16 %v1763, %v1759
        %v2772 = vpack.c.b16 %v1764, %v1760
        %v2773 = vpack.c.b16 %v1765, %v1761
        %v2774 = vpack.c.b16 %v1766, %v1762
        %v2775 = vpack.c.b16 %v1771, %v1767
        %v2776 = vpack.c.b16 %v1772, %v1768
        %v2777 = vpack.c.b16 %v1773, %v1769
        %v2778 = vpack.c.b16 %v1774, %v1770
        %v2779 = vpack.c.b16 %v1779, %v1775
        %v2780 = vpack.c.b16 %v1780, %v1776
        %v2781 = vpack.c.b16 %v1781, %v1777
        %v2782 = vpack.c.b16 %v1782, %v1778
        %v2783 = vpack.c.b16 %v1787, %v1783
        %v2784 = vpack.c.b16 %v1788, %v1784
        %v2785 = vpack.c.b16 %v1789, %v1785
        %v2786 = vpack.c.b16 %v1790, %v1786
        %v2787 = vpack.c.b16 %v1795, %v1791
        %v2788 = vpack.c.b16 %v1796, %v1792
        %v2789 = vpack.c.b16 %v1797, %v1793
        %v2790 = vpack.c.b16 %v1798, %v1794
        %v2791 = vpack.c.b16 %v1803, %v1799
        %v2792 = vpack.c.b16 %v1804, %v1800
        %v2793 = vpack.c.b16 %v1805, %v1801
        %v2794 = vpack.c.b16 %v1806, %v1802
        %v2795 = vpack.c.b16 %v1811, %v1807
        %v2796 = vpack.c.b16 %v1812, %v1808
        %v2797 = vpack.c.b16 %v1813, %v1809
        %v2798 = vpack.c.b16 %v1814, %v1810
        %v2799 = vpack.c.b16 %v1819, %v1815
        %v2800 = vpack.c.b16 %v1820, %v1816
        %v2801 = vpack.c.b16 %v1821, %v1817
        %v2802 = vpack.c.b16 %v1822, %v1818
        %v2803 = vpack.c.b16 %v1827, %v1823
        %v2804 = vpack.c.b16 %v1828, %v1824
        %v2805 = vpack.c.b16 %v1829, %v1825
        %v2806 = vpack.c.b16 %v1830, %v1826
        %v2807 = vpack.c.b16 %v1835, %v1831
        %v2808 = vpack.c.b16 %v1836, %v1832
        %v2809 = vpack.c.b16 %v1837, %v1833
        %v2810 = vpack.c.b16 %v1838, %v1834
        %v2811 = vpack.c.b16 %v1843, %v1839
        %v2812 = vpack.c.b16 %v1844, %v1840
        %v2813 = vpack.c.b16 %v1845, %v1841
        %v2814 = vpack.c.b16 %v1846, %v1842
        %v2815 = vpack.c.b16 %v1851, %v1847
        %v2816 = vpack.c.b16 %v1852, %v1848
        %v2817 = vpack.c.b16 %v1853, %v1849
        %v2818 = vpack.c.b16 %v1854, %v1850
        %v2819 = vpack.c.b16 %v1859, %v1855
        %v2820 = vpack.c.b16 %v1860, %v1856
        %v2821 = vpack.c.b16 %v1861, %v1857
        %v2822 = vpack.c.b16 %v1862, %v1858
        %v2823 = vpack.c.b16 %v1867, %v1863
        %v2824 = vpack.c.b16 %v1868, %v1864
        %v2825 = vpack.c.b16 %v1869, %v1865
        %v2826 = vpack.c.b16 %v1870, %v1866
        %v2827 = vpack.c.b16 %v1875, %v1871
        %v2828 = vpack.c.b16 %v1876, %v1872
        %v2829 = vpack.c.b16 %v1877, %v1873
        %v2830 = vpack.c.b16 %v1878, %v1874
        %v2831 = vpack.c.b16 %v1883, %v1879
        %v2832 = vpack.c.b16 %v1884, %v1880
        %v2833 = vpack.c.b16 %v1885, %v1881
        %v2834 = vpack.c.b16 %v1886, %v1882
        %v2835 = vpack.c.b16 %v1891, %v1887
        %v2836 = vpack.c.b16 %v1892, %v1888
        %v2837 = vpack.c.b16 %v1893, %v1889
        %v2838 = vpack.c.b16 %v1894, %v1890
        %v2839 = vpack.c.b16 %v1899, %v1895
        %v2840 = vpack.c.b16 %v1900, %v1896
        %v2841 = vpack.c.b16 %v1901, %v1897
        %v2842 = vpack.c.b16 %v1902, %v1898
        %v2843 = vpack.c.b16 %v1907, %v1903
        %v2844 = vpack.c.b16 %v1908, %v1904
        %v2845 = vpack.c.b16 %v1909, %v1905
        %v2846 = vpack.c.b16 %v1910, %v1906
        %v2847 = vpack.c.b16 %v1915, %v1911
        %v2848 = vpack.c.b16 %v1916, %v1912
        %v2849 = vpack.c.b16 %v1917, %v1913
        %v2850 = vpack.c.b16 %v1918, %v1914
        %v2851 = vpack.c.b16 %v1923, %v1919
        %v2852 = vpack.c.b16 %v1924, %v1920
        %v2853 = vpack.c.b16 %v1925, %v1921
        %v2854 = vpack.c.b16 %v1926, %v1922
        %v2855 = vpack.c.b16 %v1931, %v1927
        %v2856 = vpack.c.b16 %v1932, %v1928
        %v2857 = vpack.c.b16 %v1933, %v1929
        %v2858 = vpack.c.b16 %v1934, %v1930
        %v2859 = vpack.c.b16 %v1939, %v1935
        %v2860 = vpack.c.b16 %v1940, %v1936
        %v2861 = vpack.c.b16 %v1941, %v1937
        %v2862 = vpack.c.b16 %v1942, %v1938
        %v2863 = vpack.c.b16 %v1947, %v1943
        %v2864 = vpack.c.b16 %v1948, %v1944
        %v2865 = vpack.c.b16 %v1949, %v1945
        %v2866 = vpack.c.b16 %v1950, %v1946
        %v2867 = vpack.c.b16 %v1955, %v1951
        %v2868 = vpack.c.b16 %v1956, %v1952
        %v2869 = vpack.c.b16 %v1957, %v1953
        %v2870 = vpack.c.b16 %v1958, %v1954
        %v2871 = vpack.c.b16 %v1963, %v1959
        %v2872 = vpack.c.b16 %v1964, %v1960
        %v2873 = vpack.c.b16 %v1965, %v1961
        %v2874 = vpack.c.b16 %v1966, %v1962
        %v2875 = vpack.c.b16 %v1971, %v1967
        %v2876 = vpack.c.b16 %v1972, %v1968
        %v2877 = vpack.c.b16 %v1973, %v1969
        %v2878 = vpack.c.b16 %v1974, %v1970
        %v2879 = vpack.c.b16 %v1979, %v1975
        %v2880 = vpack.c.b16 %v1980, %v1976
        %v2881 = vpack.c.b16 %v1981, %v1977
        %v2882 = vpack.c.b16 %v1982, %v1978
        %v2883 = vpack.c.b16 %v1987, %v1983
        %v2884 = vpack.c.b16 %v1988, %v1984
        %v2885 = vpack.c.b16 %v1989, %v1985
        %v2886 = vpack.c.b16 %v1990, %v1986
        %v2887 = vpack.c.b16 %v1995, %v1991
        %v2888 = vpack.c.b16 %v1996, %v1992
        %v2889 = vpack.c.b16 %v1997, %v1993
        %v2890 = vpack.c.b16 %v1998, %v1994
        %v2891 = vpack.c.b16 %v2003, %v1999
        %v2892 = vpack.c.b16 %v2004, %v2000
        %v2893 = vpack.c.b16 %v2005, %v2001
        %v2894 = vpack.c.b16 %v2006, %v2002
        %v2895 = vpack.c.b16 %v2011, %v2007
        %v2896 = vpack.c.b16 %v2012, %v2008
        %v2897 = vpack.c.b16 %v2013, %v2009
        %v2898 = vpack.c.b16 %v2014, %v2010
        %v2899 = vpack.c.b16 %v2019, %v2015
        %v2900 = vpack.c.b16 %v2020, %v2016
        %v2901 = vpack.c.b16 %v2021, %v2017
        %v2902 = vpack.c.b16 %v2022, %v2018
        %v2903 = vpack.c.b16 %v2027, %v2023
        %v2904 = vpack.c.b16 %v2028, %v2024
        %v2905 = vpack.c.b16 %v2029, %v2025
        %v2906 = vpack.c.b16 %v2030, %v2026
        %v2907 = vpack.c.b16 %v2035, %v2031
        %v2908 = vpack.c.b16 %v2036, %v2032
        %v2909 = vpack.c.b16 %v2037, %v2033
        %v2910 = vpack.c.b16 %v2038, %v2034
        %v2911 = vpack.c.b16 %v2043, %v2039
        %v2912 = vpack.c.b16 %v2044, %v2040
        %v2913 = vpack.c.b16 %v2045, %v2041
        %v2914 = vpack.c.b16 %v2046, %v2042
        %v2915 = vpack.c.b16 %v2051, %v2047
        %v2916 = vpack.c.b16 %v2052, %v2048
        %v2917 = vpack.c.b16 %v2053, %v2049
        %v2918 = vpack.c.b16 %v2054, %v2050
        %v2919 = vpack.c.b16 %v2059, %v2055
        %v2920 = vpack.c.b16 %v2060, %v2056
        %v2921 = vpack.c.b16 %v2061, %v2057
        %v2922 = vpack.c.b16 %v2062, %v2058
        %v2923 = vpack.c.b16 %v2067, %v2063
        %v2924 = vpack.c.b16 %v2068, %v2064
        %v2925 = vpack.c.b16 %v2069, %v2065
        %v2926 = vpack.c.b16 %v2070, %v2066
        %v2927 = vpack.c.b16 %v2075, %v2071
        %v2928 = vpack.c.b16 %v2076, %v2072
        %v2929 = vpack.c.b16 %v2077, %v2073
        %v2930 = vpack.c.b16 %v2078, %v2074
        %v2931 = vpack.c.b16 %v2083, %v2079
        %v2932 = vpack.c.b16 %v2084, %v2080
        %v2933 = vpack.c.b16 %v2085, %v2081
        %v2934 = vpack.c.b16 %v2086, %v2082
        %v2935 = vpack.c.b16 %v2091, %v2087
        %v2936 = vpack.c.b16 %v2092, %v2088
        %v2937 = vpack.c.b16 %v2093, %v2089
        %v2938 = vpack.c.b16 %v2094, %v2090
        %v2939 = vpack.c.b16 %v2099, %v2095
        %v2940 = vpack.c.b16 %v2100, %v2096
        %v2941 = vpack.c.b16 %v2101, %v2097
        %v2942 = vpack.c.b16 %v2102, %v2098
        %v2943 = vpack.c.b16 %v2107, %v2103
        %v2944 = vpack.c.b16 %v2108, %v2104
        %v2945 = vpack.c.b16 %v2109, %v2105
        %v2946 = vpack.c.b16 %v2110, %v2106
        %v2947 = vpack.c.b16 %v2115, %v2111
        %v2948 = vpack.c.b16 %v2116, %v2112
        %v2949 = vpack.c.b16 %v2117, %v2113
        %v2950 = vpack.c.b16 %v2118, %v2114
        %v2951 = vpack.c.b16 %v2123, %v2119
        %v2952 = vpack.c.b16 %v2124, %v2120
        %v2953 = vpack.c.b16 %v2125, %v2121
        %v2954 = vpack.c.b16 %v2126, %v2122
        %v2955 = vpack.c.b16 %v2131, %v2127
        %v2956 = vpack.c.b16 %v2132, %v2128
        %v2957 = vpack.c.b16 %v2133, %v2129
        %v2958 = vpack.c.b16 %v2134, %v2130
        %v2959 = vpack.c.b16 %v2139, %v2135
        %v2960 = vpack.c.b16 %v2140, %v2136
        %v2961 = vpack.c.b16 %v2141, %v2137
        %v2962 = vpack.c.b16 %v2142, %v2138
        %v2963 = vpack.c.b16 %v2147, %v2143
        %v2964 = vpack.c.b16 %v2148, %v2144
        %v2965 = vpack.c.b16 %v2149, %v2145
        %v2966 = vpack.c.b16 %v2150, %v2146
        %v2967 = vpack.c.b16 %v2155, %v2151
        %v2968 = vpack.c.b16 %v2156, %v2152
        %v2969 = vpack.c.b16 %v2157, %v2153
        %v2970 = vpack.c.b16 %v2158, %v2154
        %v2971 = vpack.c.b16 %v2163, %v2159
        %v2972 = vpack.c.b16 %v2164, %v2160
        %v2973 = vpack.c.b16 %v2165, %v2161
        %v2974 = vpack.c.b16 %v2166, %v2162
        %v2975 = vpack.c.b16 %v2171, %v2167
        %v2976 = vpack.c.b16 %v2172, %v2168
        %v2977 = vpack.c.b16 %v2173, %v2169
        %v2978 = vpack.c.b16 %v2174, %v2170
        %v2979 = vpack.c.b16 %v2179, %v2175
        %v2980 = vpack.c.b16 %v2180, %v2176
        %v2981 = vpack.c.b16 %v2181, %v2177
        %v2982 = vpack.c.b16 %v2182, %v2178
        %v2983 = vpack.c.b16 %v2187, %v2183
        %v2984 = vpack.c.b16 %v2188, %v2184
        %v2985 = vpack.c.b16 %v2189, %v2185
        %v2986 = vpack.c.b16 %v2190, %v2186
        %v2987 = vpack.c.b16 %v2195, %v2191
        %v2988 = vpack.c.b16 %v2196, %v2192
        %v2989 = vpack.c.b16 %v2197, %v2193
        %v2990 = vpack.c.b16 %v2198, %v2194
        %v2991 = vpack.c.b16 %v2203, %v2199
        %v2992 = vpack.c.b16 %v2204, %v2200
        %v2993 = vpack.c.b16 %v2205, %v2201
        %v2994 = vpack.c.b16 %v2206, %v2202
        %v2995 = vpack.c.b16 %v2211, %v2207
        %v2996 = vpack.c.b16 %v2212, %v2208
        %v2997 = vpack.c.b16 %v2213, %v2209
        %v2998 = vpack.c.b16 %v2214, %v2210
        %v2999 = vpack.c.b16 %v2219, %v2215
        %v3000 = vpack.c.b16 %v2220, %v2216
        %v3001 = vpack.c.b16 %v2221, %v2217
        %v3002 = vpack.c.b16 %v2222, %v2218
        %v3003 = vpack.c.b16 %v2227, %v2223
        %v3004 = vpack.c.b16 %v2228, %v2224
        %v3005 = vpack.c.b16 %v2229, %v2225
        %v3006 = vpack.c.b16 %v2230, %v2226
        %v3007 = vpack.c.b16 %v2235, %v2231
        %v3008 = vpack.c.b16 %v2236, %v2232
        %v3009 = vpack.c.b16 %v2237, %v2233
        %v3010 = vpack.c.b16 %v2238, %v2234
        %v3011 = vpack.c.b16 %v2243, %v2239
        %v3012 = vpack.c.b16 %v2244, %v2240
        %v3013 = vpack.c.b16 %v2245, %v2241
        %v3014 = vpack.c.b16 %v2246, %v2242
        %v3015 = vpack.c.b16 %v2251, %v2247
        %v3016 = vpack.c.b16 %v2252, %v2248
        %v3017 = vpack.c.b16 %v2253, %v2249
        %v3018 = vpack.c.b16 %v2254, %v2250
        %v3019 = vpack.c.b16 %v2259, %v2255
        %v3020 = vpack.c.b16 %v2260, %v2256
        %v3021 = vpack.c.b16 %v2261, %v2257
        %v3022 = vpack.c.b16 %v2262, %v2258
        %v3023 = vpack.c.b16 %v2267, %v2263
        %v3024 = vpack.c.b16 %v2268, %v2264
        %v3025 = vpack.c.b16 %v2269, %v2265
        %v3026 = vpack.c.b16 %v2270, %v2266
        %v3027 = vpack.c.b16 %v2275, %v2271
        %v3028 = vpack.c.b16 %v2276, %v2272
        %v3029 = vpack.c.b16 %v2277, %v2273
        %v3030 = vpack.c.b16 %v2278, %v2274
        %v3031 = vpack.c.b16 %v2283, %v2279
        %v3032 = vpack.c.b16 %v2284, %v2280
        %v3033 = vpack.c.b16 %v2285, %v2281
        %v3034 = vpack.c.b16 %v2286, %v2282
        %v3035 = vpack.c.b16 %v2291, %v2287
        %v3036 = vpack.c.b16 %v2292, %v2288
        %v3037 = vpack.c.b16 %v2293, %v2289
        %v3038 = vpack.c.b16 %v2294, %v2290
        %v3039 = vpack.c.b16 %v2299, %v2295
        %v3040 = vpack.c.b16 %v2300, %v2296
        %v3041 = vpack.c.b16 %v2301, %v2297
        %v3042 = vpack.c.b16 %v2302, %v2298
        %v3043 = vpack.c.b16 %v2307, %v2303
        %v3044 = vpack.c.b16 %v2308, %v2304
        %v3045 = vpack.c.b16 %v2309, %v2305
        %v3046 = vpack.c.b16 %v2310, %v2306
        %v3047 = vpack.c.b16 %v2315, %v2311
        %v3048 = vpack.c.b16 %v2316, %v2312
        %v3049 = vpack.c.b16 %v2317, %v2313
        %v3050 = vpack.c.b16 %v2318, %v2314
        %v3051 = vpack.c.b16 %v2323, %v2319
        %v3052 = vpack.c.b16 %v2324, %v2320
        %v3053 = vpack.c.b16 %v2325, %v2321
        %v3054 = vpack.c.b16 %v2326, %v2322
        %v3055 = vpack.c.b16 %v2331, %v2327
        %v3056 = vpack.c.b16 %v2332, %v2328
        %v3057 = vpack.c.b16 %v2333, %v2329
        %v3058 = vpack.c.b16 %v2334, %v2330
        %v3059 = vpack.c.b16 %v2339, %v2335
        %v3060 = vpack.c.b16 %v2340, %v2336
        %v3061 = vpack.c.b16 %v2341, %v2337
        %v3062 = vpack.c.b16 %v2342, %v2338
        %v3063 = vpack.c.b16 %v2347, %v2343
        %v3064 = vpack.c.b16 %v2348, %v2344
        %v3065 = vpack.c.b16 %v2349, %v2345
        %v3066 = vpack.c.b16 %v2350, %v2346
        %v3067 = vpack.c.b16 %v2355, %v2351
        %v3068 = vpack.c.b16 %v2356, %v2352
        %v3069 = vpack.c.b16 %v2357, %v2353
        %v3070 = vpack.c.b16 %v2358, %v2354
        %v3071 = vpack.c.b16 %v2363, %v2359
        %v3072 = vpack.c.b16 %v2364, %v2360
        %v3073 = vpack.c.b16 %v2365, %v2361
        %v3074 = vpack.c.b16 %v2366, %v2362
        %v3075 = vpack.c.b16 %v2371, %v2367
        %v3076 = vpack.c.b16 %v2372, %v2368
        %v3077 = vpack.c.b16 %v2373, %v2369
        %v3078 = vpack.c.b16 %v2374, %v2370
        %v3079 = vpack.c.b16 %v2379, %v2375
        %v3080 = vpack.c.b16 %v2380, %v2376
        %v3081 = vpack.c.b16 %v2381, %v2377
        %v3082 = vpack.c.b16 %v2382, %v2378
        %v3083 = vpack.c.b16 %v2387, %v2383
        %v3084 = vpack.c.b16 %v2388, %v2384
        %v3085 = vpack.c.b16 %v2389, %v2385
        %v3086 = vpack.c.b16 %v2390, %v2386
        %v3087 = vpack.c.b16 %v2395, %v2391
        %v3088 = vpack.c.b16 %v2396, %v2392
        %v3089 = vpack.c.b16 %v2397, %v2393
        %v3090 = vpack.c.b16 %v2398, %v2394
        %v3091 = vpack.c.b16 %v2403, %v2399
        %v3092 = vpack.c.b16 %v2404, %v2400
        %v3093 = vpack.c.b16 %v2405, %v2401
        %v3094 = vpack.c.b16 %v2406, %v2402
        %v3095 = vpack.c.b16 %v2411, %v2407
        %v3096 = vpack.c.b16 %v2412, %v2408
        %v3097 = vpack.c.b16 %v2413, %v2409
        %v3098 = vpack.c.b16 %v2414, %v2410
        %v3099 = vpack.c.b16 %v2419, %v2415
        %v3100 = vpack.c.b16 %v2420, %v2416
        %v3101 = vpack.c.b16 %v2421, %v2417
        %v3102 = vpack.c.b16 %v2422, %v2418
        %v3103 = vpack.c.b16 %v2427, %v2423
        %v3104 = vpack.c.b16 %v2428, %v2424
        %v3105 = vpack.c.b16 %v2429, %v2425
        %v3106 = vpack.c.b16 %v2430, %v2426
        %v3107 = vpack.c.b16 %v2435, %v2431
        %v3108 = vpack.c.b16 %v2436, %v2432
        %v3109 = vpack.c.b16 %v2437, %v2433
        %v3110 = vpack.c.b16 %v2438, %v2434
        %v3111 = vpack.c.b16 %v2443, %v2439
        %v3112 = vpack.c.b16 %v2444, %v2440
        %v3113 = vpack.c.b16 %v2445, %v2441
        %v3114 = vpack.c.b16 %v2446, %v2442
        %v3115 = vpack.c.b16 %v2451, %v2447
        %v3116 = vpack.c.b16 %v2452, %v2448
        %v3117 = vpack.c.b16 %v2453, %v2449
        %v3118 = vpack.c.b16 %v2454, %v2450
        %v3119 = vpack.c.b16 %v2459, %v2455
        %v3120 = vpack.c.b16 %v2460, %v2456
        %v3121 = vpack.c.b16 %v2461, %v2457
        %v3122 = vpack.c.b16 %v2462, %v2458
        %v3123 = vpack.c.b16 %v2467, %v2463
        %v3124 = vpack.c.b16 %v2468, %v2464
        %v3125 = vpack.c.b16 %v2469, %v2465
        %v3126 = vpack.c.b16 %v2470, %v2466
        %v3127 = vpack.c.b16 %v2475, %v2471
        %v3128 = vpack.c.b16 %v2476, %v2472
        %v3129 = vpack.c.b16 %v2477, %v2473
        %v3130 = vpack.c.b16 %v2478, %v2474
        %v3131 = vpack.c.b16 %v2483, %v2479
        %v3132 = vpack.c.b16 %v2484, %v2480
        %v3133 = vpack.c.b16 %v2485, %v2481
        %v3134 = vpack.c.b16 %v2486, %v2482
        %v3135 = vpack.c.b16 %v2491, %v2487
        %v3136 = vpack.c.b16 %v2492, %v2488
        %v3137 = vpack.c.b16 %v2493, %v2489
        %v3138 = vpack.c.b16 %v2494, %v2490
        %v3139 = vpack.c.b16 %v2499, %v2495
        %v3140 = vpack.c.b16 %v2500, %v2496
        %v3141 = vpack.c.b16 %v2501, %v2497
        %v3142 = vpack.c.b16 %v2502, %v2498
        %v3143 = vpack.c.b16 %v2507, %v2503
        %v3144 = vpack.c.b16 %v2508, %v2504
        %v3145 = vpack.c.b16 %v2509, %v2505
        %v3146 = vpack.c.b16 %v2510, %v2506
        %v3147 = vpack.c.b16 %v2515, %v2511
        %v3148 = vpack.c.b16 %v2516, %v2512
        %v3149 = vpack.c.b16 %v2517, %v2513
        %v3150 = vpack.c.b16 %v2518, %v2514
        %v3151 = vpack.c.b16 %v2523, %v2519
        %v3152 = vpack.c.b16 %v2524, %v2520
        %v3153 = vpack.c.b16 %v2525, %v2521
        %v3154 = vpack.c.b16 %v2526, %v2522
        %v3155 = vpack.c.b16 %v2531, %v2527
        %v3156 = vpack.c.b16 %v2532, %v2528
        %v3157 = vpack.c.b16 %v2533, %v2529
        %v3158 = vpack.c.b16 %v2534, %v2530
        %v3159 = vpack.c.b16 %v2539, %v2535
        %v3160 = vpack.c.b16 %v2540, %v2536
        %v3161 = vpack.c.b16 %v2541, %v2537
        %v3162 = vpack.c.b16 %v2542, %v2538
        %v3163 = vpack.c.b16 %v2547, %v2543
        %v3164 = vpack.c.b16 %v2548, %v2544
        %v3165 = vpack.c.b16 %v2549, %v2545
        %v3166 = vpack.c.b16 %v2550, %v2546
        %v3167 = vpack.c.b16 %v2555, %v2551
        %v3168 = vpack.c.b16 %v2556, %v2552
        %v3169 = vpack.c.b16 %v2557, %v2553
        %v3170 = vpack.c.b16 %v2558, %v2554
        %v3171 = vpack.c.b16 %v2563, %v2559
        %v3172 = vpack.c.b16 %v2564, %v2560
        %v3173 = vpack.c.b16 %v2565, %v2561
        %v3174 = vpack.c.b16 %v2566, %v2562
        %v3175 = vpack.c.b16 %v2571, %v2567
        %v3176 = vpack.c.b16 %v2572, %v2568
        %v3177 = vpack.c.b16 %v2573, %v2569
        %v3178 = vpack.c.b16 %v2574, %v2570
        %v3179 = vpack.c.b16 %v2579, %v2575
        %v3180 = vpack.c.b16 %v2580, %v2576
        %v3181 = vpack.c.b16 %v2581, %v2577
        %v3182 = vpack.c.b16 %v2582, %v2578
        %v3183 = vpack.c.b16 %v2587, %v2583
        %v3184 = vpack.c.b16 %v2588, %v2584
        %v3185 = vpack.c.b16 %v2589, %v2585
        %v3186 = vpack.c.b16 %v2590, %v2586
        %v3187 = vpack.c.b16 %v2595, %v2591
        %v3188 = vpack.c.b16 %v2596, %v2592
        %v3189 = vpack.c.b16 %v2597, %v2593
        %v3190 = vpack.c.b16 %v2598, %v2594
        %v3191 = vpack.c.b16 %v2603, %v2599
        %v3192 = vpack.c.b16 %v2604, %v2600
        %v3193 = vpack.c.b16 %v2605, %v2601
        %v3194 = vpack.c.b16 %v2606, %v2602
        %v3195 = vpack.c.b16 %v2611, %v2607
        %v3196 = vpack.c.b16 %v2612, %v2608
        %v3197 = vpack.c.b16 %v2613, %v2609
        %v3198 = vpack.c.b16 %v2614, %v2610
        %v3199 = vpack.c.b16 %v2619, %v2615
        %v3200 = vpack.c.b16 %v2620, %v2616
        %v3201 = vpack.c.b16 %v2621, %v2617
        %v3202 = vpack.c.b16 %v2622, %v2618
        %v3203 = vpack.c.b16 %v2627, %v2623
        %v3204 = vpack.c.b16 %v2628, %v2624
        %v3205 = vpack.c.b16 %v2629, %v2625
        %v3206 = vpack.c.b16 %v2630, %v2626
        %v3207 = vpack.c.b16 %v2635, %v2631
        %v3208 = vpack.c.b16 %v2636, %v2632
        %v3209 = vpack.c.b16 %v2637, %v2633
        %v3210 = vpack.c.b16 %v2638, %v2634
        %v3211 = vpack.c.b16 %v2643, %v2639
        %v3212 = vpack.c.b16 %v2644, %v2640
        %v3213 = vpack.c.b16 %v2645, %v2641
        %v3214 = vpack.c.b16 %v2646, %v2642
        %v3215 = vpack.c.b16 %v2651, %v2647
        %v3216 = vpack.c.b16 %v2652, %v2648
        %v3217 = vpack.c.b16 %v2653, %v2649
        %v3218 = vpack.c.b16 %v2654, %v2650
        %v3219 = vpack.c.b16 %v2659, %v2655
        %v3220 = vpack.c.b16 %v2660, %v2656
        %v3221 = vpack.c.b16 %v2661, %v2657
        %v3222 = vpack.c.b16 %v2662, %v2658
        %v3223 = vpack.c.b16 %v2667, %v2663
        %v3224 = vpack.c.b16 %v2668, %v2664
        %v3225 = vpack.c.b16 %v2669, %v2665
        %v3226 = vpack.c.b16 %v2670, %v2666
        %v3227 = vpack.c.b16 %v2675, %v2671
        %v3228 = vpack.c.b16 %v2676, %v2672
        %v3229 = vpack.c.b16 %v2677, %v2673
        %v3230 = vpack.c.b16 %v2678, %v2674
        %v3231 = vpack.c.b16 %v2683, %v2679
        %v3232 = vpack.c.b16 %v2684, %v2680
        %v3233 = vpack.c.b16 %v2685, %v2681
        %v3234 = vpack.c.b16 %v2686, %v2682
        %v3235 = vpack.c.b16 %v2691, %v2687
        %v3236 = vpack.c.b16 %v2692, %v2688
        %v3237 = vpack.c.b16 %v2693, %v2689
        %v3238 = vpack.c.b16 %v2694, %v2690
        %v3239 = vpack.c.b16 %v2699, %v2695
        %v3240 = vpack.c.b16 %v2700, %v2696
        %v3241 = vpack.c.b16 %v2701, %v2697
        %v3242 = vpack.c.b16 %v2702, %v2698
        %v3243 = vpack.c.b16 %v2707, %v2703
        %v3244 = vpack.c.b16 %v2708, %v2704
        %v3245 = vpack.c.b16 %v2709, %v2705
        %v3246 = vpack.c.b16 %v2710, %v2706
        %v3247 = vpack.c.b16 %v2715, %v2711
        %v3248 = vpack.c.b16 %v2716, %v2712
        %v3249 = vpack.c.b16 %v2717, %v2713
        %v3250 = vpack.c.b16 %v2718, %v2714
        %v3251 = vpack.c.b16 %v2723, %v2719
        %v3252 = vpack.c.b16 %v2724, %v2720
        %v3253 = vpack.c.b16 %v2725, %v2721
        %v3254 = vpack.c.b16 %v2726, %v2722
        %v3255 = vpack.c.b16 %v2731, %v2727
        %v3256 = vpack.c.b16 %v2732, %v2728
        %v3257 = vpack.c.b16 %v2733, %v2729
        %v3258 = vpack.c.b16 %v2734, %v2730
        %v3259 = vpack.c.b16 %v2739, %v2735
        %v3260 = vpack.c.b16 %v2740, %v2736
        %v3261 = vpack.c.b16 %v2741, %v2737
        %v3262 = vpack.c.b16 %v2742, %v2738
        %v3263 = vpack.c.b16 %v2747, %v2743
        %v3264 = vpack.c.b16 %v2748, %v2744
        %v3265 = vpack.c.b16 %v2749, %v2745
        %v3266 = vpack.c.b16 %v2750, %v2746
        %v3267 = vpack.c.b16 %v2755, %v2751
        %v3268 = vpack.c.b16 %v2756, %v2752
        %v3269 = vpack.c.b16 %v2757, %v2753
        %v3270 = vpack.c.b16 %v2758, %v2754
        %3783 = vmatpush.bf16.msra.mxu0 %v2787
        %3784 = vmatpush.bf16.msra.mxu0 %v2783
        %3785 = vmatpush.bf16.msra.mxu0 %v2779
        %3786 = vmatpush.bf16.msra.mxu0 %v2775
        %3787 = vmatpush.bf16.msra.mxu0 %v2771
        %3788 = vmatpush.bf16.msra.mxu0 %v2767
        %3789 = vmatpush.bf16.msra.mxu0 %v2763
        %3790 = vmatpush.bf16.msra.mxu0 %v2759
        %3791 = vmatmul.bf16.gmra.mxu0 %v1191
        %v3792 = vpop.f32.mrf.mxu0
        %v3793 = vadd.f32 %v1159, %v3792
        %v3794 = vpop.f32.mrf.mxu0
        %3795 = vdwg.mxu0
        %3796 = vmatpush.bf16.msra.mxu0 %v2819
        %3797 = vmatpush.bf16.msra.mxu0 %v2815
        %3798 = vmatpush.bf16.msra.mxu0 %v2811
        %3799 = vmatpush.bf16.msra.mxu0 %v2807
        %3800 = vmatpush.bf16.msra.mxu0 %v2803
        %3801 = vmatpush.bf16.msra.mxu0 %v2799
        %3802 = vmatpush.bf16.msra.mxu0 %v2795
        %3803 = vmatpush.bf16.msra.mxu0 %v2791
        %3804 = vmatmul.bf16.gmra.mxu0 %v1192
        %v3805 = vpop.f32.mrf.mxu0
        %v3806 = vadd.f32 %v3793, %v3805
        %v3807 = vpop.f32.mrf.mxu0
        %3808 = vdwg.mxu0
        %3809 = vmatpush.bf16.msra.mxu0 %v2851
        %3810 = vmatpush.bf16.msra.mxu0 %v2847
        %3811 = vmatpush.bf16.msra.mxu0 %v2843
        %3812 = vmatpush.bf16.msra.mxu0 %v2839
        %3813 = vmatpush.bf16.msra.mxu0 %v2835
        %3814 = vmatpush.bf16.msra.mxu0 %v2831
        %3815 = vmatpush.bf16.msra.mxu0 %v2827
        %3816 = vmatpush.bf16.msra.mxu0 %v2823
        %3817 = vmatmul.bf16.gmra.mxu0 %v1193
        %v3818 = vpop.f32.mrf.mxu0
        %v3819 = vadd.f32 %v3806, %v3818
        %v3820 = vpop.f32.mrf.mxu0
        %3821 = vdwg.mxu0
        %3822 = vmatpush.bf16.msra.mxu0 %v2883
        %3823 = vmatpush.bf16.msra.mxu0 %v2879
        %3824 = vmatpush.bf16.msra.mxu0 %v2875
        %3825 = vmatpush.bf16.msra.mxu0 %v2871
        %3826 = vmatpush.bf16.msra.mxu0 %v2867
        %3827 = vmatpush.bf16.msra.mxu0 %v2863
        %3828 = vmatpush.bf16.msra.mxu0 %v2859
        %3829 = vmatpush.bf16.msra.mxu0 %v2855
        %3830 = vmatmul.bf16.gmra.mxu0 %v1194
        %v3831 = vpop.f32.mrf.mxu0
        %v3832 = vadd.f32 %v3819, %v3831
        %v3833 = vpop.f32.mrf.mxu0
        %3834 = vdwg.mxu0
        %3835 = vmatpush.bf16.msra.mxu0 %v2915
        %3836 = vmatpush.bf16.msra.mxu0 %v2911
        %3837 = vmatpush.bf16.msra.mxu0 %v2907
        %3838 = vmatpush.bf16.msra.mxu0 %v2903
        %3839 = vmatpush.bf16.msra.mxu0 %v2899
        %3840 = vmatpush.bf16.msra.mxu0 %v2895
        %3841 = vmatpush.bf16.msra.mxu0 %v2891
        %3842 = vmatpush.bf16.msra.mxu0 %v2887
        %3843 = vmatmul.bf16.gmra.mxu0 %v1195
        %v3844 = vpop.f32.mrf.mxu0
        %v3845 = vadd.f32 %v3832, %v3844
        %v3846 = vpop.f32.mrf.mxu0
        %3847 = vdwg.mxu0
        %3848 = vmatpush.bf16.msra.mxu0 %v2947
        %3849 = vmatpush.bf16.msra.mxu0 %v2943
        %3850 = vmatpush.bf16.msra.mxu0 %v2939
        %3851 = vmatpush.bf16.msra.mxu0 %v2935
        %3852 = vmatpush.bf16.msra.mxu0 %v2931
        %3853 = vmatpush.bf16.msra.mxu0 %v2927
        %3854 = vmatpush.bf16.msra.mxu0 %v2923
        %3855 = vmatpush.bf16.msra.mxu0 %v2919
        %3856 = vmatmul.bf16.gmra.mxu0 %v1196
        %v3857 = vpop.f32.mrf.mxu0
        %v3858 = vadd.f32 %v3845, %v3857
        %v3859 = vpop.f32.mrf.mxu0
        %3860 = vdwg.mxu0
        %3861 = vmatpush.bf16.msra.mxu0 %v2979
        %3862 = vmatpush.bf16.msra.mxu0 %v2975
        %3863 = vmatpush.bf16.msra.mxu0 %v2971
        %3864 = vmatpush.bf16.msra.mxu0 %v2967
        %3865 = vmatpush.bf16.msra.mxu0 %v2963
        %3866 = vmatpush.bf16.msra.mxu0 %v2959
        %3867 = vmatpush.bf16.msra.mxu0 %v2955
        %3868 = vmatpush.bf16.msra.mxu0 %v2951
        %3869 = vmatmul.bf16.gmra.mxu0 %v1197
        %v3870 = vpop.f32.mrf.mxu0
        %v3871 = vadd.f32 %v3858, %v3870
        %v3872 = vpop.f32.mrf.mxu0
        %3873 = vdwg.mxu0
        %3874 = vmatpush.bf16.msra.mxu0 %v3011
        %3875 = vmatpush.bf16.msra.mxu0 %v3007
        %3876 = vmatpush.bf16.msra.mxu0 %v3003
        %3877 = vmatpush.bf16.msra.mxu0 %v2999
        %3878 = vmatpush.bf16.msra.mxu0 %v2995
        %3879 = vmatpush.bf16.msra.mxu0 %v2991
        %3880 = vmatpush.bf16.msra.mxu0 %v2987
        %3881 = vmatpush.bf16.msra.mxu0 %v2983
        %3882 = vmatmul.bf16.gmra.mxu0 %v1198
        %v3883 = vpop.f32.mrf.mxu0
        %v3884 = vadd.f32 %v3871, %v3883
        %v3885 = vpop.f32.mrf.mxu0
        %3886 = vdwg.mxu0
        %3887 = vmatpush.bf16.msra.mxu0 %v3043
        %3888 = vmatpush.bf16.msra.mxu0 %v3039
        %3889 = vmatpush.bf16.msra.mxu0 %v3035
        %3890 = vmatpush.bf16.msra.mxu0 %v3031
        %3891 = vmatpush.bf16.msra.mxu0 %v3027
        %3892 = vmatpush.bf16.msra.mxu0 %v3023
        %3893 = vmatpush.bf16.msra.mxu0 %v3019
        %3894 = vmatpush.bf16.msra.mxu0 %v3015
        %3895 = vmatmul.bf16.gmra.mxu0 %v1199
        %v3896 = vpop.f32.mrf.mxu0
        %v3897 = vadd.f32 %v3884, %v3896
        %v3898 = vpop.f32.mrf.mxu0
        %3899 = vdwg.mxu0
        %3900 = vmatpush.bf16.msra.mxu0 %v3075
        %3901 = vmatpush.bf16.msra.mxu0 %v3071
        %3902 = vmatpush.bf16.msra.mxu0 %v3067
        %3903 = vmatpush.bf16.msra.mxu0 %v3063
        %3904 = vmatpush.bf16.msra.mxu0 %v3059
        %3905 = vmatpush.bf16.msra.mxu0 %v3055
        %3906 = vmatpush.bf16.msra.mxu0 %v3051
        %3907 = vmatpush.bf16.msra.mxu0 %v3047
        %3908 = vmatmul.bf16.gmra.mxu0 %v1200
        %v3909 = vpop.f32.mrf.mxu0
        %v3910 = vadd.f32 %v3897, %v3909
        %v3911 = vpop.f32.mrf.mxu0
        %3912 = vdwg.mxu0
        %3913 = vmatpush.bf16.msra.mxu0 %v3107
        %3914 = vmatpush.bf16.msra.mxu0 %v3103
        %3915 = vmatpush.bf16.msra.mxu0 %v3099
        %3916 = vmatpush.bf16.msra.mxu0 %v3095
        %3917 = vmatpush.bf16.msra.mxu0 %v3091
        %3918 = vmatpush.bf16.msra.mxu0 %v3087
        %3919 = vmatpush.bf16.msra.mxu0 %v3083
        %3920 = vmatpush.bf16.msra.mxu0 %v3079
        %3921 = vmatmul.bf16.gmra.mxu0 %v1201
        %v3922 = vpop.f32.mrf.mxu0
        %v3923 = vadd.f32 %v3910, %v3922
        %v3924 = vpop.f32.mrf.mxu0
        %3925 = vdwg.mxu0
        %3926 = vmatpush.bf16.msra.mxu0 %v3139
        %3927 = vmatpush.bf16.msra.mxu0 %v3135
        %3928 = vmatpush.bf16.msra.mxu0 %v3131
        %3929 = vmatpush.bf16.msra.mxu0 %v3127
        %3930 = vmatpush.bf16.msra.mxu0 %v3123
        %3931 = vmatpush.bf16.msra.mxu0 %v3119
        %3932 = vmatpush.bf16.msra.mxu0 %v3115
        %3933 = vmatpush.bf16.msra.mxu0 %v3111
        %3934 = vmatmul.bf16.gmra.mxu0 %v1202
        %v3935 = vpop.f32.mrf.mxu0
        %v3936 = vadd.f32 %v3923, %v3935
        %v3937 = vpop.f32.mrf.mxu0
        %3938 = vdwg.mxu0
        %3939 = vmatpush.bf16.msra.mxu0 %v3171
        %3940 = vmatpush.bf16.msra.mxu0 %v3167
        %3941 = vmatpush.bf16.msra.mxu0 %v3163
        %3942 = vmatpush.bf16.msra.mxu0 %v3159
        %3943 = vmatpush.bf16.msra.mxu0 %v3155
        %3944 = vmatpush.bf16.msra.mxu0 %v3151
        %3945 = vmatpush.bf16.msra.mxu0 %v3147
        %3946 = vmatpush.bf16.msra.mxu0 %v3143
        %3947 = vmatmul.bf16.gmra.mxu0 %v1203
        %v3948 = vpop.f32.mrf.mxu0
        %v3949 = vadd.f32 %v3936, %v3948
        %v3950 = vpop.f32.mrf.mxu0
        %3951 = vdwg.mxu0
        %3952 = vmatpush.bf16.msra.mxu0 %v3203
        %3953 = vmatpush.bf16.msra.mxu0 %v3199
        %3954 = vmatpush.bf16.msra.mxu0 %v3195
        %3955 = vmatpush.bf16.msra.mxu0 %v3191
        %3956 = vmatpush.bf16.msra.mxu0 %v3187
        %3957 = vmatpush.bf16.msra.mxu0 %v3183
        %3958 = vmatpush.bf16.msra.mxu0 %v3179
        %3959 = vmatpush.bf16.msra.mxu0 %v3175
        %3960 = vmatmul.bf16.gmra.mxu0 %v1204
        %v3961 = vpop.f32.mrf.mxu0
        %v3962 = vadd.f32 %v3949, %v3961
        %v3963 = vpop.f32.mrf.mxu0
        %3964 = vdwg.mxu0
        %3965 = vmatpush.bf16.msra.mxu0 %v3235
        %3966 = vmatpush.bf16.msra.mxu0 %v3231
        %3967 = vmatpush.bf16.msra.mxu0 %v3227
        %3968 = vmatpush.bf16.msra.mxu0 %v3223
        %3969 = vmatpush.bf16.msra.mxu0 %v3219
        %3970 = vmatpush.bf16.msra.mxu0 %v3215
        %3971 = vmatpush.bf16.msra.mxu0 %v3211
        %3972 = vmatpush.bf16.msra.mxu0 %v3207
        %3973 = vmatmul.bf16.gmra.mxu0 %v1205
        %v3974 = vpop.f32.mrf.mxu0
        %v3975 = vadd.f32 %v3962, %v3974
        %v3976 = vpop.f32.mrf.mxu0
        %3977 = vdwg.mxu0
        %3978 = vmatpush.bf16.msra.mxu0 %v3267
        %3979 = vmatpush.bf16.msra.mxu0 %v3263
        %3980 = vmatpush.bf16.msra.mxu0 %v3259
        %3981 = vmatpush.bf16.msra.mxu0 %v3255
        %3982 = vmatpush.bf16.msra.mxu0 %v3251
        %3983 = vmatpush.bf16.msra.mxu0 %v3247
        %3984 = vmatpush.bf16.msra.mxu0 %v3243
        %3985 = vmatpush.bf16.msra.mxu0 %v3239
        %3986 = vmatmul.bf16.gmra.mxu0 %v1206
        %v3987 = vpop.f32.mrf.mxu0
        %v3988 = vadd.f32 %v3975, %v3987
        %v3989 = vpop.f32.mrf.mxu0
        %3990 = vdwg.mxu0
        %3991 = vmatpush.bf16.msra.mxu0 %v2788
        %3992 = vmatpush.bf16.msra.mxu0 %v2784
        %3993 = vmatpush.bf16.msra.mxu0 %v2780
        %3994 = vmatpush.bf16.msra.mxu0 %v2776
        %3995 = vmatpush.bf16.msra.mxu0 %v2772
        %3996 = vmatpush.bf16.msra.mxu0 %v2768
        %3997 = vmatpush.bf16.msra.mxu0 %v2764
        %3998 = vmatpush.bf16.msra.mxu0 %v2760
        %3999 = vmatmul.bf16.gmra.mxu0 %v1191
        %v4000 = vpop.f32.mrf.mxu0
        %v4001 = vadd.f32 %v1160, %v4000
        %v4002 = vpop.f32.mrf.mxu0
        %4003 = vdwg.mxu0
        %4004 = vmatpush.bf16.msra.mxu0 %v2820
        %4005 = vmatpush.bf16.msra.mxu0 %v2816
        %4006 = vmatpush.bf16.msra.mxu0 %v2812
        %4007 = vmatpush.bf16.msra.mxu0 %v2808
        %4008 = vmatpush.bf16.msra.mxu0 %v2804
        %4009 = vmatpush.bf16.msra.mxu0 %v2800
        %4010 = vmatpush.bf16.msra.mxu0 %v2796
        %4011 = vmatpush.bf16.msra.mxu0 %v2792
        %4012 = vmatmul.bf16.gmra.mxu0 %v1192
        %v4013 = vpop.f32.mrf.mxu0
        %v4014 = vadd.f32 %v4001, %v4013
        %v4015 = vpop.f32.mrf.mxu0
        %4016 = vdwg.mxu0
        %4017 = vmatpush.bf16.msra.mxu0 %v2852
        %4018 = vmatpush.bf16.msra.mxu0 %v2848
        %4019 = vmatpush.bf16.msra.mxu0 %v2844
        %4020 = vmatpush.bf16.msra.mxu0 %v2840
        %4021 = vmatpush.bf16.msra.mxu0 %v2836
        %4022 = vmatpush.bf16.msra.mxu0 %v2832
        %4023 = vmatpush.bf16.msra.mxu0 %v2828
        %4024 = vmatpush.bf16.msra.mxu0 %v2824
        %4025 = vmatmul.bf16.gmra.mxu0 %v1193
        %v4026 = vpop.f32.mrf.mxu0
        %v4027 = vadd.f32 %v4014, %v4026
        %v4028 = vpop.f32.mrf.mxu0
        %4029 = vdwg.mxu0
        %4030 = vmatpush.bf16.msra.mxu0 %v2884
        %4031 = vmatpush.bf16.msra.mxu0 %v2880
        %4032 = vmatpush.bf16.msra.mxu0 %v2876
        %4033 = vmatpush.bf16.msra.mxu0 %v2872
        %4034 = vmatpush.bf16.msra.mxu0 %v2868
        %4035 = vmatpush.bf16.msra.mxu0 %v2864
        %4036 = vmatpush.bf16.msra.mxu0 %v2860
        %4037 = vmatpush.bf16.msra.mxu0 %v2856
        %4038 = vmatmul.bf16.gmra.mxu0 %v1194
        %v4039 = vpop.f32.mrf.mxu0
        %v4040 = vadd.f32 %v4027, %v4039
        %v4041 = vpop.f32.mrf.mxu0
        %4042 = vdwg.mxu0
        %4043 = vmatpush.bf16.msra.mxu0 %v2916
        %4044 = vmatpush.bf16.msra.mxu0 %v2912
        %4045 = vmatpush.bf16.msra.mxu0 %v2908
        %4046 = vmatpush.bf16.msra.mxu0 %v2904
        %4047 = vmatpush.bf16.msra.mxu0 %v2900
        %4048 = vmatpush.bf16.msra.mxu0 %v2896
        %4049 = vmatpush.bf16.msra.mxu0 %v2892
        %4050 = vmatpush.bf16.msra.mxu0 %v2888
        %4051 = vmatmul.bf16.gmra.mxu0 %v1195
        %v4052 = vpop.f32.mrf.mxu0
        %v4053 = vadd.f32 %v4040, %v4052
        %v4054 = vpop.f32.mrf.mxu0
        %4055 = vdwg.mxu0
        %4056 = vmatpush.bf16.msra.mxu0 %v2948
        %4057 = vmatpush.bf16.msra.mxu0 %v2944
        %4058 = vmatpush.bf16.msra.mxu0 %v2940
        %4059 = vmatpush.bf16.msra.mxu0 %v2936
        %4060 = vmatpush.bf16.msra.mxu0 %v2932
        %4061 = vmatpush.bf16.msra.mxu0 %v2928
        %4062 = vmatpush.bf16.msra.mxu0 %v2924
        %4063 = vmatpush.bf16.msra.mxu0 %v2920
        %4064 = vmatmul.bf16.gmra.mxu0 %v1196
        %v4065 = vpop.f32.mrf.mxu0
        %v4066 = vadd.f32 %v4053, %v4065
        %v4067 = vpop.f32.mrf.mxu0
        %4068 = vdwg.mxu0
        %4069 = vmatpush.bf16.msra.mxu0 %v2980
        %4070 = vmatpush.bf16.msra.mxu0 %v2976
        %4071 = vmatpush.bf16.msra.mxu0 %v2972
        %4072 = vmatpush.bf16.msra.mxu0 %v2968
        %4073 = vmatpush.bf16.msra.mxu0 %v2964
        %4074 = vmatpush.bf16.msra.mxu0 %v2960
        %4075 = vmatpush.bf16.msra.mxu0 %v2956
        %4076 = vmatpush.bf16.msra.mxu0 %v2952
        %4077 = vmatmul.bf16.gmra.mxu0 %v1197
        %v4078 = vpop.f32.mrf.mxu0
        %v4079 = vadd.f32 %v4066, %v4078
        %v4080 = vpop.f32.mrf.mxu0
        %4081 = vdwg.mxu0
        %4082 = vmatpush.bf16.msra.mxu0 %v3012
        %4083 = vmatpush.bf16.msra.mxu0 %v3008
        %4084 = vmatpush.bf16.msra.mxu0 %v3004
        %4085 = vmatpush.bf16.msra.mxu0 %v3000
        %4086 = vmatpush.bf16.msra.mxu0 %v2996
        %4087 = vmatpush.bf16.msra.mxu0 %v2992
        %4088 = vmatpush.bf16.msra.mxu0 %v2988
        %4089 = vmatpush.bf16.msra.mxu0 %v2984
        %4090 = vmatmul.bf16.gmra.mxu0 %v1198
        %v4091 = vpop.f32.mrf.mxu0
        %v4092 = vadd.f32 %v4079, %v4091
        %v4093 = vpop.f32.mrf.mxu0
        %4094 = vdwg.mxu0
        %4095 = vmatpush.bf16.msra.mxu0 %v3044
        %4096 = vmatpush.bf16.msra.mxu0 %v3040
        %4097 = vmatpush.bf16.msra.mxu0 %v3036
        %4098 = vmatpush.bf16.msra.mxu0 %v3032
        %4099 = vmatpush.bf16.msra.mxu0 %v3028
        %4100 = vmatpush.bf16.msra.mxu0 %v3024
        %4101 = vmatpush.bf16.msra.mxu0 %v3020
        %4102 = vmatpush.bf16.msra.mxu0 %v3016
        %4103 = vmatmul.bf16.gmra.mxu0 %v1199
        %v4104 = vpop.f32.mrf.mxu0
        %v4105 = vadd.f32 %v4092, %v4104
        %v4106 = vpop.f32.mrf.mxu0
        %4107 = vdwg.mxu0
        %4108 = vmatpush.bf16.msra.mxu0 %v3076
        %4109 = vmatpush.bf16.msra.mxu0 %v3072
        %4110 = vmatpush.bf16.msra.mxu0 %v3068
        %4111 = vmatpush.bf16.msra.mxu0 %v3064
        %4112 = vmatpush.bf16.msra.mxu0 %v3060
        %4113 = vmatpush.bf16.msra.mxu0 %v3056
        %4114 = vmatpush.bf16.msra.mxu0 %v3052
        %4115 = vmatpush.bf16.msra.mxu0 %v3048
        %4116 = vmatmul.bf16.gmra.mxu0 %v1200
        %v4117 = vpop.f32.mrf.mxu0
        %v4118 = vadd.f32 %v4105, %v4117
        %v4119 = vpop.f32.mrf.mxu0
        %4120 = vdwg.mxu0
        %4121 = vmatpush.bf16.msra.mxu0 %v3108
        %4122 = vmatpush.bf16.msra.mxu0 %v3104
        %4123 = vmatpush.bf16.msra.mxu0 %v3100
        %4124 = vmatpush.bf16.msra.mxu0 %v3096
        %4125 = vmatpush.bf16.msra.mxu0 %v3092
        %4126 = vmatpush.bf16.msra.mxu0 %v3088
        %4127 = vmatpush.bf16.msra.mxu0 %v3084
        %4128 = vmatpush.bf16.msra.mxu0 %v3080
        %4129 = vmatmul.bf16.gmra.mxu0 %v1201
        %v4130 = vpop.f32.mrf.mxu0
        %v4131 = vadd.f32 %v4118, %v4130
        %v4132 = vpop.f32.mrf.mxu0
        %4133 = vdwg.mxu0
        %4134 = vmatpush.bf16.msra.mxu0 %v3140
        %4135 = vmatpush.bf16.msra.mxu0 %v3136
        %4136 = vmatpush.bf16.msra.mxu0 %v3132
        %4137 = vmatpush.bf16.msra.mxu0 %v3128
        %4138 = vmatpush.bf16.msra.mxu0 %v3124
        %4139 = vmatpush.bf16.msra.mxu0 %v3120
        %4140 = vmatpush.bf16.msra.mxu0 %v3116
        %4141 = vmatpush.bf16.msra.mxu0 %v3112
        %4142 = vmatmul.bf16.gmra.mxu0 %v1202
        %v4143 = vpop.f32.mrf.mxu0
        %v4144 = vadd.f32 %v4131, %v4143
        %v4145 = vpop.f32.mrf.mxu0
        %4146 = vdwg.mxu0
        %4147 = vmatpush.bf16.msra.mxu0 %v3172
        %4148 = vmatpush.bf16.msra.mxu0 %v3168
        %4149 = vmatpush.bf16.msra.mxu0 %v3164
        %4150 = vmatpush.bf16.msra.mxu0 %v3160
        %4151 = vmatpush.bf16.msra.mxu0 %v3156
        %4152 = vmatpush.bf16.msra.mxu0 %v3152
        %4153 = vmatpush.bf16.msra.mxu0 %v3148
        %4154 = vmatpush.bf16.msra.mxu0 %v3144
        %4155 = vmatmul.bf16.gmra.mxu0 %v1203
        %v4156 = vpop.f32.mrf.mxu0
        %v4157 = vadd.f32 %v4144, %v4156
        %v4158 = vpop.f32.mrf.mxu0
        %4159 = vdwg.mxu0
        %4160 = vmatpush.bf16.msra.mxu0 %v3204
        %4161 = vmatpush.bf16.msra.mxu0 %v3200
        %4162 = vmatpush.bf16.msra.mxu0 %v3196
        %4163 = vmatpush.bf16.msra.mxu0 %v3192
        %4164 = vmatpush.bf16.msra.mxu0 %v3188
        %4165 = vmatpush.bf16.msra.mxu0 %v3184
        %4166 = vmatpush.bf16.msra.mxu0 %v3180
        %4167 = vmatpush.bf16.msra.mxu0 %v3176
        %4168 = vmatmul.bf16.gmra.mxu0 %v1204
        %v4169 = vpop.f32.mrf.mxu0
        %v4170 = vadd.f32 %v4157, %v4169
        %v4171 = vpop.f32.mrf.mxu0
        %4172 = vdwg.mxu0
        %4173 = vmatpush.bf16.msra.mxu0 %v3236
        %4174 = vmatpush.bf16.msra.mxu0 %v3232
        %4175 = vmatpush.bf16.msra.mxu0 %v3228
        %4176 = vmatpush.bf16.msra.mxu0 %v3224
        %4177 = vmatpush.bf16.msra.mxu0 %v3220
        %4178 = vmatpush.bf16.msra.mxu0 %v3216
        %4179 = vmatpush.bf16.msra.mxu0 %v3212
        %4180 = vmatpush.bf16.msra.mxu0 %v3208
        %4181 = vmatmul.bf16.gmra.mxu0 %v1205
        %v4182 = vpop.f32.mrf.mxu0
        %v4183 = vadd.f32 %v4170, %v4182
        %v4184 = vpop.f32.mrf.mxu0
        %4185 = vdwg.mxu0
        %4186 = vmatpush.bf16.msra.mxu0 %v3268
        %4187 = vmatpush.bf16.msra.mxu0 %v3264
        %4188 = vmatpush.bf16.msra.mxu0 %v3260
        %4189 = vmatpush.bf16.msra.mxu0 %v3256
        %4190 = vmatpush.bf16.msra.mxu0 %v3252
        %4191 = vmatpush.bf16.msra.mxu0 %v3248
        %4192 = vmatpush.bf16.msra.mxu0 %v3244
        %4193 = vmatpush.bf16.msra.mxu0 %v3240
        %4194 = vmatmul.bf16.gmra.mxu0 %v1206
        %v4195 = vpop.f32.mrf.mxu0
        %v4196 = vadd.f32 %v4183, %v4195
        %v4197 = vpop.f32.mrf.mxu0
        %4198 = vdwg.mxu0
        %4199 = vmatpush.bf16.msra.mxu0 %v2789
        %4200 = vmatpush.bf16.msra.mxu0 %v2785
        %4201 = vmatpush.bf16.msra.mxu0 %v2781
        %4202 = vmatpush.bf16.msra.mxu0 %v2777
        %4203 = vmatpush.bf16.msra.mxu0 %v2773
        %4204 = vmatpush.bf16.msra.mxu0 %v2769
        %4205 = vmatpush.bf16.msra.mxu0 %v2765
        %4206 = vmatpush.bf16.msra.mxu0 %v2761
        %4207 = vmatmul.bf16.gmra.mxu0 %v1191
        %v4208 = vpop.f32.mrf.mxu0
        %v4209 = vadd.f32 %v1161, %v4208
        %v4210 = vpop.f32.mrf.mxu0
        %4211 = vdwg.mxu0
        %4212 = vmatpush.bf16.msra.mxu0 %v2821
        %4213 = vmatpush.bf16.msra.mxu0 %v2817
        %4214 = vmatpush.bf16.msra.mxu0 %v2813
        %4215 = vmatpush.bf16.msra.mxu0 %v2809
        %4216 = vmatpush.bf16.msra.mxu0 %v2805
        %4217 = vmatpush.bf16.msra.mxu0 %v2801
        %4218 = vmatpush.bf16.msra.mxu0 %v2797
        %4219 = vmatpush.bf16.msra.mxu0 %v2793
        %4220 = vmatmul.bf16.gmra.mxu0 %v1192
        %v4221 = vpop.f32.mrf.mxu0
        %v4222 = vadd.f32 %v4209, %v4221
        %v4223 = vpop.f32.mrf.mxu0
        %4224 = vdwg.mxu0
        %4225 = vmatpush.bf16.msra.mxu0 %v2853
        %4226 = vmatpush.bf16.msra.mxu0 %v2849
        %4227 = vmatpush.bf16.msra.mxu0 %v2845
        %4228 = vmatpush.bf16.msra.mxu0 %v2841
        %4229 = vmatpush.bf16.msra.mxu0 %v2837
        %4230 = vmatpush.bf16.msra.mxu0 %v2833
        %4231 = vmatpush.bf16.msra.mxu0 %v2829
        %4232 = vmatpush.bf16.msra.mxu0 %v2825
        %4233 = vmatmul.bf16.gmra.mxu0 %v1193
        %v4234 = vpop.f32.mrf.mxu0
        %v4235 = vadd.f32 %v4222, %v4234
        %v4236 = vpop.f32.mrf.mxu0
        %4237 = vdwg.mxu0
        %4238 = vmatpush.bf16.msra.mxu0 %v2885
        %4239 = vmatpush.bf16.msra.mxu0 %v2881
        %4240 = vmatpush.bf16.msra.mxu0 %v2877
        %4241 = vmatpush.bf16.msra.mxu0 %v2873
        %4242 = vmatpush.bf16.msra.mxu0 %v2869
        %4243 = vmatpush.bf16.msra.mxu0 %v2865
        %4244 = vmatpush.bf16.msra.mxu0 %v2861
        %4245 = vmatpush.bf16.msra.mxu0 %v2857
        %4246 = vmatmul.bf16.gmra.mxu0 %v1194
        %v4247 = vpop.f32.mrf.mxu0
        %v4248 = vadd.f32 %v4235, %v4247
        %v4249 = vpop.f32.mrf.mxu0
        %4250 = vdwg.mxu0
        %4251 = vmatpush.bf16.msra.mxu0 %v2917
        %4252 = vmatpush.bf16.msra.mxu0 %v2913
        %4253 = vmatpush.bf16.msra.mxu0 %v2909
        %4254 = vmatpush.bf16.msra.mxu0 %v2905
        %4255 = vmatpush.bf16.msra.mxu0 %v2901
        %4256 = vmatpush.bf16.msra.mxu0 %v2897
        %4257 = vmatpush.bf16.msra.mxu0 %v2893
        %4258 = vmatpush.bf16.msra.mxu0 %v2889
        %4259 = vmatmul.bf16.gmra.mxu0 %v1195
        %v4260 = vpop.f32.mrf.mxu0
        %v4261 = vadd.f32 %v4248, %v4260
        %v4262 = vpop.f32.mrf.mxu0
        %4263 = vdwg.mxu0
        %4264 = vmatpush.bf16.msra.mxu0 %v2949
        %4265 = vmatpush.bf16.msra.mxu0 %v2945
        %4266 = vmatpush.bf16.msra.mxu0 %v2941
        %4267 = vmatpush.bf16.msra.mxu0 %v2937
        %4268 = vmatpush.bf16.msra.mxu0 %v2933
        %4269 = vmatpush.bf16.msra.mxu0 %v2929
        %4270 = vmatpush.bf16.msra.mxu0 %v2925
        %4271 = vmatpush.bf16.msra.mxu0 %v2921
        %4272 = vmatmul.bf16.gmra.mxu0 %v1196
        %v4273 = vpop.f32.mrf.mxu0
        %v4274 = vadd.f32 %v4261, %v4273
        %v4275 = vpop.f32.mrf.mxu0
        %4276 = vdwg.mxu0
        %4277 = vmatpush.bf16.msra.mxu0 %v2981
        %4278 = vmatpush.bf16.msra.mxu0 %v2977
        %4279 = vmatpush.bf16.msra.mxu0 %v2973
        %4280 = vmatpush.bf16.msra.mxu0 %v2969
        %4281 = vmatpush.bf16.msra.mxu0 %v2965
        %4282 = vmatpush.bf16.msra.mxu0 %v2961
        %4283 = vmatpush.bf16.msra.mxu0 %v2957
        %4284 = vmatpush.bf16.msra.mxu0 %v2953
        %4285 = vmatmul.bf16.gmra.mxu0 %v1197
        %v4286 = vpop.f32.mrf.mxu0
        %v4287 = vadd.f32 %v4274, %v4286
        %v4288 = vpop.f32.mrf.mxu0
        %4289 = vdwg.mxu0
        %4290 = vmatpush.bf16.msra.mxu0 %v3013
        %4291 = vmatpush.bf16.msra.mxu0 %v3009
        %4292 = vmatpush.bf16.msra.mxu0 %v3005
        %4293 = vmatpush.bf16.msra.mxu0 %v3001
        %4294 = vmatpush.bf16.msra.mxu0 %v2997
        %4295 = vmatpush.bf16.msra.mxu0 %v2993
        %4296 = vmatpush.bf16.msra.mxu0 %v2989
        %4297 = vmatpush.bf16.msra.mxu0 %v2985
        %4298 = vmatmul.bf16.gmra.mxu0 %v1198
        %v4299 = vpop.f32.mrf.mxu0
        %v4300 = vadd.f32 %v4287, %v4299
        %v4301 = vpop.f32.mrf.mxu0
        %4302 = vdwg.mxu0
        %4303 = vmatpush.bf16.msra.mxu0 %v3045
        %4304 = vmatpush.bf16.msra.mxu0 %v3041
        %4305 = vmatpush.bf16.msra.mxu0 %v3037
        %4306 = vmatpush.bf16.msra.mxu0 %v3033
        %4307 = vmatpush.bf16.msra.mxu0 %v3029
        %4308 = vmatpush.bf16.msra.mxu0 %v3025
        %4309 = vmatpush.bf16.msra.mxu0 %v3021
        %4310 = vmatpush.bf16.msra.mxu0 %v3017
        %4311 = vmatmul.bf16.gmra.mxu0 %v1199
        %v4312 = vpop.f32.mrf.mxu0
        %v4313 = vadd.f32 %v4300, %v4312
        %v4314 = vpop.f32.mrf.mxu0
        %4315 = vdwg.mxu0
        %4316 = vmatpush.bf16.msra.mxu0 %v3077
        %4317 = vmatpush.bf16.msra.mxu0 %v3073
        %4318 = vmatpush.bf16.msra.mxu0 %v3069
        %4319 = vmatpush.bf16.msra.mxu0 %v3065
        %4320 = vmatpush.bf16.msra.mxu0 %v3061
        %4321 = vmatpush.bf16.msra.mxu0 %v3057
        %4322 = vmatpush.bf16.msra.mxu0 %v3053
        %4323 = vmatpush.bf16.msra.mxu0 %v3049
        %4324 = vmatmul.bf16.gmra.mxu0 %v1200
        %v4325 = vpop.f32.mrf.mxu0
        %v4326 = vadd.f32 %v4313, %v4325
        %v4327 = vpop.f32.mrf.mxu0
        %4328 = vdwg.mxu0
        %4329 = vmatpush.bf16.msra.mxu0 %v3109
        %4330 = vmatpush.bf16.msra.mxu0 %v3105
        %4331 = vmatpush.bf16.msra.mxu0 %v3101
        %4332 = vmatpush.bf16.msra.mxu0 %v3097
        %4333 = vmatpush.bf16.msra.mxu0 %v3093
        %4334 = vmatpush.bf16.msra.mxu0 %v3089
        %4335 = vmatpush.bf16.msra.mxu0 %v3085
        %4336 = vmatpush.bf16.msra.mxu0 %v3081
        %4337 = vmatmul.bf16.gmra.mxu0 %v1201
        %v4338 = vpop.f32.mrf.mxu0
        %v4339 = vadd.f32 %v4326, %v4338
        %v4340 = vpop.f32.mrf.mxu0
        %4341 = vdwg.mxu0
        %4342 = vmatpush.bf16.msra.mxu0 %v3141
        %4343 = vmatpush.bf16.msra.mxu0 %v3137
        %4344 = vmatpush.bf16.msra.mxu0 %v3133
        %4345 = vmatpush.bf16.msra.mxu0 %v3129
        %4346 = vmatpush.bf16.msra.mxu0 %v3125
        %4347 = vmatpush.bf16.msra.mxu0 %v3121
        %4348 = vmatpush.bf16.msra.mxu0 %v3117
        %4349 = vmatpush.bf16.msra.mxu0 %v3113
        %4350 = vmatmul.bf16.gmra.mxu0 %v1202
        %v4351 = vpop.f32.mrf.mxu0
        %v4352 = vadd.f32 %v4339, %v4351
        %v4353 = vpop.f32.mrf.mxu0
        %4354 = vdwg.mxu0
        %4355 = vmatpush.bf16.msra.mxu0 %v3173
        %4356 = vmatpush.bf16.msra.mxu0 %v3169
        %4357 = vmatpush.bf16.msra.mxu0 %v3165
        %4358 = vmatpush.bf16.msra.mxu0 %v3161
        %4359 = vmatpush.bf16.msra.mxu0 %v3157
        %4360 = vmatpush.bf16.msra.mxu0 %v3153
        %4361 = vmatpush.bf16.msra.mxu0 %v3149
        %4362 = vmatpush.bf16.msra.mxu0 %v3145
        %4363 = vmatmul.bf16.gmra.mxu0 %v1203
        %v4364 = vpop.f32.mrf.mxu0
        %v4365 = vadd.f32 %v4352, %v4364
        %v4366 = vpop.f32.mrf.mxu0
        %4367 = vdwg.mxu0
        %4368 = vmatpush.bf16.msra.mxu0 %v3205
        %4369 = vmatpush.bf16.msra.mxu0 %v3201
        %4370 = vmatpush.bf16.msra.mxu0 %v3197
        %4371 = vmatpush.bf16.msra.mxu0 %v3193
        %4372 = vmatpush.bf16.msra.mxu0 %v3189
        %4373 = vmatpush.bf16.msra.mxu0 %v3185
        %4374 = vmatpush.bf16.msra.mxu0 %v3181
        %4375 = vmatpush.bf16.msra.mxu0 %v3177
        %4376 = vmatmul.bf16.gmra.mxu0 %v1204
        %v4377 = vpop.f32.mrf.mxu0
        %v4378 = vadd.f32 %v4365, %v4377
        %v4379 = vpop.f32.mrf.mxu0
        %4380 = vdwg.mxu0
        %4381 = vmatpush.bf16.msra.mxu0 %v3237
        %4382 = vmatpush.bf16.msra.mxu0 %v3233
        %4383 = vmatpush.bf16.msra.mxu0 %v3229
        %4384 = vmatpush.bf16.msra.mxu0 %v3225
        %4385 = vmatpush.bf16.msra.mxu0 %v3221
        %4386 = vmatpush.bf16.msra.mxu0 %v3217
        %4387 = vmatpush.bf16.msra.mxu0 %v3213
        %4388 = vmatpush.bf16.msra.mxu0 %v3209
        %4389 = vmatmul.bf16.gmra.mxu0 %v1205
        %v4390 = vpop.f32.mrf.mxu0
        %v4391 = vadd.f32 %v4378, %v4390
        %v4392 = vpop.f32.mrf.mxu0
        %4393 = vdwg.mxu0
        %4394 = vmatpush.bf16.msra.mxu0 %v3269
        %4395 = vmatpush.bf16.msra.mxu0 %v3265
        %4396 = vmatpush.bf16.msra.mxu0 %v3261
        %4397 = vmatpush.bf16.msra.mxu0 %v3257
        %4398 = vmatpush.bf16.msra.mxu0 %v3253
        %4399 = vmatpush.bf16.msra.mxu0 %v3249
        %4400 = vmatpush.bf16.msra.mxu0 %v3245
        %4401 = vmatpush.bf16.msra.mxu0 %v3241
        %4402 = vmatmul.bf16.gmra.mxu0 %v1206
        %v4403 = vpop.f32.mrf.mxu0
        %v4404 = vadd.f32 %v4391, %v4403
        %v4405 = vpop.f32.mrf.mxu0
        %4406 = vdwg.mxu0
        %4407 = vmatpush.bf16.msra.mxu0 %v2790
        %4408 = vmatpush.bf16.msra.mxu0 %v2786
        %4409 = vmatpush.bf16.msra.mxu0 %v2782
        %4410 = vmatpush.bf16.msra.mxu0 %v2778
        %4411 = vmatpush.bf16.msra.mxu0 %v2774
        %4412 = vmatpush.bf16.msra.mxu0 %v2770
        %4413 = vmatpush.bf16.msra.mxu0 %v2766
        %4414 = vmatpush.bf16.msra.mxu0 %v2762
        %4415 = vmatmul.bf16.gmra.mxu0 %v1191
        %v4416 = vpop.f32.mrf.mxu0
        %v4417 = vadd.f32 %v1162, %v4416
        %v4418 = vpop.f32.mrf.mxu0
        %4419 = vdwg.mxu0
        %4420 = vmatpush.bf16.msra.mxu0 %v2822
        %4421 = vmatpush.bf16.msra.mxu0 %v2818
        %4422 = vmatpush.bf16.msra.mxu0 %v2814
        %4423 = vmatpush.bf16.msra.mxu0 %v2810
        %4424 = vmatpush.bf16.msra.mxu0 %v2806
        %4425 = vmatpush.bf16.msra.mxu0 %v2802
        %4426 = vmatpush.bf16.msra.mxu0 %v2798
        %4427 = vmatpush.bf16.msra.mxu0 %v2794
        %4428 = vmatmul.bf16.gmra.mxu0 %v1192
        %v4429 = vpop.f32.mrf.mxu0
        %v4430 = vadd.f32 %v4417, %v4429
        %v4431 = vpop.f32.mrf.mxu0
        %4432 = vdwg.mxu0
        %4433 = vmatpush.bf16.msra.mxu0 %v2854
        %4434 = vmatpush.bf16.msra.mxu0 %v2850
        %4435 = vmatpush.bf16.msra.mxu0 %v2846
        %4436 = vmatpush.bf16.msra.mxu0 %v2842
        %4437 = vmatpush.bf16.msra.mxu0 %v2838
        %4438 = vmatpush.bf16.msra.mxu0 %v2834
        %4439 = vmatpush.bf16.msra.mxu0 %v2830
        %4440 = vmatpush.bf16.msra.mxu0 %v2826
        %4441 = vmatmul.bf16.gmra.mxu0 %v1193
        %v4442 = vpop.f32.mrf.mxu0
        %v4443 = vadd.f32 %v4430, %v4442
        %v4444 = vpop.f32.mrf.mxu0
        %4445 = vdwg.mxu0
        %4446 = vmatpush.bf16.msra.mxu0 %v2886
        %4447 = vmatpush.bf16.msra.mxu0 %v2882
        %4448 = vmatpush.bf16.msra.mxu0 %v2878
        %4449 = vmatpush.bf16.msra.mxu0 %v2874
        %4450 = vmatpush.bf16.msra.mxu0 %v2870
        %4451 = vmatpush.bf16.msra.mxu0 %v2866
        %4452 = vmatpush.bf16.msra.mxu0 %v2862
        %4453 = vmatpush.bf16.msra.mxu0 %v2858
        %4454 = vmatmul.bf16.gmra.mxu0 %v1194
        %v4455 = vpop.f32.mrf.mxu0
        %v4456 = vadd.f32 %v4443, %v4455
        %v4457 = vpop.f32.mrf.mxu0
        %4458 = vdwg.mxu0
        %4459 = vmatpush.bf16.msra.mxu0 %v2918
        %4460 = vmatpush.bf16.msra.mxu0 %v2914
        %4461 = vmatpush.bf16.msra.mxu0 %v2910
        %4462 = vmatpush.bf16.msra.mxu0 %v2906
        %4463 = vmatpush.bf16.msra.mxu0 %v2902
        %4464 = vmatpush.bf16.msra.mxu0 %v2898
        %4465 = vmatpush.bf16.msra.mxu0 %v2894
        %4466 = vmatpush.bf16.msra.mxu0 %v2890
        %4467 = vmatmul.bf16.gmra.mxu0 %v1195
        %v4468 = vpop.f32.mrf.mxu0
        %v4469 = vadd.f32 %v4456, %v4468
        %v4470 = vpop.f32.mrf.mxu0
        %4471 = vdwg.mxu0
        %4472 = vmatpush.bf16.msra.mxu0 %v2950
        %4473 = vmatpush.bf16.msra.mxu0 %v2946
        %4474 = vmatpush.bf16.msra.mxu0 %v2942
        %4475 = vmatpush.bf16.msra.mxu0 %v2938
        %4476 = vmatpush.bf16.msra.mxu0 %v2934
        %4477 = vmatpush.bf16.msra.mxu0 %v2930
        %4478 = vmatpush.bf16.msra.mxu0 %v2926
        %4479 = vmatpush.bf16.msra.mxu0 %v2922
        %4480 = vmatmul.bf16.gmra.mxu0 %v1196
        %v4481 = vpop.f32.mrf.mxu0
        %v4482 = vadd.f32 %v4469, %v4481
        %v4483 = vpop.f32.mrf.mxu0
        %4484 = vdwg.mxu0
        %4485 = vmatpush.bf16.msra.mxu0 %v2982
        %4486 = vmatpush.bf16.msra.mxu0 %v2978
        %4487 = vmatpush.bf16.msra.mxu0 %v2974
        %4488 = vmatpush.bf16.msra.mxu0 %v2970
        %4489 = vmatpush.bf16.msra.mxu0 %v2966
        %4490 = vmatpush.bf16.msra.mxu0 %v2962
        %4491 = vmatpush.bf16.msra.mxu0 %v2958
        %4492 = vmatpush.bf16.msra.mxu0 %v2954
        %4493 = vmatmul.bf16.gmra.mxu0 %v1197
        %v4494 = vpop.f32.mrf.mxu0
        %v4495 = vadd.f32 %v4482, %v4494
        %v4496 = vpop.f32.mrf.mxu0
        %4497 = vdwg.mxu0
        %4498 = vmatpush.bf16.msra.mxu0 %v3014
        %4499 = vmatpush.bf16.msra.mxu0 %v3010
        %4500 = vmatpush.bf16.msra.mxu0 %v3006
        %4501 = vmatpush.bf16.msra.mxu0 %v3002
        %4502 = vmatpush.bf16.msra.mxu0 %v2998
        %4503 = vmatpush.bf16.msra.mxu0 %v2994
        %4504 = vmatpush.bf16.msra.mxu0 %v2990
        %4505 = vmatpush.bf16.msra.mxu0 %v2986
        %4506 = vmatmul.bf16.gmra.mxu0 %v1198
        %v4507 = vpop.f32.mrf.mxu0
        %v4508 = vadd.f32 %v4495, %v4507
        %v4509 = vpop.f32.mrf.mxu0
        %4510 = vdwg.mxu0
        %4511 = vmatpush.bf16.msra.mxu0 %v3046
        %4512 = vmatpush.bf16.msra.mxu0 %v3042
        %4513 = vmatpush.bf16.msra.mxu0 %v3038
        %4514 = vmatpush.bf16.msra.mxu0 %v3034
        %4515 = vmatpush.bf16.msra.mxu0 %v3030
        %4516 = vmatpush.bf16.msra.mxu0 %v3026
        %4517 = vmatpush.bf16.msra.mxu0 %v3022
        %4518 = vmatpush.bf16.msra.mxu0 %v3018
        %4519 = vmatmul.bf16.gmra.mxu0 %v1199
        %v4520 = vpop.f32.mrf.mxu0
        %v4521 = vadd.f32 %v4508, %v4520
        %v4522 = vpop.f32.mrf.mxu0
        %4523 = vdwg.mxu0
        %4524 = vmatpush.bf16.msra.mxu0 %v3078
        %4525 = vmatpush.bf16.msra.mxu0 %v3074
        %4526 = vmatpush.bf16.msra.mxu0 %v3070
        %4527 = vmatpush.bf16.msra.mxu0 %v3066
        %4528 = vmatpush.bf16.msra.mxu0 %v3062
        %4529 = vmatpush.bf16.msra.mxu0 %v3058
        %4530 = vmatpush.bf16.msra.mxu0 %v3054
        %4531 = vmatpush.bf16.msra.mxu0 %v3050
        %4532 = vmatmul.bf16.gmra.mxu0 %v1200
        %v4533 = vpop.f32.mrf.mxu0
        %v4534 = vadd.f32 %v4521, %v4533
        %v4535 = vpop.f32.mrf.mxu0
        %4536 = vdwg.mxu0
        %4537 = vmatpush.bf16.msra.mxu0 %v3110
        %4538 = vmatpush.bf16.msra.mxu0 %v3106
        %4539 = vmatpush.bf16.msra.mxu0 %v3102
        %4540 = vmatpush.bf16.msra.mxu0 %v3098
        %4541 = vmatpush.bf16.msra.mxu0 %v3094
        %4542 = vmatpush.bf16.msra.mxu0 %v3090
        %4543 = vmatpush.bf16.msra.mxu0 %v3086
        %4544 = vmatpush.bf16.msra.mxu0 %v3082
        %4545 = vmatmul.bf16.gmra.mxu0 %v1201
        %v4546 = vpop.f32.mrf.mxu0
        %v4547 = vadd.f32 %v4534, %v4546
        %v4548 = vpop.f32.mrf.mxu0
        %4549 = vdwg.mxu0
        %4550 = vmatpush.bf16.msra.mxu0 %v3142
        %4551 = vmatpush.bf16.msra.mxu0 %v3138
        %4552 = vmatpush.bf16.msra.mxu0 %v3134
        %4553 = vmatpush.bf16.msra.mxu0 %v3130
        %4554 = vmatpush.bf16.msra.mxu0 %v3126
        %4555 = vmatpush.bf16.msra.mxu0 %v3122
        %4556 = vmatpush.bf16.msra.mxu0 %v3118
        %4557 = vmatpush.bf16.msra.mxu0 %v3114
        %4558 = vmatmul.bf16.gmra.mxu0 %v1202
        %v4559 = vpop.f32.mrf.mxu0
        %v4560 = vadd.f32 %v4547, %v4559
        %v4561 = vpop.f32.mrf.mxu0
        %4562 = vdwg.mxu0
        %4563 = vmatpush.bf16.msra.mxu0 %v3174
        %4564 = vmatpush.bf16.msra.mxu0 %v3170
        %4565 = vmatpush.bf16.msra.mxu0 %v3166
        %4566 = vmatpush.bf16.msra.mxu0 %v3162
        %4567 = vmatpush.bf16.msra.mxu0 %v3158
        %4568 = vmatpush.bf16.msra.mxu0 %v3154
        %4569 = vmatpush.bf16.msra.mxu0 %v3150
        %4570 = vmatpush.bf16.msra.mxu0 %v3146
        %4571 = vmatmul.bf16.gmra.mxu0 %v1203
        %v4572 = vpop.f32.mrf.mxu0
        %v4573 = vadd.f32 %v4560, %v4572
        %v4574 = vpop.f32.mrf.mxu0
        %4575 = vdwg.mxu0
        %4576 = vmatpush.bf16.msra.mxu0 %v3206
        %4577 = vmatpush.bf16.msra.mxu0 %v3202
        %4578 = vmatpush.bf16.msra.mxu0 %v3198
        %4579 = vmatpush.bf16.msra.mxu0 %v3194
        %4580 = vmatpush.bf16.msra.mxu0 %v3190
        %4581 = vmatpush.bf16.msra.mxu0 %v3186
        %4582 = vmatpush.bf16.msra.mxu0 %v3182
        %4583 = vmatpush.bf16.msra.mxu0 %v3178
        %4584 = vmatmul.bf16.gmra.mxu0 %v1204
        %v4585 = vpop.f32.mrf.mxu0
        %v4586 = vadd.f32 %v4573, %v4585
        %v4587 = vpop.f32.mrf.mxu0
        %4588 = vdwg.mxu0
        %4589 = vmatpush.bf16.msra.mxu0 %v3238
        %4590 = vmatpush.bf16.msra.mxu0 %v3234
        %4591 = vmatpush.bf16.msra.mxu0 %v3230
        %4592 = vmatpush.bf16.msra.mxu0 %v3226
        %4593 = vmatpush.bf16.msra.mxu0 %v3222
        %4594 = vmatpush.bf16.msra.mxu0 %v3218
        %4595 = vmatpush.bf16.msra.mxu0 %v3214
        %4596 = vmatpush.bf16.msra.mxu0 %v3210
        %4597 = vmatmul.bf16.gmra.mxu0 %v1205
        %v4598 = vpop.f32.mrf.mxu0
        %v4599 = vadd.f32 %v4586, %v4598
        %v4600 = vpop.f32.mrf.mxu0
        %4601 = vdwg.mxu0
        %4602 = vmatpush.bf16.msra.mxu0 %v3270
        %4603 = vmatpush.bf16.msra.mxu0 %v3266
        %4604 = vmatpush.bf16.msra.mxu0 %v3262
        %4605 = vmatpush.bf16.msra.mxu0 %v3258
        %4606 = vmatpush.bf16.msra.mxu0 %v3254
        %4607 = vmatpush.bf16.msra.mxu0 %v3250
        %4608 = vmatpush.bf16.msra.mxu0 %v3246
        %4609 = vmatpush.bf16.msra.mxu0 %v3242
        %4610 = vmatmul.bf16.gmra.mxu0 %v1206
        %v4611 = vpop.f32.mrf.mxu0
        %v4612 = vadd.f32 %v4599, %v4611
        %v4613 = vpop.f32.mrf.mxu0
        %4614 = vdwg.mxu0
        %v4615 = vmax.f32 %v3988, 0.0
        %v4616 = vmax.f32 %v4196, 0.0
        %v4617 = vmax.f32 %v4404, 0.0
        %v4618 = vmax.f32 %v4612, 0.0
        %v4619 = vpack.c.bf16 %v4615, %v4615
        %v4620 = vpack.c.bf16 %v4616, %v4616
        %v4621 = vpack.c.bf16 %v4617, %v4617
        %v4622 = vpack.c.bf16 %v4618, %v4618
        %v4623 = vld [vmem:[%s362] sm:$0xf]
        %v4624 = vld [vmem:[%s362 + $0x4] sm:$0xf]
        %v4625 = vld [vmem:[%s362 + $0x8] sm:$0xf]
        %v4626 = vld [vmem:[%s362 + $0xc] sm:$0xf]
        %v4627 = vld [vmem:[%s362 + $0x10] sm:$0xf]
        %v4628 = vld [vmem:[%s362 + $0x14] sm:$0xf]
        %v4629 = vld [vmem:[%s362 + $0x18] sm:$0xf]
        %v4630 = vld [vmem:[%s362 + $0x1c] sm:$0xf]
        %v4631 = vld [vmem:[%s362 + $0x20] sm:$0xf]
        %v4632 = vld [vmem:[%s362 + $0x24] sm:$0xf]
        %v4633 = vld [vmem:[%s362 + $0x28] sm:$0xf]
        %v4634 = vld [vmem:[%s362 + $0x2c] sm:$0xf]
        %v4635 = vld [vmem:[%s362 + $0x30] sm:$0xf]
        %v4636 = vld [vmem:[%s362 + $0x34] sm:$0xf]
        %v4637 = vld [vmem:[%s362 + $0x38] sm:$0xf]
        %v4638 = vld [vmem:[%s362 + $0x3c] sm:$0xf]
        %v4639 = vld [vmem:[%s362 + $0x40] sm:$0xf]
        %v4640 = vld [vmem:[%s362 + $0x44] sm:$0xf]
        %v4641 = vld [vmem:[%s362 + $0x48] sm:$0xf]
        %v4642 = vld [vmem:[%s362 + $0x4c] sm:$0xf]
        %v4643 = vld [vmem:[%s362 + $0x50] sm:$0xf]
        %v4644 = vld [vmem:[%s362 + $0x54] sm:$0xf]
        %v4645 = vld [vmem:[%s362 + $0x58] sm:$0xf]
        %v4646 = vld [vmem:[%s362 + $0x5c] sm:$0xf]
        %v4647 = vld [vmem:[%s362 + $0x60] sm:$0xf]
        %v4648 = vld [vmem:[%s362 + $0x64] sm:$0xf]
        %v4649 = vld [vmem:[%s362 + $0x68] sm:$0xf]
        %v4650 = vld [vmem:[%s362 + $0x6c] sm:$0xf]
        %v4651 = vld [vmem:[%s362 + $0x70] sm:$0xf]
        %v4652 = vld [vmem:[%s362 + $0x74] sm:$0xf]
        %v4653 = vld [vmem:[%s362 + $0x78] sm:$0xf]
        %v4654 = vld [vmem:[%s362 + $0x7c] sm:$0xf]
        %v4655 = vld [vmem:[%s362 + $0x80] sm:$0xf]
        %v4656 = vld [vmem:[%s362 + $0x84] sm:$0xf]
        %v4657 = vld [vmem:[%s362 + $0x88] sm:$0xf]
        %v4658 = vld [vmem:[%s362 + $0x8c] sm:$0xf]
        %v4659 = vld [vmem:[%s362 + $0x90] sm:$0xf]
        %v4660 = vld [vmem:[%s362 + $0x94] sm:$0xf]
        %v4661 = vld [vmem:[%s362 + $0x98] sm:$0xf]
        %v4662 = vld [vmem:[%s362 + $0x9c] sm:$0xf]
        %v4663 = vld [vmem:[%s362 + $0xa0] sm:$0xf]
        %v4664 = vld [vmem:[%s362 + $0xa4] sm:$0xf]
        %v4665 = vld [vmem:[%s362 + $0xa8] sm:$0xf]
        %v4666 = vld [vmem:[%s362 + $0xac] sm:$0xf]
        %v4667 = vld [vmem:[%s362 + $0xb0] sm:$0xf]
        %v4668 = vld [vmem:[%s362 + $0xb4] sm:$0xf]
        %v4669 = vld [vmem:[%s362 + $0xb8] sm:$0xf]
        %v4670 = vld [vmem:[%s362 + $0xbc] sm:$0xf]
        %v4671 = vld [vmem:[%s362 + $0xc0] sm:$0xf]
        %v4672 = vld [vmem:[%s362 + $0xc4] sm:$0xf]
        %v4673 = vld [vmem:[%s362 + $0xc8] sm:$0xf]
        %v4674 = vld [vmem:[%s362 + $0xcc] sm:$0xf]
        %v4675 = vld [vmem:[%s362 + $0xd0] sm:$0xf]
        %v4676 = vld [vmem:[%s362 + $0xd4] sm:$0xf]
        %v4677 = vld [vmem:[%s362 + $0xd8] sm:$0xf]
        %v4678 = vld [vmem:[%s362 + $0xdc] sm:$0xf]
        %v4679 = vld [vmem:[%s362 + $0xe0] sm:$0xf]
        %v4680 = vld [vmem:[%s362 + $0xe4] sm:$0xf]
        %v4681 = vld [vmem:[%s362 + $0xe8] sm:$0xf]
        %v4682 = vld [vmem:[%s362 + $0xec] sm:$0xf]
        %v4683 = vld [vmem:[%s362 + $0xf0] sm:$0xf]
        %v4684 = vld [vmem:[%s362 + $0xf4] sm:$0xf]
        %v4685 = vld [vmem:[%s362 + $0xf8] sm:$0xf]
        %v4686 = vld [vmem:[%s362 + $0xfc] sm:$0xf]
        %v4751 = vunpack.c.l.b16 %v4623
        %v4752 = vunpack.c.l.b16 %v4624
        %v4753 = vunpack.c.l.b16 %v4625
        %v4754 = vunpack.c.l.b16 %v4626
        %v4755 = vunpack.c.l.b16 %v4627
        %v4756 = vunpack.c.l.b16 %v4628
        %v4757 = vunpack.c.l.b16 %v4629
        %v4758 = vunpack.c.l.b16 %v4630
        %v4759 = vunpack.c.l.b16 %v4631
        %v4760 = vunpack.c.l.b16 %v4632
        %v4761 = vunpack.c.l.b16 %v4633
        %v4762 = vunpack.c.l.b16 %v4634
        %v4763 = vunpack.c.l.b16 %v4635
        %v4764 = vunpack.c.l.b16 %v4636
        %v4765 = vunpack.c.l.b16 %v4637
        %v4766 = vunpack.c.l.b16 %v4638
        %v4767 = vunpack.c.l.b16 %v4639
        %v4768 = vunpack.c.l.b16 %v4640
        %v4769 = vunpack.c.l.b16 %v4641
        %v4770 = vunpack.c.l.b16 %v4642
        %v4771 = vunpack.c.l.b16 %v4643
        %v4772 = vunpack.c.l.b16 %v4644
        %v4773 = vunpack.c.l.b16 %v4645
        %v4774 = vunpack.c.l.b16 %v4646
        %v4775 = vunpack.c.l.b16 %v4647
        %v4776 = vunpack.c.l.b16 %v4648
        %v4777 = vunpack.c.l.b16 %v4649
        %v4778 = vunpack.c.l.b16 %v4650
        %v4779 = vunpack.c.l.b16 %v4651
        %v4780 = vunpack.c.l.b16 %v4652
        %v4781 = vunpack.c.l.b16 %v4653
        %v4782 = vunpack.c.l.b16 %v4654
        %v4783 = vunpack.c.l.b16 %v4655
        %v4784 = vunpack.c.l.b16 %v4656
        %v4785 = vunpack.c.l.b16 %v4657
        %v4786 = vunpack.c.l.b16 %v4658
        %v4787 = vunpack.c.l.b16 %v4659
        %v4788 = vunpack.c.l.b16 %v4660
        %v4789 = vunpack.c.l.b16 %v4661
        %v4790 = vunpack.c.l.b16 %v4662
        %v4791 = vunpack.c.l.b16 %v4663
        %v4792 = vunpack.c.l.b16 %v4664
        %v4793 = vunpack.c.l.b16 %v4665
        %v4794 = vunpack.c.l.b16 %v4666
        %v4795 = vunpack.c.l.b16 %v4667
        %v4796 = vunpack.c.l.b16 %v4668
        %v4797 = vunpack.c.l.b16 %v4669
        %v4798 = vunpack.c.l.b16 %v4670
        %v4799 = vunpack.c.l.b16 %v4671
        %v4800 = vunpack.c.l.b16 %v4672
        %v4801 = vunpack.c.l.b16 %v4673
        %v4802 = vunpack.c.l.b16 %v4674
        %v4803 = vunpack.c.l.b16 %v4675
        %v4804 = vunpack.c.l.b16 %v4676
        %v4805 = vunpack.c.l.b16 %v4677
        %v4806 = vunpack.c.l.b16 %v4678
        %v4807 = vunpack.c.l.b16 %v4679
        %v4808 = vunpack.c.l.b16 %v4680
        %v4809 = vunpack.c.l.b16 %v4681
        %v4810 = vunpack.c.l.b16 %v4682
        %v4811 = vunpack.c.l.b16 %v4683
        %v4812 = vunpack.c.l.b16 %v4684
        %v4813 = vunpack.c.l.b16 %v4685
        %v4814 = vunpack.c.l.b16 %v4686
        %v4815 = vpack.c.b16 %v4752, %v4751
        %v4816 = vpack.c.b16 %v4754, %v4753
        %v4817 = vpack.c.b16 %v4756, %v4755
        %v4818 = vpack.c.b16 %v4758, %v4757
        %v4819 = vpack.c.b16 %v4760, %v4759
        %v4820 = vpack.c.b16 %v4762, %v4761
        %v4821 = vpack.c.b16 %v4764, %v4763
        %v4822 = vpack.c.b16 %v4766, %v4765
        %v4823 = vpack.c.b16 %v4768, %v4767
        %v4824 = vpack.c.b16 %v4770, %v4769
        %v4825 = vpack.c.b16 %v4772, %v4771
        %v4826 = vpack.c.b16 %v4774, %v4773
        %v4827 = vpack.c.b16 %v4776, %v4775
        %v4828 = vpack.c.b16 %v4778, %v4777
        %v4829 = vpack.c.b16 %v4780, %v4779
        %v4830 = vpack.c.b16 %v4782, %v4781
        %v4831 = vpack.c.b16 %v4784, %v4783
        %v4832 = vpack.c.b16 %v4786, %v4785
        %v4833 = vpack.c.b16 %v4788, %v4787
        %v4834 = vpack.c.b16 %v4790, %v4789
        %v4835 = vpack.c.b16 %v4792, %v4791
        %v4836 = vpack.c.b16 %v4794, %v4793
        %v4837 = vpack.c.b16 %v4796, %v4795
        %v4838 = vpack.c.b16 %v4798, %v4797
        %v4839 = vpack.c.b16 %v4800, %v4799
        %v4840 = vpack.c.b16 %v4802, %v4801
        %v4841 = vpack.c.b16 %v4804, %v4803
        %v4842 = vpack.c.b16 %v4806, %v4805
        %v4843 = vpack.c.b16 %v4808, %v4807
        %v4844 = vpack.c.b16 %v4810, %v4809
        %v4845 = vpack.c.b16 %v4812, %v4811
        %v4846 = vpack.c.b16 %v4814, %v4813
        %4879 = vmatpush.bf16.msra.mxu0 %v4822
        %4880 = vmatpush.bf16.msra.mxu0 %v4821
        %4881 = vmatpush.bf16.msra.mxu0 %v4820
        %4882 = vmatpush.bf16.msra.mxu0 %v4819
        %4883 = vmatpush.bf16.msra.mxu0 %v4818
        %4884 = vmatpush.bf16.msra.mxu0 %v4817
        %4885 = vmatpush.bf16.msra.mxu0 %v4816
        %4886 = vmatpush.bf16.msra.mxu0 %v4815
        %4887 = vmatmul.bf16.gmra.mxu0 %v4619
        %v4888 = vpop.f32.mrf.mxu0
        %v4889 = vadd.f32 0.0, %v4888
        %v4890 = vpop.f32.mrf.mxu0
        %4891 = vdwg.mxu0
        %4892 = vmatpush.bf16.msra.mxu0 %v4830
        %4893 = vmatpush.bf16.msra.mxu0 %v4829
        %4894 = vmatpush.bf16.msra.mxu0 %v4828
        %4895 = vmatpush.bf16.msra.mxu0 %v4827
        %4896 = vmatpush.bf16.msra.mxu0 %v4826
        %4897 = vmatpush.bf16.msra.mxu0 %v4825
        %4898 = vmatpush.bf16.msra.mxu0 %v4824
        %4899 = vmatpush.bf16.msra.mxu0 %v4823
        %4900 = vmatmul.bf16.gmra.mxu0 %v4620
        %v4901 = vpop.f32.mrf.mxu0
        %v4902 = vadd.f32 %v4889, %v4901
        %v4903 = vpop.f32.mrf.mxu0
        %4904 = vdwg.mxu0
        %4905 = vmatpush.bf16.msra.mxu0 %v4838
        %4906 = vmatpush.bf16.msra.mxu0 %v4837
        %4907 = vmatpush.bf16.msra.mxu0 %v4836
        %4908 = vmatpush.bf16.msra.mxu0 %v4835
        %4909 = vmatpush.bf16.msra.mxu0 %v4834
        %4910 = vmatpush.bf16.msra.mxu0 %v4833
        %4911 = vmatpush.bf16.msra.mxu0 %v4832
        %4912 = vmatpush.bf16.msra.mxu0 %v4831
        %4913 = vmatmul.bf16.gmra.mxu0 %v4621
        %v4914 = vpop.f32.mrf.mxu0
        %v4915 = vadd.f32 %v4902, %v4914
        %v4916 = vpop.f32.mrf.mxu0
        %4917 = vdwg.mxu0
        %4918 = vmatpush.bf16.msra.mxu0 %v4846
        %4919 = vmatpush.bf16.msra.mxu0 %v4845
        %4920 = vmatpush.bf16.msra.mxu0 %v4844
        %4921 = vmatpush.bf16.msra.mxu0 %v4843
        %4922 = vmatpush.bf16.msra.mxu0 %v4842
        %4923 = vmatpush.bf16.msra.mxu0 %v4841
        %4924 = vmatpush.bf16.msra.mxu0 %v4840
        %4925 = vmatpush.bf16.msra.mxu0 %v4839
        %4926 = vmatmul.bf16.gmra.mxu0 %v4622
        %v4927 = vpop.f32.mrf.mxu0
        %v4928 = vadd.f32 %v4915, %v4927
        %v4929 = vpop.f32.mrf.mxu0
        %4930 = vdwg.mxu0
        // Predicated region
        $region77: #{inception_aux_forward.1} parent=47 // pred_check
          %p4931 = pneg %p404
        $region78: #{inception_aux_forward.1} parent=47 // pred_check_branch
          %4933 = sbr.rel (%p4931) target = $region80
        $region79: #{inception_aux_forward.1} parent=47 // pred_region
          %v4934 = vld [vmem:[#allocation10] sm:$0x1]
          %v4936 = vperm.slane %v4934, 0
          %v4938 = vadd.f32 %v4928, %v4936
          %4939 = vst [vmem:[%s7] sm:$0xff] %v4938
        $region80: #{inception_aux_forward.1} parent=47 // pred_fallthru
          _
        %p4940 = scmp.ne.s32.totalorder %s20, 0
        // Predicated region
        $region81: #{inception_aux_forward.1} parent=47 // pred_check
          %p4941 = pneg %p4940
        $region82: #{inception_aux_forward.1} parent=47 // pred_check_branch
          %4943 = sbr.rel (%p4941) target = $region84
        $region83: #{inception_aux_forward.1} parent=47 // pred_region
          %v4944 = vld [vmem:[%s7] sm:$0xff]
          %v4945 = vadd.f32 %v4944, %v4928
          %4946 = vst [vmem:[%s7] sm:$0xff] %v4945
        $region84: #{inception_aux_forward.1} parent=47 // pred_fallthru
          _
        // Predicated region
        $region85: #{inception_aux_forward.1} parent=47 // pred_check
          %p4947 = pneg %p195
        $region86: #{inception_aux_forward.1} parent=47 // pred_check_branch
          %4949 = sbr.rel (%p4947) target = $region88
        $region87: #{inception_aux_forward.1} parent=47 // pred_region
          _
        $region88: #{inception_aux_forward.1} parent=47 // pred_fallthru
          _
        // Predicated region
        $region89: #{inception_aux_forward.1} parent=47 // pred_check
          %p4950 = pneg %p195
        $region90: #{inception_aux_forward.1} parent=47 // pred_check_branch
          %4952 = sbr.rel (%p4950) target = $region92
        $region91: #{inception_aux_forward.1} parent=47 // pred_region
          _
        $region92: #{inception_aux_forward.1} parent=47 // pred_fallthru
          _
      $region48: #{inception_aux_forward.1} parent=5 // pred_fallthru
        _
      %p4953 = scmp.le.s32.totalorder 2, %s15
      // Predicated region
      $region93: #{inception_aux_forward.1} parent=5 // pred_check
        %p4954 = pneg %p4953
      $region94: #{inception_aux_forward.1} parent=5 // pred_check_branch
        %4956 = sbr.rel (%p4954) target = $region96
      $region95: #{inception_aux_forward.1} parent=5 // pred_region
        %s4957 = ssub.s32 %s15, 2
      $region96: #{inception_aux_forward.1} parent=5 // pred_fallthru
        _
    $region6: #{inception_aux_forward.1} parent=1 // loop_footer
      %s19 = sadd.s32 1, %s15
    $region7: #{inception_aux_forward.1} parent=1 // loop_footer_branch
      %14 = sbr.rel target = $region3
    $region8: #{inception_aux_forward.1} parent=1 // loop_exit
      _
    %4958 = vsyncpa [#allocation4], 1
    %s4959 = scalar_lea.sflag [#allocation4], 1
    %4960 = vsyncpa %s4959, 1
    %4961 = vsyncpa [#allocation6], 1

</llo_original>
